<compile_context>
chip_gen: v7x
topology: tpu7x:2x2x1
jax: 0.10.0
libtpu: 0.0.40
codegen_flags: <defaults>
</compile_context>

<pallas_src>
import math
import jax
import jax.numpy as jnp
from jax.experimental import pallas as pl
from jax.experimental.pallas import tpu as pltpu

# ----------------------------- model sizes -----------------------------
INPUT_DIM = 32          # input_dim of GcnNetSA4
HIDDEN_DIM = 16         # gcn1 output dim
NHEADS = 4              # selfattention(4, input_dim)
HEAD_DIM = INPUT_DIM // NHEADS


# ----------------------------- Pallas kernel -----------------------------
def _gcn_sa_kernel(feat_ref, adj_ref, mask_ref, wqkv_ref, wo1_ref, b1_ref,
                   w2_ref, b2_ref, out_ref):
    rows, d = feat_ref.shape            # rows = TB * N (TB graphs stacked along sublanes)
    cdt = feat_ref.dtype                # MXU input dtype (bf16 default, f32 optional)
    scale = 1.0 / math.sqrt(HEAD_DIM)

    # ---- fused QKV projection: one (rows, D) @ (D, 3D) matmul, f32 accumulation ----
    qkv = jnp.dot(feat_ref[...], wqkv_ref[...],
                  preferred_element_type=jnp.float32)            # (rows, 3D) f32

    # ---- block-diagonal multi-head self-attention ----
    # All TB graphs share the M axis; the additive (rows, rows) mask zeroes cross-graph
    # scores, so the row softmax is exactly the per-graph softmax.
    head_outs = []
    for h in range(NHEADS):             # static unroll (4); per-head s/p die each iteration
        lo = h * HEAD_DIM
        qh = qkv[:, lo:lo + HEAD_DIM].astype(cdt)                # (rows, dh)
        kh = qkv[:, d + lo:d + lo + HEAD_DIM].astype(cdt)
        vh = qkv[:, 2 * d + lo:2 * d + lo + HEAD_DIM].astype(cdt)
        s = jnp.dot(qh, kh.T, preferred_element_type=jnp.float32) * scale + mask_ref[...]
        s = s - jnp.max(s, axis=-1, keepdims=True)
        p = jnp.exp(s)
        p = p * pl.reciprocal(jnp.sum(p, axis=-1, keepdims=True), approx=True)
        head_outs.append(jnp.dot(p.astype(cdt), vh,
                                 preferred_element_type=jnp.float32))   # (rows, dh)
    att = jnp.concatenate(head_outs, axis=-1).astype(cdt)        # (rows, D) heads in lane slots

    # ---- attention output projection folded into GCN1: support1 = att @ (Wo @ W1) ----
    # Single K=D matmul (replaces four per-head K=8 matmuls).
    support1 = jnp.dot(att, wo1_ref[...],
                       preferred_element_type=jnp.float32)       # (rows, 16)

    # ---- GCN layer 1: relu(adj @ support1 + b1), adjacency kept f32 for accuracy ----
    adj = adj_ref[...]                                           # (rows, rows) block-diagonal
    h1 = jnp.maximum(jnp.dot(adj, support1, preferred_element_type=jnp.float32)
                     + b1_ref[...], 0.0)                         # (rows, 16)

    # ---- GCN layer 2: adj @ (h1 @ W2) + b2 ----
    support2 = jnp.dot(h1.astype(cdt), w2_ref[...],
                       preferred_element_type=jnp.float32)       # (rows, D)
    logits = jnp.dot(adj, support2, preferred_element_type=jnp.float32) + b2_ref[...]

    out_ref[...] = logits.astype(out_ref.dtype)


# ----------------------------- batch-tile heuristic -----------------------------
def _choose_tb(batch, n, compute_dtype):
    # Fill the MXU M dimension: 256 rows for bf16 (v6e/v7x 2x256^2), 128 for f32 (v5e pass).
    target_rows = 256 if compute_dtype == jnp.bfloat16 else 128
    tb = max(1, min(batch, pl.cdiv(target_rows, n)))
    # Keep >= 4 grid steps when the batch allows it (>= 2 steps per v7x TensorCore so the
    # BlockSpec pipeline can overlap DMA with compute on each core).
    while tb > 1 and pl.cdiv(batch, tb) < 4:
        tb = pl.cdiv(tb, 2)
    return tb


# ----------------------------- wrapper -----------------------------
def gcn_net_sa4_forward(feature, left, adjacency, params, *, tb=None,
                        compute_dtype=jnp.bfloat16, out_dtype=jnp.float32):
    """feature: [B, N, D], left: unused, adjacency: [B, N, N] -> logits [B, N, D]."""
    del left  # unused by the reference forward()
    B, N, D = feature.shape
    assert D == INPUT_DIM and adjacency.shape == (B, N, N)

    cdt = compute_dtype

    # Host-side weight packing: fused QKV, and Wo algebraically folded into W1.
    wqkv = jnp.concatenate([params["wq"], params["wk"], params["wv"]], axis=1).astype(cdt)
    wo1 = jnp.dot(params["wo"].astype(jnp.float32),
                  params["w1"].astype(jnp.float32)).astype(cdt)          # (D, 16)
    w2 = params["w2"].astype(cdt)
    b1 = params["b1"].reshape(1, HIDDEN_DIM).astype(jnp.float32)
    b2 = params["b2"].reshape(1, D).astype(jnp.float32)

    if tb is None:
        tb = _choose_tb(B, N, cdt)
    nb = pl.cdiv(B, tb)
    Bp = nb * tb
    if Bp != B:
        pad = Bp - B
        feature = jnp.pad(feature, ((0, pad), (0, 0), (0, 0)))
        adjacency = jnp.pad(adjacency, ((0, pad), (0, 0), (0, 0)))
    rows = tb * N

    # Lane-dense node-row slab; kills the in-kernel 3-D reshape.
    feat2d = feature.reshape(Bp * N, D).astype(cdt)

    # Block-diagonal adjacency: one (rows, rows) tile per grid step (f32 for accuracy).
    adj_blocks = adjacency.astype(jnp.float32).reshape(nb, tb, N, N)
    eye = jnp.eye(tb, dtype=jnp.float32)
    bd_adj = jnp.einsum('gtnm,ts->gtnsm', adj_blocks, eye).reshape(Bp * N, rows)

    # Additive attention mask: 0 within a graph's block, -1e30 across graphs.
    blk = jnp.repeat(jnp.arange(tb, dtype=jnp.int32), N)
    mask = jnp.where(blk[:, None] == blk[None, :], 0.0, -1e30).astype(jnp.float32)

    full = lambda shape: pl.BlockSpec(shape, lambda b: (0,) * len(shape))

    out = pl.pallas_call(
        _gcn_sa_kernel,
        out_shape=jax.ShapeDtypeStruct((Bp * N, D), out_dtype),
        grid_spec=pltpu.PrefetchScalarGridSpec(
            num_scalar_prefetch=0,
            grid=(nb,),
            in_specs=[
                pl.BlockSpec((rows, D), lambda b: (b, 0)),      # stacked node features
                pl.BlockSpec((rows, rows), lambda b: (b, 0)),   # block-diagonal adjacency
                full((rows, rows)),                             # cross-graph attention mask
                full((D, 3 * D)),                               # fused Wq|Wk|Wv
                full((D, HIDDEN_DIM)),                          # Wo @ W1
                full((1, HIDDEN_DIM)),                          # b1
                full((HIDDEN_DIM, D)),                          # W2
                full((1, D)),                                   # b2
            ],
            out_specs=pl.BlockSpec((rows, D), lambda b: (b, 0)),
        ),
        compiler_params=pltpu.CompilerParams(dimension_semantics=("parallel",)),
    )(feat2d, bd_adj, mask, wqkv, wo1, b1, w2, b2)

    return out.reshape(Bp, N, D)[:B]


# ----------------------------- pure-JAX reference (for checking) -----------------------------
def _reference_forward(feature, adjacency, params):
    B, N, D = feature.shape
    q = feature @ params["wq"]
    k = feature @ params["wk"]
    v = feature @ params["wv"]
    qh = q.reshape(B, N, NHEADS, HEAD_DIM).transpose(0, 2, 1, 3)
    kh = k.reshape(B, N, NHEADS, HEAD_DIM).transpose(0, 2, 1, 3)
    vh = v.reshape(B, N, NHEADS, HEAD_DIM).transpose(0, 2, 1, 3)
    s = jnp.einsum('bhnd,bhmd->bhnm', qh, kh) / math.sqrt(HEAD_DIM)
    p = jax.nn.softmax(s, axis=-1)
    att = jnp.einsum('bhnm,bhmd->bhnd', p, vh).transpose(0, 2, 1, 3).reshape(B, N, D)
    state0 = att @ params["wo"]
    h = jax.nn.relu(jnp.einsum('bnm,bmf->bnf', adjacency, state0 @ params["w1"]) + params["b1"])
    logits = jnp.einsum('bnm,bmf->bnf', adjacency, h @ params["w2"]) + params["b2"]
    return logits


# ----------------------------- parameter init -----------------------------
def _kaiming_uniform(key, fan_in, shape):
    bound = math.sqrt(6.0 / fan_in)   # matches torch.nn.init.kaiming_uniform_ default (a=0)
    return jax.random.uniform(key, shape, jnp.float32, -bound, bound)


def init_params(key):
    ks = jax.random.split(key, 6)
    D, H = INPUT_DIM, HIDDEN_DIM
    return {
        # selfattention(4, D): Q/K/V/O projections (assumed no bias; see TODO above)
        "wq": _kaiming_uniform(ks[0], D, (D, D)),
        "wk": _kaiming_uniform(ks[1], D, (D, D)),
        "wv": _kaiming_uniform(ks[2], D, (D, D)),
        "wo": _kaiming_uniform(ks[3], D, (D, D)),
        # GraphConvolution(D, 16) / GraphConvolution(16, D): kaiming_uniform weights, zero bias
        "w1": _kaiming_uniform(ks[4], D, (D, H)),
        "b1": jnp.zeros((1, H), jnp.float32),
        "w2": _kaiming_uniform(ks[5], H, (H, D)),
        "b2": jnp.zeros((1, D), jnp.float32),
    }


# ----------------------------- demo -----------------------------
if __name__ == "__main__":
    # 32 graphs, 16 nodes, 32-dim features.  Default heuristic -> TB=8 (TB*N=128), grid=(4,)
    # so both v7x TensorCores get 2 pipelined steps; for B >= 64 in bf16 it picks TB*N=256.
    B, N, D = 32, 16, INPUT_DIM
    key = jax.random.PRNGKey(0)
    k_feat, k_adj, k_param = jax.random.split(key, 3)

    feature = jax.random.normal(k_feat, (B, N, D), jnp.float32)
    left = jnp.zeros((B, N), jnp.float32)   # unused by forward(), signature parity only

    # deterministic row-normalized adjacency with self-loops
    a = (jax.random.uniform(k_adj, (B, N, N)) > 0.6).astype(jnp.float32)
    a = jnp.maximum(a, jnp.transpose(a, (0, 2, 1)))
    a = a + jnp.eye(N, dtype=jnp.float32)[None]
    adjacency = a / jnp.sum(a, axis=-1, keepdims=True)

    params = init_params(k_param)

    logits = jax.jit(gcn_net_sa4_forward)(feature, left, adjacency, params)
    jax.block_until_ready(logits)
    assert logits.shape == (B, N, D)

    ref = _reference_forward(feature, adjacency, params)
    max_err = float(jnp.max(jnp.abs(logits - ref)))
    # bf16 MXU inputs + approx reciprocal vs an f32 reference: loose abs tolerance
    # (set compute_dtype=jnp.float32 for ~1e-3-level parity).
    assert max_err < 2e-1, f"kernel mismatch vs reference: max abs err {max_err}"
    print("KERNEL_OK")
</pallas_src>

<mosaic_0001>
module attributes {stable_mosaic.version = 11 : i64} {
  func.func @_gcn_sa_kernel(%arg0: i32, %arg1: memref<128x32xbf16, #tpu.memory_space<vmem>>, %arg2: memref<128x128xf32, #tpu.memory_space<vmem>>, %arg3: memref<128x128xf32, #tpu.memory_space<vmem>>, %arg4: memref<32x96xbf16, #tpu.memory_space<vmem>>, %arg5: memref<32x16xbf16, #tpu.memory_space<vmem>>, %arg6: memref<1x16xf32, #tpu.memory_space<vmem>>, %arg7: memref<16x32xbf16, #tpu.memory_space<vmem>>, %arg8: memref<1x32xf32, #tpu.memory_space<vmem>>, %arg9: memref<128x32xf32, #tpu.memory_space<vmem>>) attributes {dimension_semantics = [#tpu.dimension_semantics<parallel>], iteration_bounds = array<i64: 4>, scalar_prefetch = 0 : i64, scratch_operands = 0 : i64, tpu.core_type = #tpu.core_type<tc>, window_params = [{transform_indices = @transform_0, window_bounds = array<i64: 128, 32>}, {transform_indices = @transform_1, window_bounds = array<i64: 128, 128>}, {pipeline_mode = #tpu.pipeline_mode<synchronous>, transform_indices = @transform_2, window_bounds = array<i64: 128, 128>}, {pipeline_mode = #tpu.pipeline_mode<synchronous>, transform_indices = @transform_3, window_bounds = array<i64: 32, 96>}, {pipeline_mode = #tpu.pipeline_mode<synchronous>, transform_indices = @transform_4, window_bounds = array<i64: 32, 16>}, {pipeline_mode = #tpu.pipeline_mode<synchronous>, transform_indices = @transform_5, window_bounds = array<i64: 1, 16>}, {pipeline_mode = #tpu.pipeline_mode<synchronous>, transform_indices = @transform_6, window_bounds = array<i64: 16, 32>}, {pipeline_mode = #tpu.pipeline_mode<synchronous>, transform_indices = @transform_7, window_bounds = array<i64: 1, 32>}, {transform_indices = @transform_8, window_bounds = array<i64: 128, 32>}]} {
    %c0 = arith.constant 0 : index
    %c0_0 = arith.constant 0 : index
    %0 = vector.load %arg1[%c0, %c0_0] : memref<128x32xbf16, #tpu.memory_space<vmem>>, vector<128x32xbf16>
    %c0_1 = arith.constant 0 : index
    %c0_2 = arith.constant 0 : index
    %1 = vector.load %arg4[%c0_1, %c0_2] : memref<32x96xbf16, #tpu.memory_space<vmem>>, vector<32x96xbf16>
    %cst = arith.constant dense<0.000000e+00> : vector<128x96xf32>
    %2 = tpu.matmul %0, %1, %cst {dimension_numbers = #tpu.dot_dimension_numbers<[1], [0], [0], [1], [0, 0, 1, 1], [], []>} : vector<128x32xbf16>, vector<32x96xbf16>, vector<128x96xf32> -> vector<128x96xf32>
    %3 = vector.extract_strided_slice %2 {offsets = [0, 0], sizes = [128, 8], strides = [1, 1]} : vector<128x96xf32> to vector<128x8xf32>
    %4 = arith.truncf %3 : vector<128x8xf32> to vector<128x8xbf16>
    %5 = vector.extract_strided_slice %2 {offsets = [0, 32], sizes = [128, 8], strides = [1, 1]} : vector<128x96xf32> to vector<128x8xf32>
    %6 = arith.truncf %5 : vector<128x8xf32> to vector<128x8xbf16>
    %7 = vector.extract_strided_slice %2 {offsets = [0, 64], sizes = [128, 8], strides = [1, 1]} : vector<128x96xf32> to vector<128x8xf32>
    %8 = arith.truncf %7 : vector<128x8xf32> to vector<128x8xbf16>
    %9 = tpu.transpose %6, [1, 0] : vector<128x8xbf16> -> vector<8x128xbf16>
    %cst_3 = arith.constant dense<0.000000e+00> : vector<128x128xf32>
    %10 = tpu.matmul %4, %9, %cst_3 {dimension_numbers = #tpu.dot_dimension_numbers<[1], [0], [0], [1], [0, 0, 1, 1], [], []>} : vector<128x8xbf16>, vector<8x128xbf16>, vector<128x128xf32> -> vector<128x128xf32>
    %cst_4 = arith.constant 0.353553385 : f32
    %11 = vector.broadcast %cst_4 : f32 to vector<128x128xf32>
    %12 = arith.mulf %10, %11 : vector<128x128xf32>
    %c0_5 = arith.constant 0 : index
    %c0_6 = arith.constant 0 : index
    %13 = vector.load %arg3[%c0_5, %c0_6] : memref<128x128xf32, #tpu.memory_space<vmem>>, vector<128x128xf32>
    %14 = arith.addf %12, %13 : vector<128x128xf32>
    %cst_7 = arith.constant dense<0xFF800000> : vector<128xf32>
    %15 = vector.multi_reduction <maximumf>, %14, %cst_7 [1] : vector<128x128xf32> to vector<128xf32>
    %16 = vector.shape_cast %15 : vector<128xf32> to vector<128x1xf32>
    %17 = vector.broadcast %16 : vector<128x1xf32> to vector<128x128xf32>
    %18 = arith.subf %14, %17 : vector<128x128xf32>
    %19 = math.exp %18 : vector<128x128xf32>
    %cst_8 = arith.constant dense<0.000000e+00> : vector<128xf32>
    %20 = vector.multi_reduction <add>, %19, %cst_8 [1] : vector<128x128xf32> to vector<128xf32>
    %21 = vector.shape_cast %20 : vector<128xf32> to vector<128x1xf32>
    %22 = tpu.reciprocal %21 {approx = true} : vector<128x1xf32> -> vector<128x1xf32>
    %23 = vector.broadcast %22 : vector<128x1xf32> to vector<128x128xf32>
    %24 = arith.mulf %19, %23 : vector<128x128xf32>
    %25 = arith.truncf %24 : vector<128x128xf32> to vector<128x128xbf16>
    %cst_9 = arith.constant dense<0.000000e+00> : vector<128x8xf32>
    %26 = tpu.matmul %25, %8, %cst_9 {dimension_numbers = #tpu.dot_dimension_numbers<[1], [0], [0], [1], [0, 0, 1, 1], [], []>} : vector<128x128xbf16>, vector<128x8xbf16>, vector<128x8xf32> -> vector<128x8xf32>
    %27 = vector.extract_strided_slice %2 {offsets = [0, 8], sizes = [128, 8], strides = [1, 1]} : vector<128x96xf32> to vector<128x8xf32>
    %28 = arith.truncf %27 : vector<128x8xf32> to vector<128x8xbf16>
    %29 = vector.extract_strided_slice %2 {offsets = [0, 40], sizes = [128, 8], strides = [1, 1]} : vector<128x96xf32> to vector<128x8xf32>
    %30 = arith.truncf %29 : vector<128x8xf32> to vector<128x8xbf16>
    %31 = vector.extract_strided_slice %2 {offsets = [0, 72], sizes = [128, 8], strides = [1, 1]} : vector<128x96xf32> to vector<128x8xf32>
    %32 = arith.truncf %31 : vector<128x8xf32> to vector<128x8xbf16>
    %33 = tpu.transpose %30, [1, 0] : vector<128x8xbf16> -> vector<8x128xbf16>
    %cst_10 = arith.constant dense<0.000000e+00> : vector<128x128xf32>
    %34 = tpu.matmul %28, %33, %cst_10 {dimension_numbers = #tpu.dot_dimension_numbers<[1], [0], [0], [1], [0, 0, 1, 1], [], []>} : vector<128x8xbf16>, vector<8x128xbf16>, vector<128x128xf32> -> vector<128x128xf32>
    %cst_11 = arith.constant 0.353553385 : f32
    %35 = vector.broadcast %cst_11 : f32 to vector<128x128xf32>
    %36 = arith.mulf %34, %35 : vector<128x128xf32>
    %c0_12 = arith.constant 0 : index
    %c0_13 = arith.constant 0 : index
    %37 = vector.load %arg3[%c0_12, %c0_13] : memref<128x128xf32, #tpu.memory_space<vmem>>, vector<128x128xf32>
    %38 = arith.addf %36, %37 : vector<128x128xf32>
    %cst_14 = arith.constant dense<0xFF800000> : vector<128xf32>
    %39 = vector.multi_reduction <maximumf>, %38, %cst_14 [1] : vector<128x128xf32> to vector<128xf32>
    %40 = vector.shape_cast %39 : vector<128xf32> to vector<128x1xf32>
    %41 = vector.broadcast %40 : vector<128x1xf32> to vector<128x128xf32>
    %42 = arith.subf %38, %41 : vector<128x128xf32>
    %43 = math.exp %42 : vector<128x128xf32>
    %cst_15 = arith.constant dense<0.000000e+00> : vector<128xf32>
    %44 = vector.multi_reduction <add>, %43, %cst_15 [1] : vector<128x128xf32> to vector<128xf32>
    %45 = vector.shape_cast %44 : vector<128xf32> to vector<128x1xf32>
    %46 = tpu.reciprocal %45 {approx = true} : vector<128x1xf32> -> vector<128x1xf32>
    %47 = vector.broadcast %46 : vector<128x1xf32> to vector<128x128xf32>
    %48 = arith.mulf %43, %47 : vector<128x128xf32>
    %49 = arith.truncf %48 : vector<128x128xf32> to vector<128x128xbf16>
    %cst_16 = arith.constant dense<0.000000e+00> : vector<128x8xf32>
    %50 = tpu.matmul %49, %32, %cst_16 {dimension_numbers = #tpu.dot_dimension_numbers<[1], [0], [0], [1], [0, 0, 1, 1], [], []>} : vector<128x128xbf16>, vector<128x8xbf16>, vector<128x8xf32> -> vector<128x8xf32>
    %51 = vector.extract_strided_slice %2 {offsets = [0, 16], sizes = [128, 8], strides = [1, 1]} : vector<128x96xf32> to vector<128x8xf32>
    %52 = arith.truncf %51 : vector<128x8xf32> to vector<128x8xbf16>
    %53 = vector.extract_strided_slice %2 {offsets = [0, 48], sizes = [128, 8], strides = [1, 1]} : vector<128x96xf32> to vector<128x8xf32>
    %54 = arith.truncf %53 : vector<128x8xf32> to vector<128x8xbf16>
    %55 = vector.extract_strided_slice %2 {offsets = [0, 80], sizes = [128, 8], strides = [1, 1]} : vector<128x96xf32> to vector<128x8xf32>
    %56 = arith.truncf %55 : vector<128x8xf32> to vector<128x8xbf16>
    %57 = tpu.transpose %54, [1, 0] : vector<128x8xbf16> -> vector<8x128xbf16>
    %cst_17 = arith.constant dense<0.000000e+00> : vector<128x128xf32>
    %58 = tpu.matmul %52, %57, %cst_17 {dimension_numbers = #tpu.dot_dimension_numbers<[1], [0], [0], [1], [0, 0, 1, 1], [], []>} : vector<128x8xbf16>, vector<8x128xbf16>, vector<128x128xf32> -> vector<128x128xf32>
    %cst_18 = arith.constant 0.353553385 : f32
    %59 = vector.broadcast %cst_18 : f32 to vector<128x128xf32>
    %60 = arith.mulf %58, %59 : vector<128x128xf32>
    %c0_19 = arith.constant 0 : index
    %c0_20 = arith.constant 0 : index
    %61 = vector.load %arg3[%c0_19, %c0_20] : memref<128x128xf32, #tpu.memory_space<vmem>>, vector<128x128xf32>
    %62 = arith.addf %60, %61 : vector<128x128xf32>
    %cst_21 = arith.constant dense<0xFF800000> : vector<128xf32>
    %63 = vector.multi_reduction <maximumf>, %62, %cst_21 [1] : vector<128x128xf32> to vector<128xf32>
    %64 = vector.shape_cast %63 : vector<128xf32> to vector<128x1xf32>
    %65 = vector.broadcast %64 : vector<128x1xf32> to vector<128x128xf32>
    %66 = arith.subf %62, %65 : vector<128x128xf32>
    %67 = math.exp %66 : vector<128x128xf32>
    %cst_22 = arith.constant dense<0.000000e+00> : vector<128xf32>
    %68 = vector.multi_reduction <add>, %67, %cst_22 [1] : vector<128x128xf32> to vector<128xf32>
    %69 = vector.shape_cast %68 : vector<128xf32> to vector<128x1xf32>
    %70 = tpu.reciprocal %69 {approx = true} : vector<128x1xf32> -> vector<128x1xf32>
    %71 = vector.broadcast %70 : vector<128x1xf32> to vector<128x128xf32>
    %72 = arith.mulf %67, %71 : vector<128x128xf32>
    %73 = arith.truncf %72 : vector<128x128xf32> to vector<128x128xbf16>
    %cst_23 = arith.constant dense<0.000000e+00> : vector<128x8xf32>
    %74 = tpu.matmul %73, %56, %cst_23 {dimension_numbers = #tpu.dot_dimension_numbers<[1], [0], [0], [1], [0, 0, 1, 1], [], []>} : vector<128x128xbf16>, vector<128x8xbf16>, vector<128x8xf32> -> vector<128x8xf32>
    %75 = vector.extract_strided_slice %2 {offsets = [0, 24], sizes = [128, 8], strides = [1, 1]} : vector<128x96xf32> to vector<128x8xf32>
    %76 = arith.truncf %75 : vector<128x8xf32> to vector<128x8xbf16>
    %77 = vector.extract_strided_slice %2 {offsets = [0, 56], sizes = [128, 8], strides = [1, 1]} : vector<128x96xf32> to vector<128x8xf32>
    %78 = arith.truncf %77 : vector<128x8xf32> to vector<128x8xbf16>
    %79 = vector.extract_strided_slice %2 {offsets = [0, 88], sizes = [128, 8], strides = [1, 1]} : vector<128x96xf32> to vector<128x8xf32>
    %80 = arith.truncf %79 : vector<128x8xf32> to vector<128x8xbf16>
    %81 = tpu.transpose %78, [1, 0] : vector<128x8xbf16> -> vector<8x128xbf16>
    %cst_24 = arith.constant dense<0.000000e+00> : vector<128x128xf32>
    %82 = tpu.matmul %76, %81, %cst_24 {dimension_numbers = #tpu.dot_dimension_numbers<[1], [0], [0], [1], [0, 0, 1, 1], [], []>} : vector<128x8xbf16>, vector<8x128xbf16>, vector<128x128xf32> -> vector<128x128xf32>
    %cst_25 = arith.constant 0.353553385 : f32
    %83 = vector.broadcast %cst_25 : f32 to vector<128x128xf32>
    %84 = arith.mulf %82, %83 : vector<128x128xf32>
    %c0_26 = arith.constant 0 : index
    %c0_27 = arith.constant 0 : index
    %85 = vector.load %arg3[%c0_26, %c0_27] : memref<128x128xf32, #tpu.memory_space<vmem>>, vector<128x128xf32>
    %86 = arith.addf %84, %85 : vector<128x128xf32>
    %cst_28 = arith.constant dense<0xFF800000> : vector<128xf32>
    %87 = vector.multi_reduction <maximumf>, %86, %cst_28 [1] : vector<128x128xf32> to vector<128xf32>
    %88 = vector.shape_cast %87 : vector<128xf32> to vector<128x1xf32>
    %89 = vector.broadcast %88 : vector<128x1xf32> to vector<128x128xf32>
    %90 = arith.subf %86, %89 : vector<128x128xf32>
    %91 = math.exp %90 : vector<128x128xf32>
    %cst_29 = arith.constant dense<0.000000e+00> : vector<128xf32>
    %92 = vector.multi_reduction <add>, %91, %cst_29 [1] : vector<128x128xf32> to vector<128xf32>
    %93 = vector.shape_cast %92 : vector<128xf32> to vector<128x1xf32>
    %94 = tpu.reciprocal %93 {approx = true} : vector<128x1xf32> -> vector<128x1xf32>
    %95 = vector.broadcast %94 : vector<128x1xf32> to vector<128x128xf32>
    %96 = arith.mulf %91, %95 : vector<128x128xf32>
    %97 = arith.truncf %96 : vector<128x128xf32> to vector<128x128xbf16>
    %cst_30 = arith.constant dense<0.000000e+00> : vector<128x8xf32>
    %98 = tpu.matmul %97, %80, %cst_30 {dimension_numbers = #tpu.dot_dimension_numbers<[1], [0], [0], [1], [0, 0, 1, 1], [], []>} : vector<128x128xbf16>, vector<128x8xbf16>, vector<128x8xf32> -> vector<128x8xf32>
    %99 = tpu.concatenate %26, %50, %74, %98 in 1 : vector<128x8xf32>, vector<128x8xf32>, vector<128x8xf32>, vector<128x8xf32> -> vector<128x32xf32>
    %100 = arith.truncf %99 : vector<128x32xf32> to vector<128x32xbf16>
    %c0_31 = arith.constant 0 : index
    %c0_32 = arith.constant 0 : index
    %101 = vector.load %arg5[%c0_31, %c0_32] : memref<32x16xbf16, #tpu.memory_space<vmem>>, vector<32x16xbf16>
    %cst_33 = arith.constant dense<0.000000e+00> : vector<128x16xf32>
    %102 = tpu.matmul %100, %101, %cst_33 {dimension_numbers = #tpu.dot_dimension_numbers<[1], [0], [0], [1], [0, 0, 1, 1], [], []>} : vector<128x32xbf16>, vector<32x16xbf16>, vector<128x16xf32> -> vector<128x16xf32>
    %c0_34 = arith.constant 0 : index
    %c0_35 = arith.constant 0 : index
    %103 = vector.load %arg2[%c0_34, %c0_35] : memref<128x128xf32, #tpu.memory_space<vmem>>, vector<128x128xf32>
    %cst_36 = arith.constant dense<0.000000e+00> : vector<128x16xf32>
    %104 = tpu.matmul %103, %102, %cst_36 {dimension_numbers = #tpu.dot_dimension_numbers<[1], [0], [0], [1], [0, 0, 1, 1], [], []>} : vector<128x128xf32>, vector<128x16xf32>, vector<128x16xf32> -> vector<128x16xf32>
    %c0_37 = arith.constant 0 : index
    %c0_38 = arith.constant 0 : index
    %105 = vector.load %arg6[%c0_37, %c0_38] : memref<1x16xf32, #tpu.memory_space<vmem>>, vector<1x16xf32>
    %106 = vector.broadcast %105 : vector<1x16xf32> to vector<128x16xf32>
    %107 = arith.addf %104, %106 : vector<128x16xf32>
    %cst_39 = arith.constant 0.000000e+00 : f32
    %108 = vector.broadcast %cst_39 : f32 to vector<128x16xf32>
    %109 = arith.maximumf %107, %108 : vector<128x16xf32>
    %110 = arith.truncf %109 : vector<128x16xf32> to vector<128x16xbf16>
    %c0_40 = arith.constant 0 : index
    %c0_41 = arith.constant 0 : index
    %111 = vector.load %arg7[%c0_40, %c0_41] : memref<16x32xbf16, #tpu.memory_space<vmem>>, vector<16x32xbf16>
    %cst_42 = arith.constant dense<0.000000e+00> : vector<128x32xf32>
    %112 = tpu.matmul %110, %111, %cst_42 {dimension_numbers = #tpu.dot_dimension_numbers<[1], [0], [0], [1], [0, 0, 1, 1], [], []>} : vector<128x16xbf16>, vector<16x32xbf16>, vector<128x32xf32> -> vector<128x32xf32>
    %cst_43 = arith.constant dense<0.000000e+00> : vector<128x32xf32>
    %113 = tpu.matmul %103, %112, %cst_43 {dimension_numbers = #tpu.dot_dimension_numbers<[1], [0], [0], [1], [0, 0, 1, 1], [], []>} : vector<128x128xf32>, vector<128x32xf32>, vector<128x32xf32> -> vector<128x32xf32>
    %c0_44 = arith.constant 0 : index
    %c0_45 = arith.constant 0 : index
    %114 = vector.load %arg8[%c0_44, %c0_45] : memref<1x32xf32, #tpu.memory_space<vmem>>, vector<1x32xf32>
    %115 = vector.broadcast %114 : vector<1x32xf32> to vector<128x32xf32>
    %116 = arith.addf %113, %115 : vector<128x32xf32>
    %c0_46 = arith.constant 0 : index
    %c0_47 = arith.constant 0 : index
    %117 = vector.load %arg9[%c0_46, %c0_47] : memref<128x32xf32, #tpu.memory_space<vmem>>, vector<128x32xf32>
    tpu.vector_store %arg9[%c0_46, %c0_47], %116 {strides = array<i32>} : memref<128x32xf32, #tpu.memory_space<vmem>>, vector<128x32xf32>,
    return
  }
  func.func @transform_0(%arg0: i32) -> (i32, i32) {
    %c0_i32 = arith.constant 0 : i32
    %c0_i32_0 = arith.constant 0 : i32
    return %arg0, %c0_i32 : i32, i32
  }
  func.func @transform_1(%arg0: i32) -> (i32, i32) {
    %c0_i32 = arith.constant 0 : i32
    %c0_i32_0 = arith.constant 0 : i32
    return %arg0, %c0_i32 : i32, i32
  }
  func.func @transform_2(%arg0: i32) -> (i32, i32) {
    %c0_i32 = arith.constant 0 : i32
    %c0_i32_0 = arith.constant 0 : i32
    %c0_i32_1 = arith.constant 0 : i32
    return %c0_i32, %c0_i32_0 : i32, i32
  }
  func.func @transform_3(%arg0: i32) -> (i32, i32) {
    %c0_i32 = arith.constant 0 : i32
    %c0_i32_0 = arith.constant 0 : i32
    %c0_i32_1 = arith.constant 0 : i32
    return %c0_i32, %c0_i32_0 : i32, i32
  }
  func.func @transform_4(%arg0: i32) -> (i32, i32) {
    %c0_i32 = arith.constant 0 : i32
    %c0_i32_0 = arith.constant 0 : i32
    %c0_i32_1 = arith.constant 0 : i32
    return %c0_i32, %c0_i32_0 : i32, i32
  }
  func.func @transform_5(%arg0: i32) -> (i32, i32) {
    %c0_i32 = arith.constant 0 : i32
    %c0_i32_0 = arith.constant 0 : i32
    %c0_i32_1 = arith.constant 0 : i32
    return %c0_i32, %c0_i32_0 : i32, i32
  }
  func.func @transform_6(%arg0: i32) -> (i32, i32) {
    %c0_i32 = arith.constant 0 : i32
    %c0_i32_0 = arith.constant 0 : i32
    %c0_i32_1 = arith.constant 0 : i32
    return %c0_i32, %c0_i32_0 : i32, i32
  }
  func.func @transform_7(%arg0: i32) -> (i32, i32) {
    %c0_i32 = arith.constant 0 : i32
    %c0_i32_0 = arith.constant 0 : i32
    %c0_i32_1 = arith.constant 0 : i32
    return %c0_i32, %c0_i32_0 : i32, i32
  }
  func.func @transform_8(%arg0: i32) -> (i32, i32) {
    %c0_i32 = arith.constant 0 : i32
    %c0_i32_0 = arith.constant 0 : i32
    return %arg0, %c0_i32 : i32, i32
  }
}

</mosaic_0001>

<llo_original>
// kernel: eq.10
$region0: #{eq.10}
  %s0 = inlined_call_operand.vmem [shape: s32[8,16], index: 0, kind: input, shape index: {}]
  %s1 = inlined_call_operand.vmem [shape: s32[128], index: 1, kind: output, shape index: {}]
  $region1: #{eq.10} parent=0
    #allocation0 [shape = 'u8[4096]{0}', space=vmem, size = 0x1000, scoped, tag = 'scoped mem for output reshape']
    %v2 = vld [vmem:[%s0] sm:$0x1]
    %vm3 = vcmask 130048
    %4 = vst.msk [vmem:[#allocation0] sm:$0x1] %vm3, %v2
    %s5 = scalar_lea.vmem %s0, 7
    %v6 = vld [vmem:[%s5] sm:$0x1]
    %7 = vrot.lane.b32.xlu0 %v6, 112
    %v8 = vpop.permute.xlu0 %7
    %vm9 = vcmask 1048448
    %10 = vst.msk [vmem:[#allocation0] sm:$0x1] %vm9, %v8
    %s11 = scalar_lea.vmem %s0, 6
    %v12 = vld [vmem:[%s11] sm:$0x1]
    %13 = vrot.lane.b32.xlu0 %v12, 96
    %v14 = vpop.permute.xlu0 %13
    %vm15 = vcmask 917248
    %16 = vst.msk [vmem:[#allocation0] sm:$0x1] %vm15, %v14
    %s17 = scalar_lea.vmem %s0, 5
    %v18 = vld [vmem:[%s17] sm:$0x1]
    %19 = vrot.lane.b32.xlu0 %v18, 80
    %v20 = vpop.permute.xlu0 %19
    %vm21 = vcmask 786048
    %22 = vst.msk [vmem:[#allocation0] sm:$0x1] %vm21, %v20
    %s23 = scalar_lea.vmem %s0, 4
    %v24 = vld [vmem:[%s23] sm:$0x1]
    %25 = vrot.lane.b32.xlu0 %v24, 64
    %v26 = vpop.permute.xlu0 %25
    %vm27 = vcmask 654848
    %28 = vst.msk [vmem:[#allocation0] sm:$0x1] %vm27, %v26
    %s29 = scalar_lea.vmem %s0, 3
    %v30 = vld [vmem:[%s29] sm:$0x1]
    %31 = vrot.lane.b32.xlu0 %v30, 48
    %v32 = vpop.permute.xlu0 %31
    %vm33 = vcmask 523648
    %34 = vst.msk [vmem:[#allocation0] sm:$0x1] %vm33, %v32
    %s35 = scalar_lea.vmem %s0, 2
    %v36 = vld [vmem:[%s35] sm:$0x1]
    %37 = vrot.lane.b32.xlu0 %v36, 32
    %v38 = vpop.permute.xlu0 %37
    %vm39 = vcmask 392448
    %40 = vst.msk [vmem:[#allocation0] sm:$0x1] %vm39, %v38
    %s41 = scalar_lea.vmem %s0, 1
    %v42 = vld [vmem:[%s41] sm:$0x1]
    %43 = vrot.lane.b32.xlu0 %v42, 16
    %v44 = vpop.permute.xlu0 %43
    %vm45 = vcmask 261248
    %46 = vst.msk [vmem:[#allocation0] sm:$0x1] %vm45, %v44
    %s48 = sshllo.u32 0, 1
    %v50 = vld [vmem:[#allocation0] sm:%s48]
    %s51 = sshllo.u32 0, 1
    %52 = vst [vmem:[%s1] sm:%s51] %v50

// kernel: gcn_net_sa4_forward.1
$region0: #{gcn_net_sa4_forward.1}
  #allocation0 [shape = 'u32[]', space=smem, size = 0x4, offset = 0x4, fixed_abs, tag = 'smem constant byte address 0x4 - core index']
  #allocation1 [shape = 'u32[144,128]{1,0:T(1,128)}', space=vmem, size = 0x12000, scoped, tag = 'internal scratch']
  %s0 = inlined_call_operand.vmem [shape: bf16[512,32], index: 0, kind: input, shape index: {}]
  %s1 = inlined_call_operand.vmem [shape: f32[512,128], index: 1, kind: input, shape index: {}]
  %s2 = inlined_call_operand.vmem [shape: f32[128,128], index: 2, kind: input, shape index: {}]
  %s3 = inlined_call_operand.vmem [shape: bf16[32,96], index: 3, kind: input, shape index: {}]
  %s4 = inlined_call_operand.vmem [shape: bf16[32,16], index: 4, kind: input, shape index: {}]
  %s5 = inlined_call_operand.vmem [shape: f32[1,16], index: 5, kind: input, shape index: {}]
  %s6 = inlined_call_operand.vmem [shape: bf16[16,32], index: 6, kind: input, shape index: {}]
  %s7 = inlined_call_operand.vmem [shape: f32[1,32], index: 7, kind: input, shape index: {}]
  %s8 = inlined_call_operand.hbm [shape: f32[512,32], index: 8, kind: output, shape index: {}]
  %s9 = sld [smem:[#allocation0]]
  $region65: #{gcn_net_sa4_forward.1} parent=0
    _
  %s11 = ssub.s32 1, %s9
  %s12 = scalar_select 0, %s11, %s9
  $region1: #{gcn_net_sa4_forward.1} parent=0
    #allocation2 [shape = 'u8[131072]{0}', space=vmem, size = 0x20000, scoped, tag = 'output window, operand 0']
    #allocation3 [shape = 's32[2]{0}', space=sflag, size = 0x8, scoped, tag = 'scoped memory for gcn_net_sa4_forward.1']
    %13 = vsyncpa [#allocation3], 0
    %s14 = scalar_lea.sflag [#allocation3], 1
    %15 = vsyncpa %s14, 0
    loop: start=0, step=1, limit=6
    $region2: #{gcn_net_sa4_forward.1} parent=1 // loop_pre_header
      _
    $region3: #{gcn_net_sa4_forward.1} parent=1 // loop_header
      %s17 = sphi 0, %s21
      %p18 = scmp.ge.s32.totalorder %s17, 6
      %s27 = sphi 0, %s29
      %s30 = sphi 0, %s27
      %s31 = sphi 0, %s30
      %s47 = sphi 0, %s31
      %s53 = sphi 0, %s55
      %s56 = sphi 0, %s53
      %s57 = sphi 0, %s56
      %s73 = sphi 0, %s57
      %s77 = sphi 0, %s77
      %s79 = sphi 0, %s77
      %s80 = sphi 0, %s79
      %s94 = sphi 0, %s80
      %s98 = sphi 0, %s98
      %s100 = sphi 0, %s98
      %s101 = sphi 0, %s100
      %s115 = sphi 0, %s101
      %s119 = sphi 0, %s119
      %s121 = sphi 0, %s119
      %s122 = sphi 0, %s121
      %s136 = sphi 0, %s122
      %s140 = sphi 0, %s140
      %s142 = sphi 0, %s140
      %s143 = sphi 0, %s142
      %s157 = sphi 0, %s143
      %s161 = sphi 0, %s161
      %s163 = sphi 0, %s161
      %s164 = sphi 0, %s163
      %s178 = sphi 0, %s164
      %s182 = sphi 0, %s182
      %s184 = sphi 0, %s182
      %s185 = sphi 0, %s184
      %s199 = sphi 0, %s185
      %s205 = sphi 0, %s207
      %s208 = sphi 0, %s205
      %s209 = sphi 0, %s208
      %s225 = sphi 0, %s209
    $region4: #{gcn_net_sa4_forward.1} parent=1 // loop_header_branch
      %20 = sbr.rel (%p18) target = $region8
    $region5: #{gcn_net_sa4_forward.1} parent=1 // loop_body
      %s22 = ssub.s32 %s17, 1
      %s23 = ssub.s32 %s17, 2
      %s24 = sadd.s32 %s17, 1
      %s25 = ssub.s32 %s17, %s24
      %p26 = scmp.eq.s32.totalorder %s25, 0
      %s28 = sadd.s32 %s27, 1
      %s29 = scalar_select %p26, %s27, %s28
      %p32 = pneg %p26
      %p33 = scmp.eq.s32.totalorder %s17, 3
      %p34 = por %p32, %p33
      %p35 = scmp.ne.s32.totalorder %s27, %s30
      %p36 = scmp.eq.s32.totalorder %s17, 0
      %p37 = por %p35, %p36
      %p38 = scmp.ne.s32.totalorder %s27, %s30
      %p39 = scmp.eq.s32.totalorder %s22, 3
      %p40 = por %p38, %p39
      %p41 = scmp.ne.s32.totalorder %s30, %s31
      %p42 = scmp.eq.s32.totalorder %s22, 0
      %p43 = por %p41, %p42
      %p44 = scmp.ne.s32.totalorder %s30, %s31
      %p45 = scmp.eq.s32.totalorder %s23, 3
      %p46 = por %p44, %p45
      %p48 = scmp.ne.s32.totalorder %s31, %s47
      %p49 = scmp.eq.s32.totalorder %s23, 0
      %p50 = por %p48, %p49
      %s51 = ssub.s32 %s17, %s24
      %p52 = scmp.eq.s32.totalorder %s51, 0
      %s54 = sadd.s32 %s53, 1
      %s55 = scalar_select %p52, %s53, %s54
      %p58 = pneg %p52
      %p59 = scmp.eq.s32.totalorder %s17, 3
      %p60 = por %p58, %p59
      %p61 = scmp.ne.s32.totalorder %s53, %s56
      %p62 = scmp.eq.s32.totalorder %s17, 0
      %p63 = por %p61, %p62
      %p64 = scmp.ne.s32.totalorder %s53, %s56
      %p65 = scmp.eq.s32.totalorder %s22, 3
      %p66 = por %p64, %p65
      %p67 = scmp.ne.s32.totalorder %s56, %s57
      %p68 = scmp.eq.s32.totalorder %s22, 0
      %p69 = por %p67, %p68
      %p70 = scmp.ne.s32.totalorder %s56, %s57
      %p71 = scmp.eq.s32.totalorder %s23, 3
      %p72 = por %p70, %p71
      %p74 = scmp.ne.s32.totalorder %s57, %s73
      %p75 = scmp.eq.s32.totalorder %s23, 0
      %p76 = por %p74, %p75
      %s78 = sadd.s32 %s77, 1
      %p81 = scmp.eq.s32.totalorder %s17, 3
      %p82 = scmp.ne.s32.totalorder %s77, %s79
      %p83 = scmp.eq.s32.totalorder %s17, 0
      %p84 = por %p82, %p83
      %p85 = scmp.ne.s32.totalorder %s77, %s79
      %p86 = scmp.eq.s32.totalorder %s22, 3
      %p87 = por %p85, %p86
      %p88 = scmp.ne.s32.totalorder %s79, %s80
      %p89 = scmp.eq.s32.totalorder %s22, 0
      %p90 = por %p88, %p89
      %p91 = scmp.ne.s32.totalorder %s79, %s80
      %p92 = scmp.eq.s32.totalorder %s23, 3
      %p93 = por %p91, %p92
      %p95 = scmp.ne.s32.totalorder %s80, %s94
      %p96 = scmp.eq.s32.totalorder %s23, 0
      %p97 = por %p95, %p96
      %s99 = sadd.s32 %s98, 1
      %p102 = scmp.eq.s32.totalorder %s17, 3
      %p103 = scmp.ne.s32.totalorder %s98, %s100
      %p104 = scmp.eq.s32.totalorder %s17, 0
      %p105 = por %p103, %p104
      %p106 = scmp.ne.s32.totalorder %s98, %s100
      %p107 = scmp.eq.s32.totalorder %s22, 3
      %p108 = por %p106, %p107
      %p109 = scmp.ne.s32.totalorder %s100, %s101
      %p110 = scmp.eq.s32.totalorder %s22, 0
      %p111 = por %p109, %p110
      %p112 = scmp.ne.s32.totalorder %s100, %s101
      %p113 = scmp.eq.s32.totalorder %s23, 3
      %p114 = por %p112, %p113
      %p116 = scmp.ne.s32.totalorder %s101, %s115
      %p117 = scmp.eq.s32.totalorder %s23, 0
      %p118 = por %p116, %p117
      %s120 = sadd.s32 %s119, 1
      %p123 = scmp.eq.s32.totalorder %s17, 3
      %p124 = scmp.ne.s32.totalorder %s119, %s121
      %p125 = scmp.eq.s32.totalorder %s17, 0
      %p126 = por %p124, %p125
      %p127 = scmp.ne.s32.totalorder %s119, %s121
      %p128 = scmp.eq.s32.totalorder %s22, 3
      %p129 = por %p127, %p128
      %p130 = scmp.ne.s32.totalorder %s121, %s122
      %p131 = scmp.eq.s32.totalorder %s22, 0
      %p132 = por %p130, %p131
      %p133 = scmp.ne.s32.totalorder %s121, %s122
      %p134 = scmp.eq.s32.totalorder %s23, 3
      %p135 = por %p133, %p134
      %p137 = scmp.ne.s32.totalorder %s122, %s136
      %p138 = scmp.eq.s32.totalorder %s23, 0
      %p139 = por %p137, %p138
      %s141 = sadd.s32 %s140, 1
      %p144 = scmp.eq.s32.totalorder %s17, 3
      %p145 = scmp.ne.s32.totalorder %s140, %s142
      %p146 = scmp.eq.s32.totalorder %s17, 0
      %p147 = por %p145, %p146
      %p148 = scmp.ne.s32.totalorder %s140, %s142
      %p149 = scmp.eq.s32.totalorder %s22, 3
      %p150 = por %p148, %p149
      %p151 = scmp.ne.s32.totalorder %s142, %s143
      %p152 = scmp.eq.s32.totalorder %s22, 0
      %p153 = por %p151, %p152
      %p154 = scmp.ne.s32.totalorder %s142, %s143
      %p155 = scmp.eq.s32.totalorder %s23, 3
      %p156 = por %p154, %p155
      %p158 = scmp.ne.s32.totalorder %s143, %s157
      %p159 = scmp.eq.s32.totalorder %s23, 0
      %p160 = por %p158, %p159
      %s162 = sadd.s32 %s161, 1
      %p165 = scmp.eq.s32.totalorder %s17, 3
      %p166 = scmp.ne.s32.totalorder %s161, %s163
      %p167 = scmp.eq.s32.totalorder %s17, 0
      %p168 = por %p166, %p167
      %p169 = scmp.ne.s32.totalorder %s161, %s163
      %p170 = scmp.eq.s32.totalorder %s22, 3
      %p171 = por %p169, %p170
      %p172 = scmp.ne.s32.totalorder %s163, %s164
      %p173 = scmp.eq.s32.totalorder %s22, 0
      %p174 = por %p172, %p173
      %p175 = scmp.ne.s32.totalorder %s163, %s164
      %p176 = scmp.eq.s32.totalorder %s23, 3
      %p177 = por %p175, %p176
      %p179 = scmp.ne.s32.totalorder %s164, %s178
      %p180 = scmp.eq.s32.totalorder %s23, 0
      %p181 = por %p179, %p180
      %s183 = sadd.s32 %s182, 1
      %p186 = scmp.eq.s32.totalorder %s17, 3
      %p187 = scmp.ne.s32.totalorder %s182, %s184
      %p188 = scmp.eq.s32.totalorder %s17, 0
      %p189 = por %p187, %p188
      %p190 = scmp.ne.s32.totalorder %s182, %s184
      %p191 = scmp.eq.s32.totalorder %s22, 3
      %p192 = por %p190, %p191
      %p193 = scmp.ne.s32.totalorder %s184, %s185
      %p194 = scmp.eq.s32.totalorder %s22, 0
      %p195 = por %p193, %p194
      %p196 = scmp.ne.s32.totalorder %s184, %s185
      %p197 = scmp.eq.s32.totalorder %s23, 3
      %p198 = por %p196, %p197
      %p200 = scmp.ne.s32.totalorder %s185, %s199
      %p201 = scmp.eq.s32.totalorder %s23, 0
      %p202 = por %p200, %p201
      %s203 = ssub.s32 %s17, %s24
      %p204 = scmp.eq.s32.totalorder %s203, 0
      %s206 = sadd.s32 %s205, 1
      %s207 = scalar_select %p204, %s205, %s206
      %p210 = pneg %p204
      %p211 = scmp.eq.s32.totalorder %s17, 3
      %p212 = por %p210, %p211
      %p213 = scmp.ne.s32.totalorder %s205, %s208
      %p214 = scmp.eq.s32.totalorder %s17, 0
      %p215 = por %p213, %p214
      %p216 = scmp.ne.s32.totalorder %s205, %s208
      %p217 = scmp.eq.s32.totalorder %s22, 3
      %p218 = por %p216, %p217
      %p219 = scmp.ne.s32.totalorder %s208, %s209
      %p220 = scmp.eq.s32.totalorder %s22, 0
      %p221 = por %p219, %p220
      %p222 = scmp.ne.s32.totalorder %s208, %s209
      %p223 = scmp.eq.s32.totalorder %s23, 3
      %p224 = por %p222, %p223
      %p226 = scmp.ne.s32.totalorder %s209, %s225
      %p227 = scmp.eq.s32.totalorder %s23, 0
      %p228 = por %p226, %p227
      %p229 = scmp.le.s32.totalorder 1, %s17
      %p230 = scmp.lt.s32.totalorder %s17, 5
      %p231 = pnand %p229, %p230
      %p232 = pneg %p231
      // Predicated region
      $region9: #{gcn_net_sa4_forward.1} parent=5 // pred_check
        _
      $region10: #{gcn_net_sa4_forward.1} parent=5 // pred_check_branch
        %234 = sbr.rel (%p231) target = $region12
      $region11: #{gcn_net_sa4_forward.1} parent=5 // pred_region
        %s235 = ssub.s32 %s17, 1
        // Predicated region
        $region13: #{gcn_net_sa4_forward.1} parent=11 // pred_check
          %p236 = pneg %p90
        $region14: #{gcn_net_sa4_forward.1} parent=11 // pred_check_branch
          %238 = sbr.rel (%p236) target = $region16
        $region15: #{gcn_net_sa4_forward.1} parent=11 // pred_region
          _
        $region16: #{gcn_net_sa4_forward.1} parent=11 // pred_fallthru
          _
        // Predicated region
        $region17: #{gcn_net_sa4_forward.1} parent=11 // pred_check
          %p239 = pneg %p111
        $region18: #{gcn_net_sa4_forward.1} parent=11 // pred_check_branch
          %241 = sbr.rel (%p239) target = $region20
        $region19: #{gcn_net_sa4_forward.1} parent=11 // pred_region
          _
        $region20: #{gcn_net_sa4_forward.1} parent=11 // pred_fallthru
          _
        // Predicated region
        $region21: #{gcn_net_sa4_forward.1} parent=11 // pred_check
          %p242 = pneg %p132
        $region22: #{gcn_net_sa4_forward.1} parent=11 // pred_check_branch
          %244 = sbr.rel (%p242) target = $region24
        $region23: #{gcn_net_sa4_forward.1} parent=11 // pred_region
          _
        $region24: #{gcn_net_sa4_forward.1} parent=11 // pred_fallthru
          _
        // Predicated region
        $region25: #{gcn_net_sa4_forward.1} parent=11 // pred_check
          %p245 = pneg %p153
        $region26: #{gcn_net_sa4_forward.1} parent=11 // pred_check_branch
          %247 = sbr.rel (%p245) target = $region28
        $region27: #{gcn_net_sa4_forward.1} parent=11 // pred_region
          _
        $region28: #{gcn_net_sa4_forward.1} parent=11 // pred_fallthru
          _
        // Predicated region
        $region29: #{gcn_net_sa4_forward.1} parent=11 // pred_check
          %p248 = pneg %p174
        $region30: #{gcn_net_sa4_forward.1} parent=11 // pred_check_branch
          %250 = sbr.rel (%p248) target = $region32
        $region31: #{gcn_net_sa4_forward.1} parent=11 // pred_region
          _
        $region32: #{gcn_net_sa4_forward.1} parent=11 // pred_fallthru
          _
        // Predicated region
        $region33: #{gcn_net_sa4_forward.1} parent=11 // pred_check
          %p251 = pneg %p195
        $region34: #{gcn_net_sa4_forward.1} parent=11 // pred_check_branch
          %253 = sbr.rel (%p251) target = $region36
        $region35: #{gcn_net_sa4_forward.1} parent=11 // pred_region
          _
        $region36: #{gcn_net_sa4_forward.1} parent=11 // pred_fallthru
          _
      $region12: #{gcn_net_sa4_forward.1} parent=5 // pred_fallthru
        _
      %p254 = scmp.lt.s32.totalorder %s17, 4
      // Predicated region
      $region37: #{gcn_net_sa4_forward.1} parent=5 // pred_check
        %p255 = pneg %p254
      $region38: #{gcn_net_sa4_forward.1} parent=5 // pred_check_branch
        %257 = sbr.rel (%p255) target = $region40
      $region39: #{gcn_net_sa4_forward.1} parent=5 // pred_region
        // Predicated region
        $region41: #{gcn_net_sa4_forward.1} parent=39 // pred_check
          %p258 = pneg %p37
        $region42: #{gcn_net_sa4_forward.1} parent=39 // pred_check_branch
          %260 = sbr.rel (%p258) target = $region44
        $region43: #{gcn_net_sa4_forward.1} parent=39 // pred_region
          %s261 = smul.u32 16, %s17
          %p262 = scmp.lt.s32.totalorder %s261, 63
          %s263 = scalar_select %p262, %s261, 63
          %s264 = smul.addr %s263, 4
          %s265 = scalar_lea.vmem %s0, %s264
          %s266 = smul.u32 16, %s17
        $region44: #{gcn_net_sa4_forward.1} parent=39 // pred_fallthru
          _
        // Predicated region
        $region45: #{gcn_net_sa4_forward.1} parent=39 // pred_check
          %p267 = pneg %p63
        $region46: #{gcn_net_sa4_forward.1} parent=39 // pred_check_branch
          %269 = sbr.rel (%p267) target = $region48
        $region47: #{gcn_net_sa4_forward.1} parent=39 // pred_region
          %s270 = smul.u32 16, %s17
          %p271 = scmp.lt.s32.totalorder %s270, 63
          %s272 = scalar_select %p271, %s270, 63
          %s273 = smul.addr %s272, 8
          %s274 = scalar_lea.vmem %s1, %s273
          %s275 = smul.u32 16, %s17
        $region48: #{gcn_net_sa4_forward.1} parent=39 // pred_fallthru
          _
      $region40: #{gcn_net_sa4_forward.1} parent=5 // pred_fallthru
        _
      %p276 = scmp.le.s32.totalorder 1, %s17
      %p277 = scmp.lt.s32.totalorder %s17, 5
      %p278 = pnand %p276, %p277
      %p279 = pneg %p278
      // Predicated region
      $region49: #{gcn_net_sa4_forward.1} parent=5 // pred_check
        _
      $region50: #{gcn_net_sa4_forward.1} parent=5 // pred_check_branch
        %281 = sbr.rel (%p278) target = $region52
      $region51: #{gcn_net_sa4_forward.1} parent=5 // pred_region
        %s282 = ssub.s32 %s17, 1
        %s283 = smul.u32 16, %s22
        %p284 = scmp.lt.s32.totalorder %s283, 63
        %s285 = scalar_select %p284, %s283, 63
        %s286 = smul.addr %s285, 4
        %s287 = scalar_lea.vmem %s0, %s286
        %p288 = pneg %p43
        %p289 = pneg %p40
        %s290 = smul.u32 16, %s22
        %p291 = scmp.lt.s32.totalorder %s290, 63
        %s292 = scalar_select %p291, %s290, 63
        %s293 = smul.addr %s292, 8
        %s294 = scalar_lea.vmem %s1, %s293
        %p295 = pneg %p69
        %p296 = pneg %p66
        %p297 = pneg %p90
        %p298 = pneg %p87
        %p299 = pneg %p111
        %p300 = pneg %p108
        %p301 = pneg %p132
        %p302 = pneg %p129
        %p303 = pneg %p153
        %p304 = pneg %p150
        %p305 = pneg %p174
        %p306 = pneg %p171
        %p307 = pneg %p195
        %p308 = pneg %p192
        %p309 = pneg %p221
        %p310 = pneg %p218
        %s311 = sand.u32 %s208, 1
        %s312 = scalar_lea.sflag [#allocation3], %s311
        %s313 = sand.u32 %s208, 1
        %s314 = smul.addr %s313, 128
        %s315 = scalar_lea.vmem [#allocation2], %s314
        %s316 = smul.u32 16, %s22
        %p317 = scmp.lt.s32.totalorder %s316, 63
        %s318 = scalar_select %p317, %s316, 63
        %s319 = smul.addr %s318, 4
        %s320 = scalar_lea.vmem %s0, %s319
        %s321 = smul.u32 16, %s22
        %s322 = smul.u32 16, %s22
        %p323 = scmp.lt.s32.totalorder %s322, 63
        %s324 = scalar_select %p323, %s322, 63
        %s325 = smul.addr %s324, 8
        %s326 = scalar_lea.vmem %s1, %s325
        %s327 = smul.u32 16, %s22
        %s328 = smul.u32 16, %s22
        %v330 = vld [vmem:[%s320] sm:$0xf]
        %v331 = vld [vmem:[%s320 + $0x4] sm:$0xf]
        %v332 = vld [vmem:[%s320 + $0x8] sm:$0xf]
        %v333 = vld [vmem:[%s320 + $0xc] sm:$0xf]
        %v334 = vld [vmem:[%s320 + $0x10] sm:$0xf]
        %v335 = vld [vmem:[%s320 + $0x14] sm:$0xf]
        %v336 = vld [vmem:[%s320 + $0x18] sm:$0xf]
        %v337 = vld [vmem:[%s320 + $0x1c] sm:$0xf]
        %v338 = vld [vmem:[%s320 + $0x20] sm:$0xf]
        %v339 = vld [vmem:[%s320 + $0x24] sm:$0xf]
        %v340 = vld [vmem:[%s320 + $0x28] sm:$0xf]
        %v341 = vld [vmem:[%s320 + $0x2c] sm:$0xf]
        %v342 = vld [vmem:[%s320 + $0x30] sm:$0xf]
        %v343 = vld [vmem:[%s320 + $0x34] sm:$0xf]
        %v344 = vld [vmem:[%s320 + $0x38] sm:$0xf]
        %v345 = vld [vmem:[%s320 + $0x3c] sm:$0xf]
        %v346 = vld [vmem:[%s3] sm:$0xf]
        %v347 = vld [vmem:[%s3 + $0x4] sm:$0xf]
        %v348 = vld [vmem:[%s3 + $0x8] sm:$0xf]
        %v349 = vld [vmem:[%s3 + $0xc] sm:$0xf]
        %v366 = vunpack.c.l.b16 %v330
        %v367 = vunpack.c.l.b16 %v331
        %v368 = vunpack.c.l.b16 %v332
        %v369 = vunpack.c.l.b16 %v333
        %v370 = vunpack.c.l.b16 %v334
        %v371 = vunpack.c.l.b16 %v335
        %v372 = vunpack.c.l.b16 %v336
        %v373 = vunpack.c.l.b16 %v337
        %v374 = vunpack.c.l.b16 %v338
        %v375 = vunpack.c.l.b16 %v339
        %v376 = vunpack.c.l.b16 %v340
        %v377 = vunpack.c.l.b16 %v341
        %v378 = vunpack.c.l.b16 %v342
        %v379 = vunpack.c.l.b16 %v343
        %v380 = vunpack.c.l.b16 %v344
        %v381 = vunpack.c.l.b16 %v345
        %v382 = vpack.c.b16 %v367, %v366
        %v383 = vpack.c.b16 %v369, %v368
        %v384 = vpack.c.b16 %v371, %v370
        %v385 = vpack.c.b16 %v373, %v372
        %v386 = vpack.c.b16 %v375, %v374
        %v387 = vpack.c.b16 %v377, %v376
        %v388 = vpack.c.b16 %v379, %v378
        %v389 = vpack.c.b16 %v381, %v380
        %v394 = vunpack.c.l.b16 %v346
        %v395 = vunpack.c.l.b16 %v347
        %v396 = vunpack.c.l.b16 %v348
        %v397 = vunpack.c.l.b16 %v349
        %v398 = vpack.c.b16 %v395, %v394
        %v399 = vpack.c.b16 %v397, %v396
        %vm402 = vcmask 261120
        %v404 = vsel %vm402, %v382, 0
        %v407 = vsel %vm402, %v383, 0
        %v410 = vsel %vm402, %v384, 0
        %v413 = vsel %vm402, %v385, 0
        %v416 = vsel %vm402, %v386, 0
        %v419 = vsel %vm402, %v387, 0
        %v422 = vsel %vm402, %v388, 0
        %v425 = vsel %vm402, %v389, 0
        %427 = vmatprep.subr.bf16.mxu0 0
        %428 = vmatpush1.bf16.msra.mxu0 %v398
        %429 = vmatprep.subr.bf16.mxu0 0
        %430 = vmatpush1.bf16.msra.mxu0 %v399
        %431 = vmatprep.subr.bf16.mxu0 0
        %432 = vmatpush1.bf16.msra.mxu0 0
        %433 = vmatprep.subr.bf16.mxu0 0
        %434 = vmatpush1.bf16.msra.mxu0 0
        %435 = vmatprep.subr.bf16.mxu0 0
        %436 = vmatpush1.bf16.msra.mxu0 0
        %437 = vmatprep.subr.bf16.mxu0 0
        %438 = vmatpush1.bf16.msra.mxu0 0
        %439 = vmatprep.subr.bf16.mxu0 0
        %440 = vmatpush1.bf16.msra.mxu0 0
        %441 = vmatprep.subr.bf16.mxu0 0
        %442 = vmatpush1.bf16.msra.mxu0 0
        %443 = vmatprep.subr.bf16.mxu0 0
        %444 = vmatpush1.bf16.msra.mxu0 0
        %445 = vmatprep.subr.bf16.mxu0 0
        %446 = vmatpush1.bf16.msra.mxu0 0
        %447 = vmatprep.subr.bf16.mxu0 0
        %448 = vmatpush1.bf16.msra.mxu0 0
        %449 = vmatprep.subr.bf16.mxu0 0
        %450 = vmatpush1.bf16.msra.mxu0 0
        %451 = vmatprep.subr.bf16.mxu0 0
        %452 = vmatpush1.bf16.msra.mxu0 0
        %453 = vmatprep.subr.bf16.mxu0 0
        %454 = vmatpush1.bf16.msra.mxu0 0
        %455 = vmatprep.subr.bf16.mxu0 0
        %456 = vmatpush1.bf16.msra.mxu0 0
        %457 = vmatprep.subr.bf16.mxu0 0
        %458 = vmatpush1.bf16.msra.mxu0 0
        %459 = vmatprep.mubr.bf16.mxu0 0
        %460 = vmatmul.mubr.bf16.gmra.mrb[0].mxu0 %v404
        %v461 = vpop.f32.mrb[0].mxu0
        %v462 = vadd.f32 0.0, %v461
        %v463 = vpop.f32.mrb[0].mxu0
        %v464 = vpop.f32.mrb[0].mxu0
        %v465 = vadd.f32 0.0, %v464
        %v466 = vpop.f32.mrb[0].mxu0
        %467 = vmatprep.mubr.bf16.mxu0 0
        %468 = vmatmul.mubr.bf16.gmra.mrb[0].mxu0 %v407
        %v469 = vpop.f32.mrb[0].mxu0
        %v470 = vadd.f32 0.0, %v469
        %v471 = vpop.f32.mrb[0].mxu0
        %v472 = vpop.f32.mrb[0].mxu0
        %v473 = vadd.f32 0.0, %v472
        %v474 = vpop.f32.mrb[0].mxu0
        %475 = vmatprep.mubr.bf16.mxu0 0
        %476 = vmatmul.mubr.bf16.gmra.mrb[0].mxu0 %v410
        %v477 = vpop.f32.mrb[0].mxu0
        %v478 = vadd.f32 0.0, %v477
        %v479 = vpop.f32.mrb[0].mxu0
        %v480 = vpop.f32.mrb[0].mxu0
        %v481 = vadd.f32 0.0, %v480
        %v482 = vpop.f32.mrb[0].mxu0
        %483 = vmatprep.mubr.bf16.mxu0 0
        %484 = vmatmul.mubr.bf16.gmra.mrb[0].mxu0 %v413
        %v485 = vpop.f32.mrb[0].mxu0
        %v486 = vadd.f32 0.0, %v485
        %v487 = vpop.f32.mrb[0].mxu0
        %v488 = vpop.f32.mrb[0].mxu0
        %v489 = vadd.f32 0.0, %v488
        %v490 = vpop.f32.mrb[0].mxu0
        %491 = vmatprep.mubr.bf16.mxu0 0
        %492 = vmatmul.mubr.bf16.gmra.mrb[0].mxu0 %v416
        %v493 = vpop.f32.mrb[0].mxu0
        %v494 = vadd.f32 0.0, %v493
        %v495 = vpop.f32.mrb[0].mxu0
        %v496 = vpop.f32.mrb[0].mxu0
        %v497 = vadd.f32 0.0, %v496
        %v498 = vpop.f32.mrb[0].mxu0
        %499 = vmatprep.mubr.bf16.mxu0 0
        %500 = vmatmul.mubr.bf16.gmra.mrb[0].mxu0 %v419
        %v501 = vpop.f32.mrb[0].mxu0
        %v502 = vadd.f32 0.0, %v501
        %v503 = vpop.f32.mrb[0].mxu0
        %v504 = vpop.f32.mrb[0].mxu0
        %v505 = vadd.f32 0.0, %v504
        %v506 = vpop.f32.mrb[0].mxu0
        %507 = vmatprep.mubr.bf16.mxu0 0
        %508 = vmatmul.mubr.bf16.gmra.mrb[0].mxu0 %v422
        %v509 = vpop.f32.mrb[0].mxu0
        %v510 = vadd.f32 0.0, %v509
        %v511 = vpop.f32.mrb[0].mxu0
        %v512 = vpop.f32.mrb[0].mxu0
        %v513 = vadd.f32 0.0, %v512
        %v514 = vpop.f32.mrb[0].mxu0
        %515 = vmatprep.mubr.bf16.mxu0 0
        %516 = vmatmul.mubr.bf16.gmra.mrb[0].mxu0 %v425
        %v517 = vpop.f32.mrb[0].mxu0
        %v518 = vadd.f32 0.0, %v517
        %v519 = vpop.f32.mrb[0].mxu0
        %v520 = vpop.f32.mrb[0].mxu0
        %v521 = vadd.f32 0.0, %v520
        %v522 = vpop.f32.mrb[0].mxu0
        %523 = vdwg.mxu0
        %v524 = vpack.c.bf16 %v465, %v462
        %v525 = vpack.c.bf16 %v473, %v470
        %v526 = vpack.c.bf16 %v481, %v478
        %v527 = vpack.c.bf16 %v489, %v486
        %v528 = vpack.c.bf16 %v497, %v494
        %v529 = vpack.c.bf16 %v505, %v502
        %v530 = vpack.c.bf16 %v513, %v510
        %v531 = vpack.c.bf16 %v521, %v518
        %540 = vrot.lane.b32.xlu0 %v524, 96
        %v541 = vpop.permute.xlu0 %540
        %542 = vrot.lane.b32.xlu0 %v525, 96
        %v543 = vpop.permute.xlu0 %542
        %544 = vrot.lane.b32.xlu0 %v526, 96
        %v545 = vpop.permute.xlu0 %544
        %546 = vrot.lane.b32.xlu0 %v527, 96
        %v547 = vpop.permute.xlu0 %546
        %548 = vrot.lane.b32.xlu0 %v528, 96
        %v549 = vpop.permute.xlu0 %548
        %550 = vrot.lane.b32.xlu0 %v529, 96
        %v551 = vpop.permute.xlu0 %550
        %552 = vrot.lane.b32.xlu0 %v530, 96
        %v553 = vpop.permute.xlu0 %552
        %554 = vrot.lane.b32.xlu0 %v531, 96
        %v555 = vpop.permute.xlu0 %554
        %vm556 = vcmask 64512
        %v558 = vsel %vm556, %v524, 0
        %v561 = vsel %vm556, %v525, 0
        %v564 = vsel %vm556, %v526, 0
        %v567 = vsel %vm556, %v527, 0
        %v570 = vsel %vm556, %v528, 0
        %v573 = vsel %vm556, %v529, 0
        %v576 = vsel %vm556, %v530, 0
        %v579 = vsel %vm556, %v531, 0
        %v582 = vsel %vm556, %v541, 0
        %v585 = vsel %vm556, %v543, 0
        %v588 = vsel %vm556, %v545, 0
        %v591 = vsel %vm556, %v547, 0
        %v594 = vsel %vm556, %v549, 0
        %v597 = vsel %vm556, %v551, 0
        %v600 = vsel %vm556, %v553, 0
        %v603 = vsel %vm556, %v555, 0
        %605 = vmatprep.subr.bf16.mxu0 0
        %606 = vmatpush1.bf16.xpose.msra.mxu0 %v582
        %607 = vmatprep.subr.bf16.mxu0 0
        %608 = vmatpush1.bf16.xpose.msra.mxu0 %v585
        %609 = vmatprep.subr.bf16.mxu0 0
        %610 = vmatpush1.bf16.xpose.msra.mxu0 %v588
        %611 = vmatprep.subr.bf16.mxu0 0
        %612 = vmatpush1.bf16.xpose.msra.mxu0 %v591
        %613 = vmatprep.subr.bf16.mxu0 0
        %614 = vmatpush1.bf16.xpose.msra.mxu0 %v594
        %615 = vmatprep.subr.bf16.mxu0 0
        %616 = vmatpush1.bf16.xpose.msra.mxu0 %v597
        %617 = vmatprep.subr.bf16.mxu0 0
        %618 = vmatpush1.bf16.xpose.msra.mxu0 %v600
        %619 = vmatprep.subr.bf16.mxu0 0
        %620 = vmatpush1.bf16.xpose.msra.mxu0 %v603
        %621 = vmatprep.subr.bf16.mxu0 0
        %622 = vmatpush1.bf16.xpose.msra.mxu0 0
        %623 = vmatprep.subr.bf16.mxu0 0
        %624 = vmatpush1.bf16.xpose.msra.mxu0 0
        %625 = vmatprep.subr.bf16.mxu0 0
        %626 = vmatpush1.bf16.xpose.msra.mxu0 0
        %627 = vmatprep.subr.bf16.mxu0 0
        %628 = vmatpush1.bf16.xpose.msra.mxu0 0
        %629 = vmatprep.subr.bf16.mxu0 0
        %630 = vmatpush1.bf16.xpose.msra.mxu0 0
        %631 = vmatprep.subr.bf16.mxu0 0
        %632 = vmatpush1.bf16.xpose.msra.mxu0 0
        %633 = vmatprep.subr.bf16.mxu0 0
        %634 = vmatpush1.bf16.xpose.msra.mxu0 0
        %635 = vmatprep.subr.bf16.mxu0 0
        %636 = vmatpush1.bf16.xpose.msra.mxu0 0
        %637 = vmatprep.mubr.bf16.mxu0 0
        %638 = vmatmul.mubr.bf16.gmra.mrb[0].mxu0 %v558
        %v639 = vpop.f32.mrb[0].mxu0
        %v640 = vadd.f32 0.0, %v639
        %v641 = vpop.f32.mrb[0].mxu0
        %v642 = vpop.f32.mrb[0].mxu0
        %v643 = vadd.f32 0.0, %v642
        %v644 = vpop.f32.mrb[0].mxu0
        %645 = vmatprep.mubr.bf16.mxu0 0
        %646 = vmatmul.mubr.bf16.gmra.mrb[0].mxu0 %v561
        %v647 = vpop.f32.mrb[0].mxu0
        %v648 = vadd.f32 0.0, %v647
        %v649 = vpop.f32.mrb[0].mxu0
        %v650 = vpop.f32.mrb[0].mxu0
        %v651 = vadd.f32 0.0, %v650
        %v652 = vpop.f32.mrb[0].mxu0
        %653 = vmatprep.mubr.bf16.mxu0 0
        %654 = vmatmul.mubr.bf16.gmra.mrb[0].mxu0 %v564
        %v655 = vpop.f32.mrb[0].mxu0
        %v656 = vadd.f32 0.0, %v655
        %v657 = vpop.f32.mrb[0].mxu0
        %v658 = vpop.f32.mrb[0].mxu0
        %v659 = vadd.f32 0.0, %v658
        %v660 = vpop.f32.mrb[0].mxu0
        %661 = vmatprep.mubr.bf16.mxu0 0
        %662 = vmatmul.mubr.bf16.gmra.mrb[0].mxu0 %v567
        %v663 = vpop.f32.mrb[0].mxu0
        %v664 = vadd.f32 0.0, %v663
        %v665 = vpop.f32.mrb[0].mxu0
        %v666 = vpop.f32.mrb[0].mxu0
        %v667 = vadd.f32 0.0, %v666
        %v668 = vpop.f32.mrb[0].mxu0
        %669 = vmatprep.mubr.bf16.mxu0 0
        %670 = vmatmul.mubr.bf16.gmra.mrb[0].mxu0 %v570
        %v671 = vpop.f32.mrb[0].mxu0
        %v672 = vadd.f32 0.0, %v671
        %v673 = vpop.f32.mrb[0].mxu0
        %v674 = vpop.f32.mrb[0].mxu0
        %v675 = vadd.f32 0.0, %v674
        %v676 = vpop.f32.mrb[0].mxu0
        %677 = vmatprep.mubr.bf16.mxu0 0
        %678 = vmatmul.mubr.bf16.gmra.mrb[0].mxu0 %v573
        %v679 = vpop.f32.mrb[0].mxu0
        %v680 = vadd.f32 0.0, %v679
        %v681 = vpop.f32.mrb[0].mxu0
        %v682 = vpop.f32.mrb[0].mxu0
        %v683 = vadd.f32 0.0, %v682
        %v684 = vpop.f32.mrb[0].mxu0
        %685 = vmatprep.mubr.bf16.mxu0 0
        %686 = vmatmul.mubr.bf16.gmra.mrb[0].mxu0 %v576
        %v687 = vpop.f32.mrb[0].mxu0
        %v688 = vadd.f32 0.0, %v687
        %v689 = vpop.f32.mrb[0].mxu0
        %v690 = vpop.f32.mrb[0].mxu0
        %v691 = vadd.f32 0.0, %v690
        %v692 = vpop.f32.mrb[0].mxu0
        %693 = vmatprep.mubr.bf16.mxu0 0
        %694 = vmatmul.mubr.bf16.gmra.mrb[0].mxu0 %v579
        %v695 = vpop.f32.mrb[0].mxu0
        %v696 = vadd.f32 0.0, %v695
        %v697 = vpop.f32.mrb[0].mxu0
        %v698 = vpop.f32.mrb[0].mxu0
        %v699 = vadd.f32 0.0, %v698
        %v700 = vpop.f32.mrb[0].mxu0
        %701 = vdwg.mxu0
        %v702 = vmul.f32 %v640, 0.35355338
        %v703 = vmul.f32 %v643, 0.35355338
        %v704 = vmul.f32 %v648, 0.35355338
        %v705 = vmul.f32 %v651, 0.35355338
        %v706 = vmul.f32 %v656, 0.35355338
        %v707 = vmul.f32 %v659, 0.35355338
        %v708 = vmul.f32 %v664, 0.35355338
        %v709 = vmul.f32 %v667, 0.35355338
        %v710 = vmul.f32 %v672, 0.35355338
        %v711 = vmul.f32 %v675, 0.35355338
        %v712 = vmul.f32 %v680, 0.35355338
        %v713 = vmul.f32 %v683, 0.35355338
        %v714 = vmul.f32 %v688, 0.35355338
        %v715 = vmul.f32 %v691, 0.35355338
        %v716 = vmul.f32 %v696, 0.35355338
        %v717 = vmul.f32 %v699, 0.35355338
        %v718 = vld [vmem:[%s2] sm:$0xff]
        %v719 = vld [vmem:[%s2 + $0x8] sm:$0xff]
        %v720 = vld [vmem:[%s2 + $0x10] sm:$0xff]
        %v721 = vld [vmem:[%s2 + $0x18] sm:$0xff]
        %v722 = vld [vmem:[%s2 + $0x20] sm:$0xff]
        %v723 = vld [vmem:[%s2 + $0x28] sm:$0xff]
        %v724 = vld [vmem:[%s2 + $0x30] sm:$0xff]
        %v725 = vld [vmem:[%s2 + $0x38] sm:$0xff]
        %v726 = vld [vmem:[%s2 + $0x40] sm:$0xff]
        %v727 = vld [vmem:[%s2 + $0x48] sm:$0xff]
        %v728 = vld [vmem:[%s2 + $0x50] sm:$0xff]
        %v729 = vld [vmem:[%s2 + $0x58] sm:$0xff]
        %v730 = vld [vmem:[%s2 + $0x60] sm:$0xff]
        %v731 = vld [vmem:[%s2 + $0x68] sm:$0xff]
        %v732 = vld [vmem:[%s2 + $0x70] sm:$0xff]
        %v733 = vld [vmem:[%s2 + $0x78] sm:$0xff]
        %v734 = vadd.f32 %v702, %v718
        %v735 = vadd.f32 %v703, %v719
        %v736 = vadd.f32 %v704, %v720
        %v737 = vadd.f32 %v705, %v721
        %v738 = vadd.f32 %v706, %v722
        %v739 = vadd.f32 %v707, %v723
        %v740 = vadd.f32 %v708, %v724
        %v741 = vadd.f32 %v709, %v725
        %v742 = vadd.f32 %v710, %v726
        %v743 = vadd.f32 %v711, %v727
        %v744 = vadd.f32 %v712, %v728
        %v745 = vadd.f32 %v713, %v729
        %v746 = vadd.f32 %v714, %v730
        %v747 = vadd.f32 %v715, %v731
        %v748 = vadd.f32 %v716, %v732
        %v749 = vadd.f32 %v717, %v733
        %750 = vmax.xlane.f32.xlu0 %v734
        %v751 = vpop.xlane.xlu0 %750
        %752 = vmax.xlane.f32.xlu0 %v735
        %v753 = vpop.xlane.xlu0 %752
        %754 = vmax.xlane.f32.xlu0 %v736
        %v755 = vpop.xlane.xlu0 %754
        %756 = vmax.xlane.f32.xlu0 %v737
        %v757 = vpop.xlane.xlu0 %756
        %758 = vmax.xlane.f32.xlu0 %v738
        %v759 = vpop.xlane.xlu0 %758
        %760 = vmax.xlane.f32.xlu0 %v739
        %v761 = vpop.xlane.xlu0 %760
        %762 = vmax.xlane.f32.xlu0 %v740
        %v763 = vpop.xlane.xlu0 %762
        %764 = vmax.xlane.f32.xlu0 %v741
        %v765 = vpop.xlane.xlu0 %764
        %766 = vmax.xlane.f32.xlu0 %v742
        %v767 = vpop.xlane.xlu0 %766
        %768 = vmax.xlane.f32.xlu0 %v743
        %v769 = vpop.xlane.xlu0 %768
        %770 = vmax.xlane.f32.xlu0 %v744
        %v771 = vpop.xlane.xlu0 %770
        %772 = vmax.xlane.f32.xlu0 %v745
        %v773 = vpop.xlane.xlu0 %772
        %774 = vmax.xlane.f32.xlu0 %v746
        %v775 = vpop.xlane.xlu0 %774
        %776 = vmax.xlane.f32.xlu0 %v747
        %v777 = vpop.xlane.xlu0 %776
        %778 = vmax.xlane.f32.xlu0 %v748
        %v779 = vpop.xlane.xlu0 %778
        %780 = vmax.xlane.f32.xlu0 %v749
        %v781 = vpop.xlane.xlu0 %780
        %v782 = vsub.f32 %v734, %v751
        %v783 = vsub.f32 %v735, %v753
        %v784 = vsub.f32 %v736, %v755
        %v785 = vsub.f32 %v737, %v757
        %v786 = vsub.f32 %v738, %v759
        %v787 = vsub.f32 %v739, %v761
        %v788 = vsub.f32 %v740, %v763
        %v789 = vsub.f32 %v741, %v765
        %v790 = vsub.f32 %v742, %v767
        %v791 = vsub.f32 %v743, %v769
        %v792 = vsub.f32 %v744, %v771
        %v793 = vsub.f32 %v745, %v773
        %v794 = vsub.f32 %v746, %v775
        %v795 = vsub.f32 %v747, %v777
        %v796 = vsub.f32 %v748, %v779
        %v797 = vsub.f32 %v749, %v781
        %v798 = vmul.f32 %v782, 1.442695
        %v799 = vpow.pop %v798
        %v800 = vmul.f32 %v783, 1.442695
        %v801 = vpow.pop %v800
        %v802 = vmul.f32 %v784, 1.442695
        %v803 = vpow.pop %v802
        %v804 = vmul.f32 %v785, 1.442695
        %v805 = vpow.pop %v804
        %v806 = vmul.f32 %v786, 1.442695
        %v807 = vpow.pop %v806
        %v808 = vmul.f32 %v787, 1.442695
        %v809 = vpow.pop %v808
        %v810 = vmul.f32 %v788, 1.442695
        %v811 = vpow.pop %v810
        %v812 = vmul.f32 %v789, 1.442695
        %v813 = vpow.pop %v812
        %v814 = vmul.f32 %v790, 1.442695
        %v815 = vpow.pop %v814
        %v816 = vmul.f32 %v791, 1.442695
        %v817 = vpow.pop %v816
        %v818 = vmul.f32 %v792, 1.442695
        %v819 = vpow.pop %v818
        %v820 = vmul.f32 %v793, 1.442695
        %v821 = vpow.pop %v820
        %v822 = vmul.f32 %v794, 1.442695
        %v823 = vpow.pop %v822
        %v824 = vmul.f32 %v795, 1.442695
        %v825 = vpow.pop %v824
        %v826 = vmul.f32 %v796, 1.442695
        %v827 = vpow.pop %v826
        %v828 = vmul.f32 %v797, 1.442695
        %v829 = vpow.pop %v828
        %830 = vadd.xlane.f32.xlu0 %v799
        %v831 = vpop.xlane.xlu0 %830
        %832 = vadd.xlane.f32.xlu0 %v801
        %v833 = vpop.xlane.xlu0 %832
        %834 = vadd.xlane.f32.xlu0 %v803
        %v835 = vpop.xlane.xlu0 %834
        %836 = vadd.xlane.f32.xlu0 %v805
        %v837 = vpop.xlane.xlu0 %836
        %838 = vadd.xlane.f32.xlu0 %v807
        %v839 = vpop.xlane.xlu0 %838
        %840 = vadd.xlane.f32.xlu0 %v809
        %v841 = vpop.xlane.xlu0 %840
        %842 = vadd.xlane.f32.xlu0 %v811
        %v843 = vpop.xlane.xlu0 %842
        %844 = vadd.xlane.f32.xlu0 %v813
        %v845 = vpop.xlane.xlu0 %844
        %846 = vadd.xlane.f32.xlu0 %v815
        %v847 = vpop.xlane.xlu0 %846
        %848 = vadd.xlane.f32.xlu0 %v817
        %v849 = vpop.xlane.xlu0 %848
        %850 = vadd.xlane.f32.xlu0 %v819
        %v851 = vpop.xlane.xlu0 %850
        %852 = vadd.xlane.f32.xlu0 %v821
        %v853 = vpop.xlane.xlu0 %852
        %854 = vadd.xlane.f32.xlu0 %v823
        %v855 = vpop.xlane.xlu0 %854
        %856 = vadd.xlane.f32.xlu0 %v825
        %v857 = vpop.xlane.xlu0 %856
        %858 = vadd.xlane.f32.xlu0 %v827
        %v859 = vpop.xlane.xlu0 %858
        %860 = vadd.xlane.f32.xlu0 %v829
        %v861 = vpop.xlane.xlu0 %860
        %v862 = vrcp.pop %v831
        %v863 = vrcp.pop %v833
        %v864 = vrcp.pop %v835
        %v865 = vrcp.pop %v837
        %v866 = vrcp.pop %v839
        %v867 = vrcp.pop %v841
        %v868 = vrcp.pop %v843
        %v869 = vrcp.pop %v845
        %v870 = vrcp.pop %v847
        %v871 = vrcp.pop %v849
        %v872 = vrcp.pop %v851
        %v873 = vrcp.pop %v853
        %v874 = vrcp.pop %v855
        %v875 = vrcp.pop %v857
        %v876 = vrcp.pop %v859
        %v877 = vrcp.pop %v861
        %v878 = vmul.f32 %v799, %v862
        %v879 = vmul.f32 %v801, %v863
        %v880 = vmul.f32 %v803, %v864
        %v881 = vmul.f32 %v805, %v865
        %v882 = vmul.f32 %v807, %v866
        %v883 = vmul.f32 %v809, %v867
        %v884 = vmul.f32 %v811, %v868
        %v885 = vmul.f32 %v813, %v869
        %v886 = vmul.f32 %v815, %v870
        %v887 = vmul.f32 %v817, %v871
        %v888 = vmul.f32 %v819, %v872
        %v889 = vmul.f32 %v821, %v873
        %v890 = vmul.f32 %v823, %v874
        %v891 = vmul.f32 %v825, %v875
        %v892 = vmul.f32 %v827, %v876
        %v893 = vmul.f32 %v829, %v877
        %v894 = vpack.c.bf16 %v879, %v878
        %v895 = vpack.c.bf16 %v881, %v880
        %v896 = vpack.c.bf16 %v883, %v882
        %v897 = vpack.c.bf16 %v885, %v884
        %v898 = vpack.c.bf16 %v887, %v886
        %v899 = vpack.c.bf16 %v889, %v888
        %v900 = vpack.c.bf16 %v891, %v890
        %v901 = vpack.c.bf16 %v893, %v892
        %902 = vrot.lane.b32.xlu0 %v524, 64
        %v903 = vpop.permute.xlu0 %902
        %904 = vrot.lane.b32.xlu0 %v525, 64
        %v905 = vpop.permute.xlu0 %904
        %906 = vrot.lane.b32.xlu0 %v526, 64
        %v907 = vpop.permute.xlu0 %906
        %908 = vrot.lane.b32.xlu0 %v527, 64
        %v909 = vpop.permute.xlu0 %908
        %910 = vrot.lane.b32.xlu0 %v528, 64
        %v911 = vpop.permute.xlu0 %910
        %912 = vrot.lane.b32.xlu0 %v529, 64
        %v913 = vpop.permute.xlu0 %912
        %914 = vrot.lane.b32.xlu0 %v530, 64
        %v915 = vpop.permute.xlu0 %914
        %916 = vrot.lane.b32.xlu0 %v531, 64
        %v917 = vpop.permute.xlu0 %916
        %926 = vmatprep.subr.bf16.mxu0 0
        %927 = vmatpush1.bf16.msra.mxu0 %v903
        %928 = vmatprep.subr.bf16.mxu0 0
        %929 = vmatpush1.bf16.msra.mxu0 %v905
        %930 = vmatprep.subr.bf16.mxu0 0
        %931 = vmatpush1.bf16.msra.mxu0 %v907
        %932 = vmatprep.subr.bf16.mxu0 0
        %933 = vmatpush1.bf16.msra.mxu0 %v909
        %934 = vmatprep.subr.bf16.mxu0 0
        %935 = vmatpush1.bf16.msra.mxu0 %v911
        %936 = vmatprep.subr.bf16.mxu0 0
        %937 = vmatpush1.bf16.msra.mxu0 %v913
        %938 = vmatprep.subr.bf16.mxu0 0
        %939 = vmatpush1.bf16.msra.mxu0 %v915
        %940 = vmatprep.subr.bf16.mxu0 0
        %941 = vmatpush1.bf16.msra.mxu0 %v917
        %942 = vmatprep.subr.bf16.mxu0 0
        %943 = vmatpush1.bf16.msra.mxu0 0
        %944 = vmatprep.subr.bf16.mxu0 0
        %945 = vmatpush1.bf16.msra.mxu0 0
        %946 = vmatprep.subr.bf16.mxu0 0
        %947 = vmatpush1.bf16.msra.mxu0 0
        %948 = vmatprep.subr.bf16.mxu0 0
        %949 = vmatpush1.bf16.msra.mxu0 0
        %950 = vmatprep.subr.bf16.mxu0 0
        %951 = vmatpush1.bf16.msra.mxu0 0
        %952 = vmatprep.subr.bf16.mxu0 0
        %953 = vmatpush1.bf16.msra.mxu0 0
        %954 = vmatprep.subr.bf16.mxu0 0
        %955 = vmatpush1.bf16.msra.mxu0 0
        %956 = vmatprep.subr.bf16.mxu0 0
        %957 = vmatpush1.bf16.msra.mxu0 0
        %958 = vmatprep.mubr.bf16.mxu0 0
        %959 = vmatmul.mubr.bf16.gmra.mrb[0].mxu0 %v894
        %v960 = vpop.f32.mrb[0].mxu0
        %v961 = vadd.f32 0.0, %v960
        %v962 = vpop.f32.mrb[0].mxu0
        %v963 = vpop.f32.mrb[0].mxu0
        %v964 = vadd.f32 0.0, %v963
        %v965 = vpop.f32.mrb[0].mxu0
        %966 = vmatprep.mubr.bf16.mxu0 0
        %967 = vmatmul.mubr.bf16.gmra.mrb[0].mxu0 %v895
        %v968 = vpop.f32.mrb[0].mxu0
        %v969 = vadd.f32 0.0, %v968
        %v970 = vpop.f32.mrb[0].mxu0
        %v971 = vpop.f32.mrb[0].mxu0
        %v972 = vadd.f32 0.0, %v971
        %v973 = vpop.f32.mrb[0].mxu0
        %974 = vmatprep.mubr.bf16.mxu0 0
        %975 = vmatmul.mubr.bf16.gmra.mrb[0].mxu0 %v896
        %v976 = vpop.f32.mrb[0].mxu0
        %v977 = vadd.f32 0.0, %v976
        %v978 = vpop.f32.mrb[0].mxu0
        %v979 = vpop.f32.mrb[0].mxu0
        %v980 = vadd.f32 0.0, %v979
        %v981 = vpop.f32.mrb[0].mxu0
        %982 = vmatprep.mubr.bf16.mxu0 0
        %983 = vmatmul.mubr.bf16.gmra.mrb[0].mxu0 %v897
        %v984 = vpop.f32.mrb[0].mxu0
        %v985 = vadd.f32 0.0, %v984
        %v986 = vpop.f32.mrb[0].mxu0
        %v987 = vpop.f32.mrb[0].mxu0
        %v988 = vadd.f32 0.0, %v987
        %v989 = vpop.f32.mrb[0].mxu0
        %990 = vmatprep.mubr.bf16.mxu0 0
        %991 = vmatmul.mubr.bf16.gmra.mrb[0].mxu0 %v898
        %v992 = vpop.f32.mrb[0].mxu0
        %v993 = vadd.f32 0.0, %v992
        %v994 = vpop.f32.mrb[0].mxu0
        %v995 = vpop.f32.mrb[0].mxu0
        %v996 = vadd.f32 0.0, %v995
        %v997 = vpop.f32.mrb[0].mxu0
        %998 = vmatprep.mubr.bf16.mxu0 0
        %999 = vmatmul.mubr.bf16.gmra.mrb[0].mxu0 %v899
        %v1000 = vpop.f32.mrb[0].mxu0
        %v1001 = vadd.f32 0.0, %v1000
        %v1002 = vpop.f32.mrb[0].mxu0
        %v1003 = vpop.f32.mrb[0].mxu0
        %v1004 = vadd.f32 0.0, %v1003
        %v1005 = vpop.f32.mrb[0].mxu0
        %1006 = vmatprep.mubr.bf16.mxu0 0
        %1007 = vmatmul.mubr.bf16.gmra.mrb[0].mxu0 %v900
        %v1008 = vpop.f32.mrb[0].mxu0
        %v1009 = vadd.f32 0.0, %v1008
        %v1010 = vpop.f32.mrb[0].mxu0
        %v1011 = vpop.f32.mrb[0].mxu0
        %v1012 = vadd.f32 0.0, %v1011
        %v1013 = vpop.f32.mrb[0].mxu0
        %1014 = vmatprep.mubr.bf16.mxu0 0
        %1015 = vmatmul.mubr.bf16.gmra.mrb[0].mxu0 %v901
        %v1016 = vpop.f32.mrb[0].mxu0
        %v1017 = vadd.f32 0.0, %v1016
        %v1018 = vpop.f32.mrb[0].mxu0
        %v1019 = vpop.f32.mrb[0].mxu0
        %v1020 = vadd.f32 0.0, %v1019
        %v1021 = vpop.f32.mrb[0].mxu0
        %1022 = vdwg.mxu0
        %1023 = vrot.lane.b32.xlu0 %v524, 120
        %v1024 = vpop.permute.xlu0 %1023
        %1025 = vrot.lane.b32.xlu0 %v525, 120
        %v1026 = vpop.permute.xlu0 %1025
        %1027 = vrot.lane.b32.xlu0 %v526, 120
        %v1028 = vpop.permute.xlu0 %1027
        %1029 = vrot.lane.b32.xlu0 %v527, 120
        %v1030 = vpop.permute.xlu0 %1029
        %1031 = vrot.lane.b32.xlu0 %v528, 120
        %v1032 = vpop.permute.xlu0 %1031
        %1033 = vrot.lane.b32.xlu0 %v529, 120
        %v1034 = vpop.permute.xlu0 %1033
        %1035 = vrot.lane.b32.xlu0 %v530, 120
        %v1036 = vpop.permute.xlu0 %1035
        %1037 = vrot.lane.b32.xlu0 %v531, 120
        %v1038 = vpop.permute.xlu0 %1037
        %1039 = vrot.lane.b32.xlu0 %v524, 88
        %v1040 = vpop.permute.xlu0 %1039
        %1041 = vrot.lane.b32.xlu0 %v525, 88
        %v1042 = vpop.permute.xlu0 %1041
        %1043 = vrot.lane.b32.xlu0 %v526, 88
        %v1044 = vpop.permute.xlu0 %1043
        %1045 = vrot.lane.b32.xlu0 %v527, 88
        %v1046 = vpop.permute.xlu0 %1045
        %1047 = vrot.lane.b32.xlu0 %v528, 88
        %v1048 = vpop.permute.xlu0 %1047
        %1049 = vrot.lane.b32.xlu0 %v529, 88
        %v1050 = vpop.permute.xlu0 %1049
        %1051 = vrot.lane.b32.xlu0 %v530, 88
        %v1052 = vpop.permute.xlu0 %1051
        %1053 = vrot.lane.b32.xlu0 %v531, 88
        %v1054 = vpop.permute.xlu0 %1053
        %v1056 = vsel %vm556, %v1024, 0
        %v1059 = vsel %vm556, %v1026, 0
        %v1062 = vsel %vm556, %v1028, 0
        %v1065 = vsel %vm556, %v1030, 0
        %v1068 = vsel %vm556, %v1032, 0
        %v1071 = vsel %vm556, %v1034, 0
        %v1074 = vsel %vm556, %v1036, 0
        %v1077 = vsel %vm556, %v1038, 0
        %v1080 = vsel %vm556, %v1040, 0
        %v1083 = vsel %vm556, %v1042, 0
        %v1086 = vsel %vm556, %v1044, 0
        %v1089 = vsel %vm556, %v1046, 0
        %v1092 = vsel %vm556, %v1048, 0
        %v1095 = vsel %vm556, %v1050, 0
        %v1098 = vsel %vm556, %v1052, 0
        %v1101 = vsel %vm556, %v1054, 0
        %1103 = vmatprep.subr.bf16.mxu0 0
        %1104 = vmatpush1.bf16.xpose.msra.mxu0 %v1080
        %1105 = vmatprep.subr.bf16.mxu0 0
        %1106 = vmatpush1.bf16.xpose.msra.mxu0 %v1083
        %1107 = vmatprep.subr.bf16.mxu0 0
        %1108 = vmatpush1.bf16.xpose.msra.mxu0 %v1086
        %1109 = vmatprep.subr.bf16.mxu0 0
        %1110 = vmatpush1.bf16.xpose.msra.mxu0 %v1089
        %1111 = vmatprep.subr.bf16.mxu0 0
        %1112 = vmatpush1.bf16.xpose.msra.mxu0 %v1092
        %1113 = vmatprep.subr.bf16.mxu0 0
        %1114 = vmatpush1.bf16.xpose.msra.mxu0 %v1095
        %1115 = vmatprep.subr.bf16.mxu0 0
        %1116 = vmatpush1.bf16.xpose.msra.mxu0 %v1098
        %1117 = vmatprep.subr.bf16.mxu0 0
        %1118 = vmatpush1.bf16.xpose.msra.mxu0 %v1101
        %1119 = vmatprep.subr.bf16.mxu0 0
        %1120 = vmatpush1.bf16.xpose.msra.mxu0 0
        %1121 = vmatprep.subr.bf16.mxu0 0
        %1122 = vmatpush1.bf16.xpose.msra.mxu0 0
        %1123 = vmatprep.subr.bf16.mxu0 0
        %1124 = vmatpush1.bf16.xpose.msra.mxu0 0
        %1125 = vmatprep.subr.bf16.mxu0 0
        %1126 = vmatpush1.bf16.xpose.msra.mxu0 0
        %1127 = vmatprep.subr.bf16.mxu0 0
        %1128 = vmatpush1.bf16.xpose.msra.mxu0 0
        %1129 = vmatprep.subr.bf16.mxu0 0
        %1130 = vmatpush1.bf16.xpose.msra.mxu0 0
        %1131 = vmatprep.subr.bf16.mxu0 0
        %1132 = vmatpush1.bf16.xpose.msra.mxu0 0
        %1133 = vmatprep.subr.bf16.mxu0 0
        %1134 = vmatpush1.bf16.xpose.msra.mxu0 0
        %1135 = vmatprep.mubr.bf16.mxu0 0
        %1136 = vmatmul.mubr.bf16.gmra.mrb[0].mxu0 %v1056
        %v1137 = vpop.f32.mrb[0].mxu0
        %v1138 = vadd.f32 0.0, %v1137
        %v1139 = vpop.f32.mrb[0].mxu0
        %v1140 = vpop.f32.mrb[0].mxu0
        %v1141 = vadd.f32 0.0, %v1140
        %v1142 = vpop.f32.mrb[0].mxu0
        %1143 = vmatprep.mubr.bf16.mxu0 0
        %1144 = vmatmul.mubr.bf16.gmra.mrb[0].mxu0 %v1059
        %v1145 = vpop.f32.mrb[0].mxu0
        %v1146 = vadd.f32 0.0, %v1145
        %v1147 = vpop.f32.mrb[0].mxu0
        %v1148 = vpop.f32.mrb[0].mxu0
        %v1149 = vadd.f32 0.0, %v1148
        %v1150 = vpop.f32.mrb[0].mxu0
        %1151 = vmatprep.mubr.bf16.mxu0 0
        %1152 = vmatmul.mubr.bf16.gmra.mrb[0].mxu0 %v1062
        %v1153 = vpop.f32.mrb[0].mxu0
        %v1154 = vadd.f32 0.0, %v1153
        %v1155 = vpop.f32.mrb[0].mxu0
        %v1156 = vpop.f32.mrb[0].mxu0
        %v1157 = vadd.f32 0.0, %v1156
        %v1158 = vpop.f32.mrb[0].mxu0
        %1159 = vmatprep.mubr.bf16.mxu0 0
        %1160 = vmatmul.mubr.bf16.gmra.mrb[0].mxu0 %v1065
        %v1161 = vpop.f32.mrb[0].mxu0
        %v1162 = vadd.f32 0.0, %v1161
        %v1163 = vpop.f32.mrb[0].mxu0
        %v1164 = vpop.f32.mrb[0].mxu0
        %v1165 = vadd.f32 0.0, %v1164
        %v1166 = vpop.f32.mrb[0].mxu0
        %1167 = vmatprep.mubr.bf16.mxu0 0
        %1168 = vmatmul.mubr.bf16.gmra.mrb[0].mxu0 %v1068
        %v1169 = vpop.f32.mrb[0].mxu0
        %v1170 = vadd.f32 0.0, %v1169
        %v1171 = vpop.f32.mrb[0].mxu0
        %v1172 = vpop.f32.mrb[0].mxu0
        %v1173 = vadd.f32 0.0, %v1172
        %v1174 = vpop.f32.mrb[0].mxu0
        %1175 = vmatprep.mubr.bf16.mxu0 0
        %1176 = vmatmul.mubr.bf16.gmra.mrb[0].mxu0 %v1071
        %v1177 = vpop.f32.mrb[0].mxu0
        %v1178 = vadd.f32 0.0, %v1177
        %v1179 = vpop.f32.mrb[0].mxu0
        %v1180 = vpop.f32.mrb[0].mxu0
        %v1181 = vadd.f32 0.0, %v1180
        %v1182 = vpop.f32.mrb[0].mxu0
        %1183 = vmatprep.mubr.bf16.mxu0 0
        %1184 = vmatmul.mubr.bf16.gmra.mrb[0].mxu0 %v1074
        %v1185 = vpop.f32.mrb[0].mxu0
        %v1186 = vadd.f32 0.0, %v1185
        %v1187 = vpop.f32.mrb[0].mxu0
        %v1188 = vpop.f32.mrb[0].mxu0
        %v1189 = vadd.f32 0.0, %v1188
        %v1190 = vpop.f32.mrb[0].mxu0
        %1191 = vmatprep.mubr.bf16.mxu0 0
        %1192 = vmatmul.mubr.bf16.gmra.mrb[0].mxu0 %v1077
        %v1193 = vpop.f32.mrb[0].mxu0
        %v1194 = vadd.f32 0.0, %v1193
        %v1195 = vpop.f32.mrb[0].mxu0
        %v1196 = vpop.f32.mrb[0].mxu0
        %v1197 = vadd.f32 0.0, %v1196
        %v1198 = vpop.f32.mrb[0].mxu0
        %1199 = vdwg.mxu0
        %v1200 = vmul.f32 %v1138, 0.35355338
        %v1201 = vmul.f32 %v1141, 0.35355338
        %v1202 = vmul.f32 %v1146, 0.35355338
        %v1203 = vmul.f32 %v1149, 0.35355338
        %v1204 = vmul.f32 %v1154, 0.35355338
        %v1205 = vmul.f32 %v1157, 0.35355338
        %v1206 = vmul.f32 %v1162, 0.35355338
        %v1207 = vmul.f32 %v1165, 0.35355338
        %v1208 = vmul.f32 %v1170, 0.35355338
        %v1209 = vmul.f32 %v1173, 0.35355338
        %v1210 = vmul.f32 %v1178, 0.35355338
        %v1211 = vmul.f32 %v1181, 0.35355338
        %v1212 = vmul.f32 %v1186, 0.35355338
        %v1213 = vmul.f32 %v1189, 0.35355338
        %v1214 = vmul.f32 %v1194, 0.35355338
        %v1215 = vmul.f32 %v1197, 0.35355338
        %v1216 = vadd.f32 %v1200, %v718
        %v1217 = vadd.f32 %v1201, %v719
        %v1218 = vadd.f32 %v1202, %v720
        %v1219 = vadd.f32 %v1203, %v721
        %v1220 = vadd.f32 %v1204, %v722
        %v1221 = vadd.f32 %v1205, %v723
        %v1222 = vadd.f32 %v1206, %v724
        %v1223 = vadd.f32 %v1207, %v725
        %v1224 = vadd.f32 %v1208, %v726
        %v1225 = vadd.f32 %v1209, %v727
        %v1226 = vadd.f32 %v1210, %v728
        %v1227 = vadd.f32 %v1211, %v729
        %v1228 = vadd.f32 %v1212, %v730
        %v1229 = vadd.f32 %v1213, %v731
        %v1230 = vadd.f32 %v1214, %v732
        %v1231 = vadd.f32 %v1215, %v733
        %1232 = vmax.xlane.f32.xlu0 %v1216
        %v1233 = vpop.xlane.xlu0 %1232
        %1234 = vmax.xlane.f32.xlu0 %v1217
        %v1235 = vpop.xlane.xlu0 %1234
        %1236 = vmax.xlane.f32.xlu0 %v1218
        %v1237 = vpop.xlane.xlu0 %1236
        %1238 = vmax.xlane.f32.xlu0 %v1219
        %v1239 = vpop.xlane.xlu0 %1238
        %1240 = vmax.xlane.f32.xlu0 %v1220
        %v1241 = vpop.xlane.xlu0 %1240
        %1242 = vmax.xlane.f32.xlu0 %v1221
        %v1243 = vpop.xlane.xlu0 %1242
        %1244 = vmax.xlane.f32.xlu0 %v1222
        %v1245 = vpop.xlane.xlu0 %1244
        %1246 = vmax.xlane.f32.xlu0 %v1223
        %v1247 = vpop.xlane.xlu0 %1246
        %1248 = vmax.xlane.f32.xlu0 %v1224
        %v1249 = vpop.xlane.xlu0 %1248
        %1250 = vmax.xlane.f32.xlu0 %v1225
        %v1251 = vpop.xlane.xlu0 %1250
        %1252 = vmax.xlane.f32.xlu0 %v1226
        %v1253 = vpop.xlane.xlu0 %1252
        %1254 = vmax.xlane.f32.xlu0 %v1227
        %v1255 = vpop.xlane.xlu0 %1254
        %1256 = vmax.xlane.f32.xlu0 %v1228
        %v1257 = vpop.xlane.xlu0 %1256
        %1258 = vmax.xlane.f32.xlu0 %v1229
        %v1259 = vpop.xlane.xlu0 %1258
        %1260 = vmax.xlane.f32.xlu0 %v1230
        %v1261 = vpop.xlane.xlu0 %1260
        %1262 = vmax.xlane.f32.xlu0 %v1231
        %v1263 = vpop.xlane.xlu0 %1262
        %v1264 = vsub.f32 %v1216, %v1233
        %v1265 = vsub.f32 %v1217, %v1235
        %v1266 = vsub.f32 %v1218, %v1237
        %v1267 = vsub.f32 %v1219, %v1239
        %v1268 = vsub.f32 %v1220, %v1241
        %v1269 = vsub.f32 %v1221, %v1243
        %v1270 = vsub.f32 %v1222, %v1245
        %v1271 = vsub.f32 %v1223, %v1247
        %v1272 = vsub.f32 %v1224, %v1249
        %v1273 = vsub.f32 %v1225, %v1251
        %v1274 = vsub.f32 %v1226, %v1253
        %v1275 = vsub.f32 %v1227, %v1255
        %v1276 = vsub.f32 %v1228, %v1257
        %v1277 = vsub.f32 %v1229, %v1259
        %v1278 = vsub.f32 %v1230, %v1261
        %v1279 = vsub.f32 %v1231, %v1263
        %v1280 = vmul.f32 %v1264, 1.442695
        %v1281 = vpow.pop %v1280
        %v1282 = vmul.f32 %v1265, 1.442695
        %v1283 = vpow.pop %v1282
        %v1284 = vmul.f32 %v1266, 1.442695
        %v1285 = vpow.pop %v1284
        %v1286 = vmul.f32 %v1267, 1.442695
        %v1287 = vpow.pop %v1286
        %v1288 = vmul.f32 %v1268, 1.442695
        %v1289 = vpow.pop %v1288
        %v1290 = vmul.f32 %v1269, 1.442695
        %v1291 = vpow.pop %v1290
        %v1292 = vmul.f32 %v1270, 1.442695
        %v1293 = vpow.pop %v1292
        %v1294 = vmul.f32 %v1271, 1.442695
        %v1295 = vpow.pop %v1294
        %v1296 = vmul.f32 %v1272, 1.442695
        %v1297 = vpow.pop %v1296
        %v1298 = vmul.f32 %v1273, 1.442695
        %v1299 = vpow.pop %v1298
        %v1300 = vmul.f32 %v1274, 1.442695
        %v1301 = vpow.pop %v1300
        %v1302 = vmul.f32 %v1275, 1.442695
        %v1303 = vpow.pop %v1302
        %v1304 = vmul.f32 %v1276, 1.442695
        %v1305 = vpow.pop %v1304
        %v1306 = vmul.f32 %v1277, 1.442695
        %v1307 = vpow.pop %v1306
        %v1308 = vmul.f32 %v1278, 1.442695
        %v1309 = vpow.pop %v1308
        %v1310 = vmul.f32 %v1279, 1.442695
        %v1311 = vpow.pop %v1310
        %1312 = vadd.xlane.f32.xlu0 %v1281
        %v1313 = vpop.xlane.xlu0 %1312
        %1314 = vadd.xlane.f32.xlu0 %v1283
        %v1315 = vpop.xlane.xlu0 %1314
        %1316 = vadd.xlane.f32.xlu0 %v1285
        %v1317 = vpop.xlane.xlu0 %1316
        %1318 = vadd.xlane.f32.xlu0 %v1287
        %v1319 = vpop.xlane.xlu0 %1318
        %1320 = vadd.xlane.f32.xlu0 %v1289
        %v1321 = vpop.xlane.xlu0 %1320
        %1322 = vadd.xlane.f32.xlu0 %v1291
        %v1323 = vpop.xlane.xlu0 %1322
        %1324 = vadd.xlane.f32.xlu0 %v1293
        %v1325 = vpop.xlane.xlu0 %1324
        %1326 = vadd.xlane.f32.xlu0 %v1295
        %v1327 = vpop.xlane.xlu0 %1326
        %1328 = vadd.xlane.f32.xlu0 %v1297
        %v1329 = vpop.xlane.xlu0 %1328
        %1330 = vadd.xlane.f32.xlu0 %v1299
        %v1331 = vpop.xlane.xlu0 %1330
        %1332 = vadd.xlane.f32.xlu0 %v1301
        %v1333 = vpop.xlane.xlu0 %1332
        %1334 = vadd.xlane.f32.xlu0 %v1303
        %v1335 = vpop.xlane.xlu0 %1334
        %1336 = vadd.xlane.f32.xlu0 %v1305
        %v1337 = vpop.xlane.xlu0 %1336
        %1338 = vadd.xlane.f32.xlu0 %v1307
        %v1339 = vpop.xlane.xlu0 %1338
        %1340 = vadd.xlane.f32.xlu0 %v1309
        %v1341 = vpop.xlane.xlu0 %1340
        %1342 = vadd.xlane.f32.xlu0 %v1311
        %v1343 = vpop.xlane.xlu0 %1342
        %v1344 = vrcp.pop %v1313
        %v1345 = vrcp.pop %v1315
        %v1346 = vrcp.pop %v1317
        %v1347 = vrcp.pop %v1319
        %v1348 = vrcp.pop %v1321
        %v1349 = vrcp.pop %v1323
        %v1350 = vrcp.pop %v1325
        %v1351 = vrcp.pop %v1327
        %v1352 = vrcp.pop %v1329
        %v1353 = vrcp.pop %v1331
        %v1354 = vrcp.pop %v1333
        %v1355 = vrcp.pop %v1335
        %v1356 = vrcp.pop %v1337
        %v1357 = vrcp.pop %v1339
        %v1358 = vrcp.pop %v1341
        %v1359 = vrcp.pop %v1343
        %v1360 = vmul.f32 %v1281, %v1344
        %v1361 = vmul.f32 %v1283, %v1345
        %v1362 = vmul.f32 %v1285, %v1346
        %v1363 = vmul.f32 %v1287, %v1347
        %v1364 = vmul.f32 %v1289, %v1348
        %v1365 = vmul.f32 %v1291, %v1349
        %v1366 = vmul.f32 %v1293, %v1350
        %v1367 = vmul.f32 %v1295, %v1351
        %v1368 = vmul.f32 %v1297, %v1352
        %v1369 = vmul.f32 %v1299, %v1353
        %v1370 = vmul.f32 %v1301, %v1354
        %v1371 = vmul.f32 %v1303, %v1355
        %v1372 = vmul.f32 %v1305, %v1356
        %v1373 = vmul.f32 %v1307, %v1357
        %v1374 = vmul.f32 %v1309, %v1358
        %v1375 = vmul.f32 %v1311, %v1359
        %v1376 = vpack.c.bf16 %v1361, %v1360
        %v1377 = vpack.c.bf16 %v1363, %v1362
        %v1378 = vpack.c.bf16 %v1365, %v1364
        %v1379 = vpack.c.bf16 %v1367, %v1366
        %v1380 = vpack.c.bf16 %v1369, %v1368
        %v1381 = vpack.c.bf16 %v1371, %v1370
        %v1382 = vpack.c.bf16 %v1373, %v1372
        %v1383 = vpack.c.bf16 %v1375, %v1374
        %1384 = vrot.lane.b32.xlu0 %v524, 56
        %v1385 = vpop.permute.xlu0 %1384
        %1386 = vrot.lane.b32.xlu0 %v525, 56
        %v1387 = vpop.permute.xlu0 %1386
        %1388 = vrot.lane.b32.xlu0 %v526, 56
        %v1389 = vpop.permute.xlu0 %1388
        %1390 = vrot.lane.b32.xlu0 %v527, 56
        %v1391 = vpop.permute.xlu0 %1390
        %1392 = vrot.lane.b32.xlu0 %v528, 56
        %v1393 = vpop.permute.xlu0 %1392
        %1394 = vrot.lane.b32.xlu0 %v529, 56
        %v1395 = vpop.permute.xlu0 %1394
        %1396 = vrot.lane.b32.xlu0 %v530, 56
        %v1397 = vpop.permute.xlu0 %1396
        %1398 = vrot.lane.b32.xlu0 %v531, 56
        %v1399 = vpop.permute.xlu0 %1398
        %1408 = vmatprep.subr.bf16.mxu0 0
        %1409 = vmatpush1.bf16.msra.mxu0 %v1385
        %1410 = vmatprep.subr.bf16.mxu0 0
        %1411 = vmatpush1.bf16.msra.mxu0 %v1387
        %1412 = vmatprep.subr.bf16.mxu0 0
        %1413 = vmatpush1.bf16.msra.mxu0 %v1389
        %1414 = vmatprep.subr.bf16.mxu0 0
        %1415 = vmatpush1.bf16.msra.mxu0 %v1391
        %1416 = vmatprep.subr.bf16.mxu0 0
        %1417 = vmatpush1.bf16.msra.mxu0 %v1393
        %1418 = vmatprep.subr.bf16.mxu0 0
        %1419 = vmatpush1.bf16.msra.mxu0 %v1395
        %1420 = vmatprep.subr.bf16.mxu0 0
        %1421 = vmatpush1.bf16.msra.mxu0 %v1397
        %1422 = vmatprep.subr.bf16.mxu0 0
        %1423 = vmatpush1.bf16.msra.mxu0 %v1399
        %1424 = vmatprep.subr.bf16.mxu0 0
        %1425 = vmatpush1.bf16.msra.mxu0 0
        %1426 = vmatprep.subr.bf16.mxu0 0
        %1427 = vmatpush1.bf16.msra.mxu0 0
        %1428 = vmatprep.subr.bf16.mxu0 0
        %1429 = vmatpush1.bf16.msra.mxu0 0
        %1430 = vmatprep.subr.bf16.mxu0 0
        %1431 = vmatpush1.bf16.msra.mxu0 0
        %1432 = vmatprep.subr.bf16.mxu0 0
        %1433 = vmatpush1.bf16.msra.mxu0 0
        %1434 = vmatprep.subr.bf16.mxu0 0
        %1435 = vmatpush1.bf16.msra.mxu0 0
        %1436 = vmatprep.subr.bf16.mxu0 0
        %1437 = vmatpush1.bf16.msra.mxu0 0
        %1438 = vmatprep.subr.bf16.mxu0 0
        %1439 = vmatpush1.bf16.msra.mxu0 0
        %1440 = vmatprep.mubr.bf16.mxu0 0
        %1441 = vmatmul.mubr.bf16.gmra.mrb[0].mxu0 %v1376
        %v1442 = vpop.f32.mrb[0].mxu0
        %v1443 = vadd.f32 0.0, %v1442
        %v1444 = vpop.f32.mrb[0].mxu0
        %v1445 = vpop.f32.mrb[0].mxu0
        %v1446 = vadd.f32 0.0, %v1445
        %v1447 = vpop.f32.mrb[0].mxu0
        %1448 = vmatprep.mubr.bf16.mxu0 0
        %1449 = vmatmul.mubr.bf16.gmra.mrb[0].mxu0 %v1377
        %v1450 = vpop.f32.mrb[0].mxu0
        %v1451 = vadd.f32 0.0, %v1450
        %v1452 = vpop.f32.mrb[0].mxu0
        %v1453 = vpop.f32.mrb[0].mxu0
        %v1454 = vadd.f32 0.0, %v1453
        %v1455 = vpop.f32.mrb[0].mxu0
        %1456 = vmatprep.mubr.bf16.mxu0 0
        %1457 = vmatmul.mubr.bf16.gmra.mrb[0].mxu0 %v1378
        %v1458 = vpop.f32.mrb[0].mxu0
        %v1459 = vadd.f32 0.0, %v1458
        %v1460 = vpop.f32.mrb[0].mxu0
        %v1461 = vpop.f32.mrb[0].mxu0
        %v1462 = vadd.f32 0.0, %v1461
        %v1463 = vpop.f32.mrb[0].mxu0
        %1464 = vmatprep.mubr.bf16.mxu0 0
        %1465 = vmatmul.mubr.bf16.gmra.mrb[0].mxu0 %v1379
        %v1466 = vpop.f32.mrb[0].mxu0
        %v1467 = vadd.f32 0.0, %v1466
        %v1468 = vpop.f32.mrb[0].mxu0
        %v1469 = vpop.f32.mrb[0].mxu0
        %v1470 = vadd.f32 0.0, %v1469
        %v1471 = vpop.f32.mrb[0].mxu0
        %1472 = vmatprep.mubr.bf16.mxu0 0
        %1473 = vmatmul.mubr.bf16.gmra.mrb[0].mxu0 %v1380
        %v1474 = vpop.f32.mrb[0].mxu0
        %v1475 = vadd.f32 0.0, %v1474
        %v1476 = vpop.f32.mrb[0].mxu0
        %v1477 = vpop.f32.mrb[0].mxu0
        %v1478 = vadd.f32 0.0, %v1477
        %v1479 = vpop.f32.mrb[0].mxu0
        %1480 = vmatprep.mubr.bf16.mxu0 0
        %1481 = vmatmul.mubr.bf16.gmra.mrb[0].mxu0 %v1381
        %v1482 = vpop.f32.mrb[0].mxu0
        %v1483 = vadd.f32 0.0, %v1482
        %v1484 = vpop.f32.mrb[0].mxu0
        %v1485 = vpop.f32.mrb[0].mxu0
        %v1486 = vadd.f32 0.0, %v1485
        %v1487 = vpop.f32.mrb[0].mxu0
        %1488 = vmatprep.mubr.bf16.mxu0 0
        %1489 = vmatmul.mubr.bf16.gmra.mrb[0].mxu0 %v1382
        %v1490 = vpop.f32.mrb[0].mxu0
        %v1491 = vadd.f32 0.0, %v1490
        %v1492 = vpop.f32.mrb[0].mxu0
        %v1493 = vpop.f32.mrb[0].mxu0
        %v1494 = vadd.f32 0.0, %v1493
        %v1495 = vpop.f32.mrb[0].mxu0
        %1496 = vmatprep.mubr.bf16.mxu0 0
        %1497 = vmatmul.mubr.bf16.gmra.mrb[0].mxu0 %v1383
        %v1498 = vpop.f32.mrb[0].mxu0
        %v1499 = vadd.f32 0.0, %v1498
        %v1500 = vpop.f32.mrb[0].mxu0
        %v1501 = vpop.f32.mrb[0].mxu0
        %v1502 = vadd.f32 0.0, %v1501
        %v1503 = vpop.f32.mrb[0].mxu0
        %1504 = vdwg.mxu0
        %1505 = vrot.lane.b32.xlu0 %v524, 112
        %v1506 = vpop.permute.xlu0 %1505
        %1507 = vrot.lane.b32.xlu0 %v525, 112
        %v1508 = vpop.permute.xlu0 %1507
        %1509 = vrot.lane.b32.xlu0 %v526, 112
        %v1510 = vpop.permute.xlu0 %1509
        %1511 = vrot.lane.b32.xlu0 %v527, 112
        %v1512 = vpop.permute.xlu0 %1511
        %1513 = vrot.lane.b32.xlu0 %v528, 112
        %v1514 = vpop.permute.xlu0 %1513
        %1515 = vrot.lane.b32.xlu0 %v529, 112
        %v1516 = vpop.permute.xlu0 %1515
        %1517 = vrot.lane.b32.xlu0 %v530, 112
        %v1518 = vpop.permute.xlu0 %1517
        %1519 = vrot.lane.b32.xlu0 %v531, 112
        %v1520 = vpop.permute.xlu0 %1519
        %1521 = vrot.lane.b32.xlu0 %v524, 80
        %v1522 = vpop.permute.xlu0 %1521
        %1523 = vrot.lane.b32.xlu0 %v525, 80
        %v1524 = vpop.permute.xlu0 %1523
        %1525 = vrot.lane.b32.xlu0 %v526, 80
        %v1526 = vpop.permute.xlu0 %1525
        %1527 = vrot.lane.b32.xlu0 %v527, 80
        %v1528 = vpop.permute.xlu0 %1527
        %1529 = vrot.lane.b32.xlu0 %v528, 80
        %v1530 = vpop.permute.xlu0 %1529
        %1531 = vrot.lane.b32.xlu0 %v529, 80
        %v1532 = vpop.permute.xlu0 %1531
        %1533 = vrot.lane.b32.xlu0 %v530, 80
        %v1534 = vpop.permute.xlu0 %1533
        %1535 = vrot.lane.b32.xlu0 %v531, 80
        %v1536 = vpop.permute.xlu0 %1535
        %v1538 = vsel %vm556, %v1506, 0
        %v1541 = vsel %vm556, %v1508, 0
        %v1544 = vsel %vm556, %v1510, 0
        %v1547 = vsel %vm556, %v1512, 0
        %v1550 = vsel %vm556, %v1514, 0
        %v1553 = vsel %vm556, %v1516, 0
        %v1556 = vsel %vm556, %v1518, 0
        %v1559 = vsel %vm556, %v1520, 0
        %v1562 = vsel %vm556, %v1522, 0
        %v1565 = vsel %vm556, %v1524, 0
        %v1568 = vsel %vm556, %v1526, 0
        %v1571 = vsel %vm556, %v1528, 0
        %v1574 = vsel %vm556, %v1530, 0
        %v1577 = vsel %vm556, %v1532, 0
        %v1580 = vsel %vm556, %v1534, 0
        %v1583 = vsel %vm556, %v1536, 0
        %1585 = vmatprep.subr.bf16.mxu0 0
        %1586 = vmatpush1.bf16.xpose.msra.mxu0 %v1562
        %1587 = vmatprep.subr.bf16.mxu0 0
        %1588 = vmatpush1.bf16.xpose.msra.mxu0 %v1565
        %1589 = vmatprep.subr.bf16.mxu0 0
        %1590 = vmatpush1.bf16.xpose.msra.mxu0 %v1568
        %1591 = vmatprep.subr.bf16.mxu0 0
        %1592 = vmatpush1.bf16.xpose.msra.mxu0 %v1571
        %1593 = vmatprep.subr.bf16.mxu0 0
        %1594 = vmatpush1.bf16.xpose.msra.mxu0 %v1574
        %1595 = vmatprep.subr.bf16.mxu0 0
        %1596 = vmatpush1.bf16.xpose.msra.mxu0 %v1577
        %1597 = vmatprep.subr.bf16.mxu0 0
        %1598 = vmatpush1.bf16.xpose.msra.mxu0 %v1580
        %1599 = vmatprep.subr.bf16.mxu0 0
        %1600 = vmatpush1.bf16.xpose.msra.mxu0 %v1583
        %1601 = vmatprep.subr.bf16.mxu0 0
        %1602 = vmatpush1.bf16.xpose.msra.mxu0 0
        %1603 = vmatprep.subr.bf16.mxu0 0
        %1604 = vmatpush1.bf16.xpose.msra.mxu0 0
        %1605 = vmatprep.subr.bf16.mxu0 0
        %1606 = vmatpush1.bf16.xpose.msra.mxu0 0
        %1607 = vmatprep.subr.bf16.mxu0 0
        %1608 = vmatpush1.bf16.xpose.msra.mxu0 0
        %1609 = vmatprep.subr.bf16.mxu0 0
        %1610 = vmatpush1.bf16.xpose.msra.mxu0 0
        %1611 = vmatprep.subr.bf16.mxu0 0
        %1612 = vmatpush1.bf16.xpose.msra.mxu0 0
        %1613 = vmatprep.subr.bf16.mxu0 0
        %1614 = vmatpush1.bf16.xpose.msra.mxu0 0
        %1615 = vmatprep.subr.bf16.mxu0 0
        %1616 = vmatpush1.bf16.xpose.msra.mxu0 0
        %1617 = vmatprep.mubr.bf16.mxu0 0
        %1618 = vmatmul.mubr.bf16.gmra.mrb[0].mxu0 %v1538
        %v1619 = vpop.f32.mrb[0].mxu0
        %v1620 = vadd.f32 0.0, %v1619
        %v1621 = vpop.f32.mrb[0].mxu0
        %v1622 = vpop.f32.mrb[0].mxu0
        %v1623 = vadd.f32 0.0, %v1622
        %v1624 = vpop.f32.mrb[0].mxu0
        %1625 = vmatprep.mubr.bf16.mxu0 0
        %1626 = vmatmul.mubr.bf16.gmra.mrb[0].mxu0 %v1541
        %v1627 = vpop.f32.mrb[0].mxu0
        %v1628 = vadd.f32 0.0, %v1627
        %v1629 = vpop.f32.mrb[0].mxu0
        %v1630 = vpop.f32.mrb[0].mxu0
        %v1631 = vadd.f32 0.0, %v1630
        %v1632 = vpop.f32.mrb[0].mxu0
        %1633 = vmatprep.mubr.bf16.mxu0 0
        %1634 = vmatmul.mubr.bf16.gmra.mrb[0].mxu0 %v1544
        %v1635 = vpop.f32.mrb[0].mxu0
        %v1636 = vadd.f32 0.0, %v1635
        %v1637 = vpop.f32.mrb[0].mxu0
        %v1638 = vpop.f32.mrb[0].mxu0
        %v1639 = vadd.f32 0.0, %v1638
        %v1640 = vpop.f32.mrb[0].mxu0
        %1641 = vmatprep.mubr.bf16.mxu0 0
        %1642 = vmatmul.mubr.bf16.gmra.mrb[0].mxu0 %v1547
        %v1643 = vpop.f32.mrb[0].mxu0
        %v1644 = vadd.f32 0.0, %v1643
        %v1645 = vpop.f32.mrb[0].mxu0
        %v1646 = vpop.f32.mrb[0].mxu0
        %v1647 = vadd.f32 0.0, %v1646
        %v1648 = vpop.f32.mrb[0].mxu0
        %1649 = vmatprep.mubr.bf16.mxu0 0
        %1650 = vmatmul.mubr.bf16.gmra.mrb[0].mxu0 %v1550
        %v1651 = vpop.f32.mrb[0].mxu0
        %v1652 = vadd.f32 0.0, %v1651
        %v1653 = vpop.f32.mrb[0].mxu0
        %v1654 = vpop.f32.mrb[0].mxu0
        %v1655 = vadd.f32 0.0, %v1654
        %v1656 = vpop.f32.mrb[0].mxu0
        %1657 = vmatprep.mubr.bf16.mxu0 0
        %1658 = vmatmul.mubr.bf16.gmra.mrb[0].mxu0 %v1553
        %v1659 = vpop.f32.mrb[0].mxu0
        %v1660 = vadd.f32 0.0, %v1659
        %v1661 = vpop.f32.mrb[0].mxu0
        %v1662 = vpop.f32.mrb[0].mxu0
        %v1663 = vadd.f32 0.0, %v1662
        %v1664 = vpop.f32.mrb[0].mxu0
        %1665 = vmatprep.mubr.bf16.mxu0 0
        %1666 = vmatmul.mubr.bf16.gmra.mrb[0].mxu0 %v1556
        %v1667 = vpop.f32.mrb[0].mxu0
        %v1668 = vadd.f32 0.0, %v1667
        %v1669 = vpop.f32.mrb[0].mxu0
        %v1670 = vpop.f32.mrb[0].mxu0
        %v1671 = vadd.f32 0.0, %v1670
        %v1672 = vpop.f32.mrb[0].mxu0
        %1673 = vmatprep.mubr.bf16.mxu0 0
        %1674 = vmatmul.mubr.bf16.gmra.mrb[0].mxu0 %v1559
        %v1675 = vpop.f32.mrb[0].mxu0
        %v1676 = vadd.f32 0.0, %v1675
        %v1677 = vpop.f32.mrb[0].mxu0
        %v1678 = vpop.f32.mrb[0].mxu0
        %v1679 = vadd.f32 0.0, %v1678
        %v1680 = vpop.f32.mrb[0].mxu0
        %1681 = vdwg.mxu0
        %v1682 = vmul.f32 %v1620, 0.35355338
        %v1683 = vmul.f32 %v1623, 0.35355338
        %v1684 = vmul.f32 %v1628, 0.35355338
        %v1685 = vmul.f32 %v1631, 0.35355338
        %v1686 = vmul.f32 %v1636, 0.35355338
        %v1687 = vmul.f32 %v1639, 0.35355338
        %v1688 = vmul.f32 %v1644, 0.35355338
        %v1689 = vmul.f32 %v1647, 0.35355338
        %v1690 = vmul.f32 %v1652, 0.35355338
        %v1691 = vmul.f32 %v1655, 0.35355338
        %v1692 = vmul.f32 %v1660, 0.35355338
        %v1693 = vmul.f32 %v1663, 0.35355338
        %v1694 = vmul.f32 %v1668, 0.35355338
        %v1695 = vmul.f32 %v1671, 0.35355338
        %v1696 = vmul.f32 %v1676, 0.35355338
        %v1697 = vmul.f32 %v1679, 0.35355338
        %v1698 = vadd.f32 %v1682, %v718
        %v1699 = vadd.f32 %v1683, %v719
        %v1700 = vadd.f32 %v1684, %v720
        %v1701 = vadd.f32 %v1685, %v721
        %v1702 = vadd.f32 %v1686, %v722
        %v1703 = vadd.f32 %v1687, %v723
        %v1704 = vadd.f32 %v1688, %v724
        %v1705 = vadd.f32 %v1689, %v725
        %v1706 = vadd.f32 %v1690, %v726
        %v1707 = vadd.f32 %v1691, %v727
        %v1708 = vadd.f32 %v1692, %v728
        %v1709 = vadd.f32 %v1693, %v729
        %v1710 = vadd.f32 %v1694, %v730
        %v1711 = vadd.f32 %v1695, %v731
        %v1712 = vadd.f32 %v1696, %v732
        %v1713 = vadd.f32 %v1697, %v733
        %1714 = vmax.xlane.f32.xlu0 %v1698
        %v1715 = vpop.xlane.xlu0 %1714
        %1716 = vmax.xlane.f32.xlu0 %v1699
        %v1717 = vpop.xlane.xlu0 %1716
        %1718 = vmax.xlane.f32.xlu0 %v1700
        %v1719 = vpop.xlane.xlu0 %1718
        %1720 = vmax.xlane.f32.xlu0 %v1701
        %v1721 = vpop.xlane.xlu0 %1720
        %1722 = vmax.xlane.f32.xlu0 %v1702
        %v1723 = vpop.xlane.xlu0 %1722
        %1724 = vmax.xlane.f32.xlu0 %v1703
        %v1725 = vpop.xlane.xlu0 %1724
        %1726 = vmax.xlane.f32.xlu0 %v1704
        %v1727 = vpop.xlane.xlu0 %1726
        %1728 = vmax.xlane.f32.xlu0 %v1705
        %v1729 = vpop.xlane.xlu0 %1728
        %1730 = vmax.xlane.f32.xlu0 %v1706
        %v1731 = vpop.xlane.xlu0 %1730
        %1732 = vmax.xlane.f32.xlu0 %v1707
        %v1733 = vpop.xlane.xlu0 %1732
        %1734 = vmax.xlane.f32.xlu0 %v1708
        %v1735 = vpop.xlane.xlu0 %1734
        %1736 = vmax.xlane.f32.xlu0 %v1709
        %v1737 = vpop.xlane.xlu0 %1736
        %1738 = vmax.xlane.f32.xlu0 %v1710
        %v1739 = vpop.xlane.xlu0 %1738
        %1740 = vmax.xlane.f32.xlu0 %v1711
        %v1741 = vpop.xlane.xlu0 %1740
        %1742 = vmax.xlane.f32.xlu0 %v1712
        %v1743 = vpop.xlane.xlu0 %1742
        %1744 = vmax.xlane.f32.xlu0 %v1713
        %v1745 = vpop.xlane.xlu0 %1744
        %v1746 = vsub.f32 %v1698, %v1715
        %v1747 = vsub.f32 %v1699, %v1717
        %v1748 = vsub.f32 %v1700, %v1719
        %v1749 = vsub.f32 %v1701, %v1721
        %v1750 = vsub.f32 %v1702, %v1723
        %v1751 = vsub.f32 %v1703, %v1725
        %v1752 = vsub.f32 %v1704, %v1727
        %v1753 = vsub.f32 %v1705, %v1729
        %v1754 = vsub.f32 %v1706, %v1731
        %v1755 = vsub.f32 %v1707, %v1733
        %v1756 = vsub.f32 %v1708, %v1735
        %v1757 = vsub.f32 %v1709, %v1737
        %v1758 = vsub.f32 %v1710, %v1739
        %v1759 = vsub.f32 %v1711, %v1741
        %v1760 = vsub.f32 %v1712, %v1743
        %v1761 = vsub.f32 %v1713, %v1745
        %v1762 = vmul.f32 %v1746, 1.442695
        %v1763 = vpow.pop %v1762
        %v1764 = vmul.f32 %v1747, 1.442695
        %v1765 = vpow.pop %v1764
        %v1766 = vmul.f32 %v1748, 1.442695
        %v1767 = vpow.pop %v1766
        %v1768 = vmul.f32 %v1749, 1.442695
        %v1769 = vpow.pop %v1768
        %v1770 = vmul.f32 %v1750, 1.442695
        %v1771 = vpow.pop %v1770
        %v1772 = vmul.f32 %v1751, 1.442695
        %v1773 = vpow.pop %v1772
        %v1774 = vmul.f32 %v1752, 1.442695
        %v1775 = vpow.pop %v1774
        %v1776 = vmul.f32 %v1753, 1.442695
        %v1777 = vpow.pop %v1776
        %v1778 = vmul.f32 %v1754, 1.442695
        %v1779 = vpow.pop %v1778
        %v1780 = vmul.f32 %v1755, 1.442695
        %v1781 = vpow.pop %v1780
        %v1782 = vmul.f32 %v1756, 1.442695
        %v1783 = vpow.pop %v1782
        %v1784 = vmul.f32 %v1757, 1.442695
        %v1785 = vpow.pop %v1784
        %v1786 = vmul.f32 %v1758, 1.442695
        %v1787 = vpow.pop %v1786
        %v1788 = vmul.f32 %v1759, 1.442695
        %v1789 = vpow.pop %v1788
        %v1790 = vmul.f32 %v1760, 1.442695
        %v1791 = vpow.pop %v1790
        %v1792 = vmul.f32 %v1761, 1.442695
        %v1793 = vpow.pop %v1792
        %1794 = vadd.xlane.f32.xlu0 %v1763
        %v1795 = vpop.xlane.xlu0 %1794
        %1796 = vadd.xlane.f32.xlu0 %v1765
        %v1797 = vpop.xlane.xlu0 %1796
        %1798 = vadd.xlane.f32.xlu0 %v1767
        %v1799 = vpop.xlane.xlu0 %1798
        %1800 = vadd.xlane.f32.xlu0 %v1769
        %v1801 = vpop.xlane.xlu0 %1800
        %1802 = vadd.xlane.f32.xlu0 %v1771
        %v1803 = vpop.xlane.xlu0 %1802
        %1804 = vadd.xlane.f32.xlu0 %v1773
        %v1805 = vpop.xlane.xlu0 %1804
        %1806 = vadd.xlane.f32.xlu0 %v1775
        %v1807 = vpop.xlane.xlu0 %1806
        %1808 = vadd.xlane.f32.xlu0 %v1777
        %v1809 = vpop.xlane.xlu0 %1808
        %1810 = vadd.xlane.f32.xlu0 %v1779
        %v1811 = vpop.xlane.xlu0 %1810
        %1812 = vadd.xlane.f32.xlu0 %v1781
        %v1813 = vpop.xlane.xlu0 %1812
        %1814 = vadd.xlane.f32.xlu0 %v1783
        %v1815 = vpop.xlane.xlu0 %1814
        %1816 = vadd.xlane.f32.xlu0 %v1785
        %v1817 = vpop.xlane.xlu0 %1816
        %1818 = vadd.xlane.f32.xlu0 %v1787
        %v1819 = vpop.xlane.xlu0 %1818
        %1820 = vadd.xlane.f32.xlu0 %v1789
        %v1821 = vpop.xlane.xlu0 %1820
        %1822 = vadd.xlane.f32.xlu0 %v1791
        %v1823 = vpop.xlane.xlu0 %1822
        %1824 = vadd.xlane.f32.xlu0 %v1793
        %v1825 = vpop.xlane.xlu0 %1824
        %v1826 = vrcp.pop %v1795
        %v1827 = vrcp.pop %v1797
        %v1828 = vrcp.pop %v1799
        %v1829 = vrcp.pop %v1801
        %v1830 = vrcp.pop %v1803
        %v1831 = vrcp.pop %v1805
        %v1832 = vrcp.pop %v1807
        %v1833 = vrcp.pop %v1809
        %v1834 = vrcp.pop %v1811
        %v1835 = vrcp.pop %v1813
        %v1836 = vrcp.pop %v1815
        %v1837 = vrcp.pop %v1817
        %v1838 = vrcp.pop %v1819
        %v1839 = vrcp.pop %v1821
        %v1840 = vrcp.pop %v1823
        %v1841 = vrcp.pop %v1825
        %v1842 = vmul.f32 %v1763, %v1826
        %v1843 = vmul.f32 %v1765, %v1827
        %v1844 = vmul.f32 %v1767, %v1828
        %v1845 = vmul.f32 %v1769, %v1829
        %v1846 = vmul.f32 %v1771, %v1830
        %v1847 = vmul.f32 %v1773, %v1831
        %v1848 = vmul.f32 %v1775, %v1832
        %v1849 = vmul.f32 %v1777, %v1833
        %v1850 = vmul.f32 %v1779, %v1834
        %v1851 = vmul.f32 %v1781, %v1835
        %v1852 = vmul.f32 %v1783, %v1836
        %v1853 = vmul.f32 %v1785, %v1837
        %v1854 = vmul.f32 %v1787, %v1838
        %v1855 = vmul.f32 %v1789, %v1839
        %v1856 = vmul.f32 %v1791, %v1840
        %v1857 = vmul.f32 %v1793, %v1841
        %v1858 = vpack.c.bf16 %v1843, %v1842
        %v1859 = vpack.c.bf16 %v1845, %v1844
        %v1860 = vpack.c.bf16 %v1847, %v1846
        %v1861 = vpack.c.bf16 %v1849, %v1848
        %v1862 = vpack.c.bf16 %v1851, %v1850
        %v1863 = vpack.c.bf16 %v1853, %v1852
        %v1864 = vpack.c.bf16 %v1855, %v1854
        %v1865 = vpack.c.bf16 %v1857, %v1856
        %1866 = vrot.lane.b32.xlu0 %v524, 48
        %v1867 = vpop.permute.xlu0 %1866
        %1868 = vrot.lane.b32.xlu0 %v525, 48
        %v1869 = vpop.permute.xlu0 %1868
        %1870 = vrot.lane.b32.xlu0 %v526, 48
        %v1871 = vpop.permute.xlu0 %1870
        %1872 = vrot.lane.b32.xlu0 %v527, 48
        %v1873 = vpop.permute.xlu0 %1872
        %1874 = vrot.lane.b32.xlu0 %v528, 48
        %v1875 = vpop.permute.xlu0 %1874
        %1876 = vrot.lane.b32.xlu0 %v529, 48
        %v1877 = vpop.permute.xlu0 %1876
        %1878 = vrot.lane.b32.xlu0 %v530, 48
        %v1879 = vpop.permute.xlu0 %1878
        %1880 = vrot.lane.b32.xlu0 %v531, 48
        %v1881 = vpop.permute.xlu0 %1880
        %1890 = vmatprep.subr.bf16.mxu0 0
        %1891 = vmatpush1.bf16.msra.mxu0 %v1867
        %1892 = vmatprep.subr.bf16.mxu0 0
        %1893 = vmatpush1.bf16.msra.mxu0 %v1869
        %1894 = vmatprep.subr.bf16.mxu0 0
        %1895 = vmatpush1.bf16.msra.mxu0 %v1871
        %1896 = vmatprep.subr.bf16.mxu0 0
        %1897 = vmatpush1.bf16.msra.mxu0 %v1873
        %1898 = vmatprep.subr.bf16.mxu0 0
        %1899 = vmatpush1.bf16.msra.mxu0 %v1875
        %1900 = vmatprep.subr.bf16.mxu0 0
        %1901 = vmatpush1.bf16.msra.mxu0 %v1877
        %1902 = vmatprep.subr.bf16.mxu0 0
        %1903 = vmatpush1.bf16.msra.mxu0 %v1879
        %1904 = vmatprep.subr.bf16.mxu0 0
        %1905 = vmatpush1.bf16.msra.mxu0 %v1881
        %1906 = vmatprep.subr.bf16.mxu0 0
        %1907 = vmatpush1.bf16.msra.mxu0 0
        %1908 = vmatprep.subr.bf16.mxu0 0
        %1909 = vmatpush1.bf16.msra.mxu0 0
        %1910 = vmatprep.subr.bf16.mxu0 0
        %1911 = vmatpush1.bf16.msra.mxu0 0
        %1912 = vmatprep.subr.bf16.mxu0 0
        %1913 = vmatpush1.bf16.msra.mxu0 0
        %1914 = vmatprep.subr.bf16.mxu0 0
        %1915 = vmatpush1.bf16.msra.mxu0 0
        %1916 = vmatprep.subr.bf16.mxu0 0
        %1917 = vmatpush1.bf16.msra.mxu0 0
        %1918 = vmatprep.subr.bf16.mxu0 0
        %1919 = vmatpush1.bf16.msra.mxu0 0
        %1920 = vmatprep.subr.bf16.mxu0 0
        %1921 = vmatpush1.bf16.msra.mxu0 0
        %1922 = vmatprep.mubr.bf16.mxu0 0
        %1923 = vmatmul.mubr.bf16.gmra.mrb[0].mxu0 %v1858
        %v1924 = vpop.f32.mrb[0].mxu0
        %v1925 = vadd.f32 0.0, %v1924
        %v1926 = vpop.f32.mrb[0].mxu0
        %v1927 = vpop.f32.mrb[0].mxu0
        %v1928 = vadd.f32 0.0, %v1927
        %v1929 = vpop.f32.mrb[0].mxu0
        %1930 = vmatprep.mubr.bf16.mxu0 0
        %1931 = vmatmul.mubr.bf16.gmra.mrb[0].mxu0 %v1859
        %v1932 = vpop.f32.mrb[0].mxu0
        %v1933 = vadd.f32 0.0, %v1932
        %v1934 = vpop.f32.mrb[0].mxu0
        %v1935 = vpop.f32.mrb[0].mxu0
        %v1936 = vadd.f32 0.0, %v1935
        %v1937 = vpop.f32.mrb[0].mxu0
        %1938 = vmatprep.mubr.bf16.mxu0 0
        %1939 = vmatmul.mubr.bf16.gmra.mrb[0].mxu0 %v1860
        %v1940 = vpop.f32.mrb[0].mxu0
        %v1941 = vadd.f32 0.0, %v1940
        %v1942 = vpop.f32.mrb[0].mxu0
        %v1943 = vpop.f32.mrb[0].mxu0
        %v1944 = vadd.f32 0.0, %v1943
        %v1945 = vpop.f32.mrb[0].mxu0
        %1946 = vmatprep.mubr.bf16.mxu0 0
        %1947 = vmatmul.mubr.bf16.gmra.mrb[0].mxu0 %v1861
        %v1948 = vpop.f32.mrb[0].mxu0
        %v1949 = vadd.f32 0.0, %v1948
        %v1950 = vpop.f32.mrb[0].mxu0
        %v1951 = vpop.f32.mrb[0].mxu0
        %v1952 = vadd.f32 0.0, %v1951
        %v1953 = vpop.f32.mrb[0].mxu0
        %1954 = vmatprep.mubr.bf16.mxu0 0
        %1955 = vmatmul.mubr.bf16.gmra.mrb[0].mxu0 %v1862
        %v1956 = vpop.f32.mrb[0].mxu0
        %v1957 = vadd.f32 0.0, %v1956
        %v1958 = vpop.f32.mrb[0].mxu0
        %v1959 = vpop.f32.mrb[0].mxu0
        %v1960 = vadd.f32 0.0, %v1959
        %v1961 = vpop.f32.mrb[0].mxu0
        %1962 = vmatprep.mubr.bf16.mxu0 0
        %1963 = vmatmul.mubr.bf16.gmra.mrb[0].mxu0 %v1863
        %v1964 = vpop.f32.mrb[0].mxu0
        %v1965 = vadd.f32 0.0, %v1964
        %v1966 = vpop.f32.mrb[0].mxu0
        %v1967 = vpop.f32.mrb[0].mxu0
        %v1968 = vadd.f32 0.0, %v1967
        %v1969 = vpop.f32.mrb[0].mxu0
        %1970 = vmatprep.mubr.bf16.mxu0 0
        %1971 = vmatmul.mubr.bf16.gmra.mrb[0].mxu0 %v1864
        %v1972 = vpop.f32.mrb[0].mxu0
        %v1973 = vadd.f32 0.0, %v1972
        %v1974 = vpop.f32.mrb[0].mxu0
        %v1975 = vpop.f32.mrb[0].mxu0
        %v1976 = vadd.f32 0.0, %v1975
        %v1977 = vpop.f32.mrb[0].mxu0
        %1978 = vmatprep.mubr.bf16.mxu0 0
        %1979 = vmatmul.mubr.bf16.gmra.mrb[0].mxu0 %v1865
        %v1980 = vpop.f32.mrb[0].mxu0
        %v1981 = vadd.f32 0.0, %v1980
        %v1982 = vpop.f32.mrb[0].mxu0
        %v1983 = vpop.f32.mrb[0].mxu0
        %v1984 = vadd.f32 0.0, %v1983
        %v1985 = vpop.f32.mrb[0].mxu0
        %1986 = vdwg.mxu0
        %1987 = vrot.lane.b32.xlu0 %v524, 104
        %v1988 = vpop.permute.xlu0 %1987
        %1989 = vrot.lane.b32.xlu0 %v525, 104
        %v1990 = vpop.permute.xlu0 %1989
        %1991 = vrot.lane.b32.xlu0 %v526, 104
        %v1992 = vpop.permute.xlu0 %1991
        %1993 = vrot.lane.b32.xlu0 %v527, 104
        %v1994 = vpop.permute.xlu0 %1993
        %1995 = vrot.lane.b32.xlu0 %v528, 104
        %v1996 = vpop.permute.xlu0 %1995
        %1997 = vrot.lane.b32.xlu0 %v529, 104
        %v1998 = vpop.permute.xlu0 %1997
        %1999 = vrot.lane.b32.xlu0 %v530, 104
        %v2000 = vpop.permute.xlu0 %1999
        %2001 = vrot.lane.b32.xlu0 %v531, 104
        %v2002 = vpop.permute.xlu0 %2001
        %2003 = vrot.lane.b32.xlu0 %v524, 72
        %v2004 = vpop.permute.xlu0 %2003
        %2005 = vrot.lane.b32.xlu0 %v525, 72
        %v2006 = vpop.permute.xlu0 %2005
        %2007 = vrot.lane.b32.xlu0 %v526, 72
        %v2008 = vpop.permute.xlu0 %2007
        %2009 = vrot.lane.b32.xlu0 %v527, 72
        %v2010 = vpop.permute.xlu0 %2009
        %2011 = vrot.lane.b32.xlu0 %v528, 72
        %v2012 = vpop.permute.xlu0 %2011
        %2013 = vrot.lane.b32.xlu0 %v529, 72
        %v2014 = vpop.permute.xlu0 %2013
        %2015 = vrot.lane.b32.xlu0 %v530, 72
        %v2016 = vpop.permute.xlu0 %2015
        %2017 = vrot.lane.b32.xlu0 %v531, 72
        %v2018 = vpop.permute.xlu0 %2017
        %v2020 = vsel %vm556, %v1988, 0
        %v2023 = vsel %vm556, %v1990, 0
        %v2026 = vsel %vm556, %v1992, 0
        %v2029 = vsel %vm556, %v1994, 0
        %v2032 = vsel %vm556, %v1996, 0
        %v2035 = vsel %vm556, %v1998, 0
        %v2038 = vsel %vm556, %v2000, 0
        %v2041 = vsel %vm556, %v2002, 0
        %v2044 = vsel %vm556, %v2004, 0
        %v2047 = vsel %vm556, %v2006, 0
        %v2050 = vsel %vm556, %v2008, 0
        %v2053 = vsel %vm556, %v2010, 0
        %v2056 = vsel %vm556, %v2012, 0
        %v2059 = vsel %vm556, %v2014, 0
        %v2062 = vsel %vm556, %v2016, 0
        %v2065 = vsel %vm556, %v2018, 0
        %2067 = vmatprep.subr.bf16.mxu0 0
        %2068 = vmatpush1.bf16.xpose.msra.mxu0 %v2044
        %2069 = vmatprep.subr.bf16.mxu0 0
        %2070 = vmatpush1.bf16.xpose.msra.mxu0 %v2047
        %2071 = vmatprep.subr.bf16.mxu0 0
        %2072 = vmatpush1.bf16.xpose.msra.mxu0 %v2050
        %2073 = vmatprep.subr.bf16.mxu0 0
        %2074 = vmatpush1.bf16.xpose.msra.mxu0 %v2053
        %2075 = vmatprep.subr.bf16.mxu0 0
        %2076 = vmatpush1.bf16.xpose.msra.mxu0 %v2056
        %2077 = vmatprep.subr.bf16.mxu0 0
        %2078 = vmatpush1.bf16.xpose.msra.mxu0 %v2059
        %2079 = vmatprep.subr.bf16.mxu0 0
        %2080 = vmatpush1.bf16.xpose.msra.mxu0 %v2062
        %2081 = vmatprep.subr.bf16.mxu0 0
        %2082 = vmatpush1.bf16.xpose.msra.mxu0 %v2065
        %2083 = vmatprep.subr.bf16.mxu0 0
        %2084 = vmatpush1.bf16.xpose.msra.mxu0 0
        %2085 = vmatprep.subr.bf16.mxu0 0
        %2086 = vmatpush1.bf16.xpose.msra.mxu0 0
        %2087 = vmatprep.subr.bf16.mxu0 0
        %2088 = vmatpush1.bf16.xpose.msra.mxu0 0
        %2089 = vmatprep.subr.bf16.mxu0 0
        %2090 = vmatpush1.bf16.xpose.msra.mxu0 0
        %2091 = vmatprep.subr.bf16.mxu0 0
        %2092 = vmatpush1.bf16.xpose.msra.mxu0 0
        %2093 = vmatprep.subr.bf16.mxu0 0
        %2094 = vmatpush1.bf16.xpose.msra.mxu0 0
        %2095 = vmatprep.subr.bf16.mxu0 0
        %2096 = vmatpush1.bf16.xpose.msra.mxu0 0
        %2097 = vmatprep.subr.bf16.mxu0 0
        %2098 = vmatpush1.bf16.xpose.msra.mxu0 0
        %2099 = vmatprep.mubr.bf16.mxu0 0
        %2100 = vmatmul.mubr.bf16.gmra.mrb[0].mxu0 %v2020
        %v2101 = vpop.f32.mrb[0].mxu0
        %v2102 = vadd.f32 0.0, %v2101
        %v2103 = vpop.f32.mrb[0].mxu0
        %v2104 = vpop.f32.mrb[0].mxu0
        %v2105 = vadd.f32 0.0, %v2104
        %v2106 = vpop.f32.mrb[0].mxu0
        %2107 = vmatprep.mubr.bf16.mxu0 0
        %2108 = vmatmul.mubr.bf16.gmra.mrb[0].mxu0 %v2023
        %v2109 = vpop.f32.mrb[0].mxu0
        %v2110 = vadd.f32 0.0, %v2109
        %v2111 = vpop.f32.mrb[0].mxu0
        %v2112 = vpop.f32.mrb[0].mxu0
        %v2113 = vadd.f32 0.0, %v2112
        %v2114 = vpop.f32.mrb[0].mxu0
        %2115 = vmatprep.mubr.bf16.mxu0 0
        %2116 = vmatmul.mubr.bf16.gmra.mrb[0].mxu0 %v2026
        %v2117 = vpop.f32.mrb[0].mxu0
        %v2118 = vadd.f32 0.0, %v2117
        %v2119 = vpop.f32.mrb[0].mxu0
        %v2120 = vpop.f32.mrb[0].mxu0
        %v2121 = vadd.f32 0.0, %v2120
        %v2122 = vpop.f32.mrb[0].mxu0
        %2123 = vmatprep.mubr.bf16.mxu0 0
        %2124 = vmatmul.mubr.bf16.gmra.mrb[0].mxu0 %v2029
        %v2125 = vpop.f32.mrb[0].mxu0
        %v2126 = vadd.f32 0.0, %v2125
        %v2127 = vpop.f32.mrb[0].mxu0
        %v2128 = vpop.f32.mrb[0].mxu0
        %v2129 = vadd.f32 0.0, %v2128
        %v2130 = vpop.f32.mrb[0].mxu0
        %2131 = vmatprep.mubr.bf16.mxu0 0
        %2132 = vmatmul.mubr.bf16.gmra.mrb[0].mxu0 %v2032
        %v2133 = vpop.f32.mrb[0].mxu0
        %v2134 = vadd.f32 0.0, %v2133
        %v2135 = vpop.f32.mrb[0].mxu0
        %v2136 = vpop.f32.mrb[0].mxu0
        %v2137 = vadd.f32 0.0, %v2136
        %v2138 = vpop.f32.mrb[0].mxu0
        %2139 = vmatprep.mubr.bf16.mxu0 0
        %2140 = vmatmul.mubr.bf16.gmra.mrb[0].mxu0 %v2035
        %v2141 = vpop.f32.mrb[0].mxu0
        %v2142 = vadd.f32 0.0, %v2141
        %v2143 = vpop.f32.mrb[0].mxu0
        %v2144 = vpop.f32.mrb[0].mxu0
        %v2145 = vadd.f32 0.0, %v2144
        %v2146 = vpop.f32.mrb[0].mxu0
        %2147 = vmatprep.mubr.bf16.mxu0 0
        %2148 = vmatmul.mubr.bf16.gmra.mrb[0].mxu0 %v2038
        %v2149 = vpop.f32.mrb[0].mxu0
        %v2150 = vadd.f32 0.0, %v2149
        %v2151 = vpop.f32.mrb[0].mxu0
        %v2152 = vpop.f32.mrb[0].mxu0
        %v2153 = vadd.f32 0.0, %v2152
        %v2154 = vpop.f32.mrb[0].mxu0
        %2155 = vmatprep.mubr.bf16.mxu0 0
        %2156 = vmatmul.mubr.bf16.gmra.mrb[0].mxu0 %v2041
        %v2157 = vpop.f32.mrb[0].mxu0
        %v2158 = vadd.f32 0.0, %v2157
        %v2159 = vpop.f32.mrb[0].mxu0
        %v2160 = vpop.f32.mrb[0].mxu0
        %v2161 = vadd.f32 0.0, %v2160
        %v2162 = vpop.f32.mrb[0].mxu0
        %2163 = vdwg.mxu0
        %v2164 = vmul.f32 %v2102, 0.35355338
        %v2165 = vmul.f32 %v2105, 0.35355338
        %v2166 = vmul.f32 %v2110, 0.35355338
        %v2167 = vmul.f32 %v2113, 0.35355338
        %v2168 = vmul.f32 %v2118, 0.35355338
        %v2169 = vmul.f32 %v2121, 0.35355338
        %v2170 = vmul.f32 %v2126, 0.35355338
        %v2171 = vmul.f32 %v2129, 0.35355338
        %v2172 = vmul.f32 %v2134, 0.35355338
        %v2173 = vmul.f32 %v2137, 0.35355338
        %v2174 = vmul.f32 %v2142, 0.35355338
        %v2175 = vmul.f32 %v2145, 0.35355338
        %v2176 = vmul.f32 %v2150, 0.35355338
        %v2177 = vmul.f32 %v2153, 0.35355338
        %v2178 = vmul.f32 %v2158, 0.35355338
        %v2179 = vmul.f32 %v2161, 0.35355338
        %v2180 = vadd.f32 %v2164, %v718
        %v2181 = vadd.f32 %v2165, %v719
        %v2182 = vadd.f32 %v2166, %v720
        %v2183 = vadd.f32 %v2167, %v721
        %v2184 = vadd.f32 %v2168, %v722
        %v2185 = vadd.f32 %v2169, %v723
        %v2186 = vadd.f32 %v2170, %v724
        %v2187 = vadd.f32 %v2171, %v725
        %v2188 = vadd.f32 %v2172, %v726
        %v2189 = vadd.f32 %v2173, %v727
        %v2190 = vadd.f32 %v2174, %v728
        %v2191 = vadd.f32 %v2175, %v729
        %v2192 = vadd.f32 %v2176, %v730
        %v2193 = vadd.f32 %v2177, %v731
        %v2194 = vadd.f32 %v2178, %v732
        %v2195 = vadd.f32 %v2179, %v733
        %2196 = vmax.xlane.f32.xlu0 %v2180
        %v2197 = vpop.xlane.xlu0 %2196
        %2198 = vmax.xlane.f32.xlu0 %v2181
        %v2199 = vpop.xlane.xlu0 %2198
        %2200 = vmax.xlane.f32.xlu0 %v2182
        %v2201 = vpop.xlane.xlu0 %2200
        %2202 = vmax.xlane.f32.xlu0 %v2183
        %v2203 = vpop.xlane.xlu0 %2202
        %2204 = vmax.xlane.f32.xlu0 %v2184
        %v2205 = vpop.xlane.xlu0 %2204
        %2206 = vmax.xlane.f32.xlu0 %v2185
        %v2207 = vpop.xlane.xlu0 %2206
        %2208 = vmax.xlane.f32.xlu0 %v2186
        %v2209 = vpop.xlane.xlu0 %2208
        %2210 = vmax.xlane.f32.xlu0 %v2187
        %v2211 = vpop.xlane.xlu0 %2210
        %2212 = vmax.xlane.f32.xlu0 %v2188
        %v2213 = vpop.xlane.xlu0 %2212
        %2214 = vmax.xlane.f32.xlu0 %v2189
        %v2215 = vpop.xlane.xlu0 %2214
        %2216 = vmax.xlane.f32.xlu0 %v2190
        %v2217 = vpop.xlane.xlu0 %2216
        %2218 = vmax.xlane.f32.xlu0 %v2191
        %v2219 = vpop.xlane.xlu0 %2218
        %2220 = vmax.xlane.f32.xlu0 %v2192
        %v2221 = vpop.xlane.xlu0 %2220
        %2222 = vmax.xlane.f32.xlu0 %v2193
        %v2223 = vpop.xlane.xlu0 %2222
        %2224 = vmax.xlane.f32.xlu0 %v2194
        %v2225 = vpop.xlane.xlu0 %2224
        %2226 = vmax.xlane.f32.xlu0 %v2195
        %v2227 = vpop.xlane.xlu0 %2226
        %v2228 = vsub.f32 %v2180, %v2197
        %v2229 = vsub.f32 %v2181, %v2199
        %v2230 = vsub.f32 %v2182, %v2201
        %v2231 = vsub.f32 %v2183, %v2203
        %v2232 = vsub.f32 %v2184, %v2205
        %v2233 = vsub.f32 %v2185, %v2207
        %v2234 = vsub.f32 %v2186, %v2209
        %v2235 = vsub.f32 %v2187, %v2211
        %v2236 = vsub.f32 %v2188, %v2213
        %v2237 = vsub.f32 %v2189, %v2215
        %v2238 = vsub.f32 %v2190, %v2217
        %v2239 = vsub.f32 %v2191, %v2219
        %v2240 = vsub.f32 %v2192, %v2221
        %v2241 = vsub.f32 %v2193, %v2223
        %v2242 = vsub.f32 %v2194, %v2225
        %v2243 = vsub.f32 %v2195, %v2227
        %v2244 = vmul.f32 %v2228, 1.442695
        %v2245 = vpow.pop %v2244
        %v2246 = vmul.f32 %v2229, 1.442695
        %v2247 = vpow.pop %v2246
        %v2248 = vmul.f32 %v2230, 1.442695
        %v2249 = vpow.pop %v2248
        %v2250 = vmul.f32 %v2231, 1.442695
        %v2251 = vpow.pop %v2250
        %v2252 = vmul.f32 %v2232, 1.442695
        %v2253 = vpow.pop %v2252
        %v2254 = vmul.f32 %v2233, 1.442695
        %v2255 = vpow.pop %v2254
        %v2256 = vmul.f32 %v2234, 1.442695
        %v2257 = vpow.pop %v2256
        %v2258 = vmul.f32 %v2235, 1.442695
        %v2259 = vpow.pop %v2258
        %v2260 = vmul.f32 %v2236, 1.442695
        %v2261 = vpow.pop %v2260
        %v2262 = vmul.f32 %v2237, 1.442695
        %v2263 = vpow.pop %v2262
        %v2264 = vmul.f32 %v2238, 1.442695
        %v2265 = vpow.pop %v2264
        %v2266 = vmul.f32 %v2239, 1.442695
        %v2267 = vpow.pop %v2266
        %v2268 = vmul.f32 %v2240, 1.442695
        %v2269 = vpow.pop %v2268
        %v2270 = vmul.f32 %v2241, 1.442695
        %v2271 = vpow.pop %v2270
        %v2272 = vmul.f32 %v2242, 1.442695
        %v2273 = vpow.pop %v2272
        %v2274 = vmul.f32 %v2243, 1.442695
        %v2275 = vpow.pop %v2274
        %2276 = vadd.xlane.f32.xlu0 %v2245
        %v2277 = vpop.xlane.xlu0 %2276
        %2278 = vadd.xlane.f32.xlu0 %v2247
        %v2279 = vpop.xlane.xlu0 %2278
        %2280 = vadd.xlane.f32.xlu0 %v2249
        %v2281 = vpop.xlane.xlu0 %2280
        %2282 = vadd.xlane.f32.xlu0 %v2251
        %v2283 = vpop.xlane.xlu0 %2282
        %2284 = vadd.xlane.f32.xlu0 %v2253
        %v2285 = vpop.xlane.xlu0 %2284
        %2286 = vadd.xlane.f32.xlu0 %v2255
        %v2287 = vpop.xlane.xlu0 %2286
        %2288 = vadd.xlane.f32.xlu0 %v2257
        %v2289 = vpop.xlane.xlu0 %2288
        %2290 = vadd.xlane.f32.xlu0 %v2259
        %v2291 = vpop.xlane.xlu0 %2290
        %2292 = vadd.xlane.f32.xlu0 %v2261
        %v2293 = vpop.xlane.xlu0 %2292
        %2294 = vadd.xlane.f32.xlu0 %v2263
        %v2295 = vpop.xlane.xlu0 %2294
        %2296 = vadd.xlane.f32.xlu0 %v2265
        %v2297 = vpop.xlane.xlu0 %2296
        %2298 = vadd.xlane.f32.xlu0 %v2267
        %v2299 = vpop.xlane.xlu0 %2298
        %2300 = vadd.xlane.f32.xlu0 %v2269
        %v2301 = vpop.xlane.xlu0 %2300
        %2302 = vadd.xlane.f32.xlu0 %v2271
        %v2303 = vpop.xlane.xlu0 %2302
        %2304 = vadd.xlane.f32.xlu0 %v2273
        %v2305 = vpop.xlane.xlu0 %2304
        %2306 = vadd.xlane.f32.xlu0 %v2275
        %v2307 = vpop.xlane.xlu0 %2306
        %v2308 = vrcp.pop %v2277
        %v2309 = vrcp.pop %v2279
        %v2310 = vrcp.pop %v2281
        %v2311 = vrcp.pop %v2283
        %v2312 = vrcp.pop %v2285
        %v2313 = vrcp.pop %v2287
        %v2314 = vrcp.pop %v2289
        %v2315 = vrcp.pop %v2291
        %v2316 = vrcp.pop %v2293
        %v2317 = vrcp.pop %v2295
        %v2318 = vrcp.pop %v2297
        %v2319 = vrcp.pop %v2299
        %v2320 = vrcp.pop %v2301
        %v2321 = vrcp.pop %v2303
        %v2322 = vrcp.pop %v2305
        %v2323 = vrcp.pop %v2307
        %v2324 = vmul.f32 %v2245, %v2308
        %v2325 = vmul.f32 %v2247, %v2309
        %v2326 = vmul.f32 %v2249, %v2310
        %v2327 = vmul.f32 %v2251, %v2311
        %v2328 = vmul.f32 %v2253, %v2312
        %v2329 = vmul.f32 %v2255, %v2313
        %v2330 = vmul.f32 %v2257, %v2314
        %v2331 = vmul.f32 %v2259, %v2315
        %v2332 = vmul.f32 %v2261, %v2316
        %v2333 = vmul.f32 %v2263, %v2317
        %v2334 = vmul.f32 %v2265, %v2318
        %v2335 = vmul.f32 %v2267, %v2319
        %v2336 = vmul.f32 %v2269, %v2320
        %v2337 = vmul.f32 %v2271, %v2321
        %v2338 = vmul.f32 %v2273, %v2322
        %v2339 = vmul.f32 %v2275, %v2323
        %v2340 = vpack.c.bf16 %v2325, %v2324
        %v2341 = vpack.c.bf16 %v2327, %v2326
        %v2342 = vpack.c.bf16 %v2329, %v2328
        %v2343 = vpack.c.bf16 %v2331, %v2330
        %v2344 = vpack.c.bf16 %v2333, %v2332
        %v2345 = vpack.c.bf16 %v2335, %v2334
        %v2346 = vpack.c.bf16 %v2337, %v2336
        %v2347 = vpack.c.bf16 %v2339, %v2338
        %2348 = vrot.lane.b32.xlu0 %v524, 40
        %v2349 = vpop.permute.xlu0 %2348
        %2350 = vrot.lane.b32.xlu0 %v525, 40
        %v2351 = vpop.permute.xlu0 %2350
        %2352 = vrot.lane.b32.xlu0 %v526, 40
        %v2353 = vpop.permute.xlu0 %2352
        %2354 = vrot.lane.b32.xlu0 %v527, 40
        %v2355 = vpop.permute.xlu0 %2354
        %2356 = vrot.lane.b32.xlu0 %v528, 40
        %v2357 = vpop.permute.xlu0 %2356
        %2358 = vrot.lane.b32.xlu0 %v529, 40
        %v2359 = vpop.permute.xlu0 %2358
        %2360 = vrot.lane.b32.xlu0 %v530, 40
        %v2361 = vpop.permute.xlu0 %2360
        %2362 = vrot.lane.b32.xlu0 %v531, 40
        %v2363 = vpop.permute.xlu0 %2362
        %2372 = vmatprep.subr.bf16.mxu0 0
        %2373 = vmatpush1.bf16.msra.mxu0 %v2349
        %2374 = vmatprep.subr.bf16.mxu0 0
        %2375 = vmatpush1.bf16.msra.mxu0 %v2351
        %2376 = vmatprep.subr.bf16.mxu0 0
        %2377 = vmatpush1.bf16.msra.mxu0 %v2353
        %2378 = vmatprep.subr.bf16.mxu0 0
        %2379 = vmatpush1.bf16.msra.mxu0 %v2355
        %2380 = vmatprep.subr.bf16.mxu0 0
        %2381 = vmatpush1.bf16.msra.mxu0 %v2357
        %2382 = vmatprep.subr.bf16.mxu0 0
        %2383 = vmatpush1.bf16.msra.mxu0 %v2359
        %2384 = vmatprep.subr.bf16.mxu0 0
        %2385 = vmatpush1.bf16.msra.mxu0 %v2361
        %2386 = vmatprep.subr.bf16.mxu0 0
        %2387 = vmatpush1.bf16.msra.mxu0 %v2363
        %2388 = vmatprep.subr.bf16.mxu0 0
        %2389 = vmatpush1.bf16.msra.mxu0 0
        %2390 = vmatprep.subr.bf16.mxu0 0
        %2391 = vmatpush1.bf16.msra.mxu0 0
        %2392 = vmatprep.subr.bf16.mxu0 0
        %2393 = vmatpush1.bf16.msra.mxu0 0
        %2394 = vmatprep.subr.bf16.mxu0 0
        %2395 = vmatpush1.bf16.msra.mxu0 0
        %2396 = vmatprep.subr.bf16.mxu0 0
        %2397 = vmatpush1.bf16.msra.mxu0 0
        %2398 = vmatprep.subr.bf16.mxu0 0
        %2399 = vmatpush1.bf16.msra.mxu0 0
        %2400 = vmatprep.subr.bf16.mxu0 0
        %2401 = vmatpush1.bf16.msra.mxu0 0
        %2402 = vmatprep.subr.bf16.mxu0 0
        %2403 = vmatpush1.bf16.msra.mxu0 0
        %2404 = vmatprep.mubr.bf16.mxu0 0
        %2405 = vmatmul.mubr.bf16.gmra.mrb[0].mxu0 %v2340
        %v2406 = vpop.f32.mrb[0].mxu0
        %v2407 = vadd.f32 0.0, %v2406
        %v2408 = vpop.f32.mrb[0].mxu0
        %v2409 = vpop.f32.mrb[0].mxu0
        %v2410 = vadd.f32 0.0, %v2409
        %v2411 = vpop.f32.mrb[0].mxu0
        %2412 = vmatprep.mubr.bf16.mxu0 0
        %2413 = vmatmul.mubr.bf16.gmra.mrb[0].mxu0 %v2341
        %v2414 = vpop.f32.mrb[0].mxu0
        %v2415 = vadd.f32 0.0, %v2414
        %v2416 = vpop.f32.mrb[0].mxu0
        %v2417 = vpop.f32.mrb[0].mxu0
        %v2418 = vadd.f32 0.0, %v2417
        %v2419 = vpop.f32.mrb[0].mxu0
        %2420 = vmatprep.mubr.bf16.mxu0 0
        %2421 = vmatmul.mubr.bf16.gmra.mrb[0].mxu0 %v2342
        %v2422 = vpop.f32.mrb[0].mxu0
        %v2423 = vadd.f32 0.0, %v2422
        %v2424 = vpop.f32.mrb[0].mxu0
        %v2425 = vpop.f32.mrb[0].mxu0
        %v2426 = vadd.f32 0.0, %v2425
        %v2427 = vpop.f32.mrb[0].mxu0
        %2428 = vmatprep.mubr.bf16.mxu0 0
        %2429 = vmatmul.mubr.bf16.gmra.mrb[0].mxu0 %v2343
        %v2430 = vpop.f32.mrb[0].mxu0
        %v2431 = vadd.f32 0.0, %v2430
        %v2432 = vpop.f32.mrb[0].mxu0
        %v2433 = vpop.f32.mrb[0].mxu0
        %v2434 = vadd.f32 0.0, %v2433
        %v2435 = vpop.f32.mrb[0].mxu0
        %2436 = vmatprep.mubr.bf16.mxu0 0
        %2437 = vmatmul.mubr.bf16.gmra.mrb[0].mxu0 %v2344
        %v2438 = vpop.f32.mrb[0].mxu0
        %v2439 = vadd.f32 0.0, %v2438
        %v2440 = vpop.f32.mrb[0].mxu0
        %v2441 = vpop.f32.mrb[0].mxu0
        %v2442 = vadd.f32 0.0, %v2441
        %v2443 = vpop.f32.mrb[0].mxu0
        %2444 = vmatprep.mubr.bf16.mxu0 0
        %2445 = vmatmul.mubr.bf16.gmra.mrb[0].mxu0 %v2345
        %v2446 = vpop.f32.mrb[0].mxu0
        %v2447 = vadd.f32 0.0, %v2446
        %v2448 = vpop.f32.mrb[0].mxu0
        %v2449 = vpop.f32.mrb[0].mxu0
        %v2450 = vadd.f32 0.0, %v2449
        %v2451 = vpop.f32.mrb[0].mxu0
        %2452 = vmatprep.mubr.bf16.mxu0 0
        %2453 = vmatmul.mubr.bf16.gmra.mrb[0].mxu0 %v2346
        %v2454 = vpop.f32.mrb[0].mxu0
        %v2455 = vadd.f32 0.0, %v2454
        %v2456 = vpop.f32.mrb[0].mxu0
        %v2457 = vpop.f32.mrb[0].mxu0
        %v2458 = vadd.f32 0.0, %v2457
        %v2459 = vpop.f32.mrb[0].mxu0
        %2460 = vmatprep.mubr.bf16.mxu0 0
        %2461 = vmatmul.mubr.bf16.gmra.mrb[0].mxu0 %v2347
        %v2462 = vpop.f32.mrb[0].mxu0
        %v2463 = vadd.f32 0.0, %v2462
        %v2464 = vpop.f32.mrb[0].mxu0
        %v2465 = vpop.f32.mrb[0].mxu0
        %v2466 = vadd.f32 0.0, %v2465
        %v2467 = vpop.f32.mrb[0].mxu0
        %2468 = vdwg.mxu0
        %2485 = vrot.lane.b32.xlu0 %v1443, 8
        %v2486 = vpop.permute.xlu0 %2485
        %2487 = vrot.lane.b32.xlu0 %v1446, 8
        %v2488 = vpop.permute.xlu0 %2487
        %2489 = vrot.lane.b32.xlu0 %v1451, 8
        %v2490 = vpop.permute.xlu0 %2489
        %2491 = vrot.lane.b32.xlu0 %v1454, 8
        %v2492 = vpop.permute.xlu0 %2491
        %2493 = vrot.lane.b32.xlu0 %v1459, 8
        %v2494 = vpop.permute.xlu0 %2493
        %2495 = vrot.lane.b32.xlu0 %v1462, 8
        %v2496 = vpop.permute.xlu0 %2495
        %2497 = vrot.lane.b32.xlu0 %v1467, 8
        %v2498 = vpop.permute.xlu0 %2497
        %2499 = vrot.lane.b32.xlu0 %v1470, 8
        %v2500 = vpop.permute.xlu0 %2499
        %2501 = vrot.lane.b32.xlu0 %v1475, 8
        %v2502 = vpop.permute.xlu0 %2501
        %2503 = vrot.lane.b32.xlu0 %v1478, 8
        %v2504 = vpop.permute.xlu0 %2503
        %2505 = vrot.lane.b32.xlu0 %v1483, 8
        %v2506 = vpop.permute.xlu0 %2505
        %2507 = vrot.lane.b32.xlu0 %v1486, 8
        %v2508 = vpop.permute.xlu0 %2507
        %2509 = vrot.lane.b32.xlu0 %v1491, 8
        %v2510 = vpop.permute.xlu0 %2509
        %2511 = vrot.lane.b32.xlu0 %v1494, 8
        %v2512 = vpop.permute.xlu0 %2511
        %2513 = vrot.lane.b32.xlu0 %v1499, 8
        %v2514 = vpop.permute.xlu0 %2513
        %2515 = vrot.lane.b32.xlu0 %v1502, 8
        %v2516 = vpop.permute.xlu0 %2515
        %2549 = vrot.lane.b32.xlu0 %v1925, 16
        %v2550 = vpop.permute.xlu0 %2549
        %2551 = vrot.lane.b32.xlu0 %v1928, 16
        %v2552 = vpop.permute.xlu0 %2551
        %2553 = vrot.lane.b32.xlu0 %v1933, 16
        %v2554 = vpop.permute.xlu0 %2553
        %2555 = vrot.lane.b32.xlu0 %v1936, 16
        %v2556 = vpop.permute.xlu0 %2555
        %2557 = vrot.lane.b32.xlu0 %v1941, 16
        %v2558 = vpop.permute.xlu0 %2557
        %2559 = vrot.lane.b32.xlu0 %v1944, 16
        %v2560 = vpop.permute.xlu0 %2559
        %2561 = vrot.lane.b32.xlu0 %v1949, 16
        %v2562 = vpop.permute.xlu0 %2561
        %2563 = vrot.lane.b32.xlu0 %v1952, 16
        %v2564 = vpop.permute.xlu0 %2563
        %2565 = vrot.lane.b32.xlu0 %v1957, 16
        %v2566 = vpop.permute.xlu0 %2565
        %2567 = vrot.lane.b32.xlu0 %v1960, 16
        %v2568 = vpop.permute.xlu0 %2567
        %2569 = vrot.lane.b32.xlu0 %v1965, 16
        %v2570 = vpop.permute.xlu0 %2569
        %2571 = vrot.lane.b32.xlu0 %v1968, 16
        %v2572 = vpop.permute.xlu0 %2571
        %2573 = vrot.lane.b32.xlu0 %v1973, 16
        %v2574 = vpop.permute.xlu0 %2573
        %2575 = vrot.lane.b32.xlu0 %v1976, 16
        %v2576 = vpop.permute.xlu0 %2575
        %2577 = vrot.lane.b32.xlu0 %v1981, 16
        %v2578 = vpop.permute.xlu0 %2577
        %2579 = vrot.lane.b32.xlu0 %v1984, 16
        %v2580 = vpop.permute.xlu0 %2579
        %2613 = vrot.lane.b32.xlu0 %v2407, 24
        %v2614 = vpop.permute.xlu0 %2613
        %2615 = vrot.lane.b32.xlu0 %v2410, 24
        %v2616 = vpop.permute.xlu0 %2615
        %2617 = vrot.lane.b32.xlu0 %v2415, 24
        %v2618 = vpop.permute.xlu0 %2617
        %2619 = vrot.lane.b32.xlu0 %v2418, 24
        %v2620 = vpop.permute.xlu0 %2619
        %2621 = vrot.lane.b32.xlu0 %v2423, 24
        %v2622 = vpop.permute.xlu0 %2621
        %2623 = vrot.lane.b32.xlu0 %v2426, 24
        %v2624 = vpop.permute.xlu0 %2623
        %2625 = vrot.lane.b32.xlu0 %v2431, 24
        %v2626 = vpop.permute.xlu0 %2625
        %2627 = vrot.lane.b32.xlu0 %v2434, 24
        %v2628 = vpop.permute.xlu0 %2627
        %2629 = vrot.lane.b32.xlu0 %v2439, 24
        %v2630 = vpop.permute.xlu0 %2629
        %2631 = vrot.lane.b32.xlu0 %v2442, 24
        %v2632 = vpop.permute.xlu0 %2631
        %2633 = vrot.lane.b32.xlu0 %v2447, 24
        %v2634 = vpop.permute.xlu0 %2633
        %2635 = vrot.lane.b32.xlu0 %v2450, 24
        %v2636 = vpop.permute.xlu0 %2635
        %2637 = vrot.lane.b32.xlu0 %v2455, 24
        %v2638 = vpop.permute.xlu0 %2637
        %2639 = vrot.lane.b32.xlu0 %v2458, 24
        %v2640 = vpop.permute.xlu0 %2639
        %2641 = vrot.lane.b32.xlu0 %v2463, 24
        %v2642 = vpop.permute.xlu0 %2641
        %2643 = vrot.lane.b32.xlu0 %v2466, 24
        %v2644 = vpop.permute.xlu0 %2643
        %v2661 = vsel %vm556, %v961, %v2486
        %v2662 = vsel %vm556, %v964, %v2488
        %v2663 = vsel %vm556, %v969, %v2490
        %v2664 = vsel %vm556, %v972, %v2492
        %v2665 = vsel %vm556, %v977, %v2494
        %v2666 = vsel %vm556, %v980, %v2496
        %v2667 = vsel %vm556, %v985, %v2498
        %v2668 = vsel %vm556, %v988, %v2500
        %v2669 = vsel %vm556, %v993, %v2502
        %v2670 = vsel %vm556, %v996, %v2504
        %v2671 = vsel %vm556, %v1001, %v2506
        %v2672 = vsel %vm556, %v1004, %v2508
        %v2673 = vsel %vm556, %v1009, %v2510
        %v2674 = vsel %vm556, %v1012, %v2512
        %v2675 = vsel %vm556, %v1017, %v2514
        %v2676 = vsel %vm556, %v1020, %v2516
        %vm2677 = vcmask 130048
        %v2678 = vsel %vm2677, %v2661, %v2550
        %v2679 = vsel %vm2677, %v2662, %v2552
        %v2680 = vsel %vm2677, %v2663, %v2554
        %v2681 = vsel %vm2677, %v2664, %v2556
        %v2682 = vsel %vm2677, %v2665, %v2558
        %v2683 = vsel %vm2677, %v2666, %v2560
        %v2684 = vsel %vm2677, %v2667, %v2562
        %v2685 = vsel %vm2677, %v2668, %v2564
        %v2686 = vsel %vm2677, %v2669, %v2566
        %v2687 = vsel %vm2677, %v2670, %v2568
        %v2688 = vsel %vm2677, %v2671, %v2570
        %v2689 = vsel %vm2677, %v2672, %v2572
        %v2690 = vsel %vm2677, %v2673, %v2574
        %v2691 = vsel %vm2677, %v2674, %v2576
        %v2692 = vsel %vm2677, %v2675, %v2578
        %v2693 = vsel %vm2677, %v2676, %v2580
        %vm2694 = vcmask 195584
        %v2695 = vsel %vm2694, %v2678, %v2614
        %v2696 = vsel %vm2694, %v2679, %v2616
        %v2697 = vsel %vm2694, %v2680, %v2618
        %v2698 = vsel %vm2694, %v2681, %v2620
        %v2699 = vsel %vm2694, %v2682, %v2622
        %v2700 = vsel %vm2694, %v2683, %v2624
        %v2701 = vsel %vm2694, %v2684, %v2626
        %v2702 = vsel %vm2694, %v2685, %v2628
        %v2703 = vsel %vm2694, %v2686, %v2630
        %v2704 = vsel %vm2694, %v2687, %v2632
        %v2705 = vsel %vm2694, %v2688, %v2634
        %v2706 = vsel %vm2694, %v2689, %v2636
        %v2707 = vsel %vm2694, %v2690, %v2638
        %v2708 = vsel %vm2694, %v2691, %v2640
        %v2709 = vsel %vm2694, %v2692, %v2642
        %v2710 = vsel %vm2694, %v2693, %v2644
        %v2711 = vpack.c.bf16 %v2696, %v2695
        %v2712 = vpack.c.bf16 %v2698, %v2697
        %v2713 = vpack.c.bf16 %v2700, %v2699
        %v2714 = vpack.c.bf16 %v2702, %v2701
        %v2715 = vpack.c.bf16 %v2704, %v2703
        %v2716 = vpack.c.bf16 %v2706, %v2705
        %v2717 = vpack.c.bf16 %v2708, %v2707
        %v2718 = vpack.c.bf16 %v2710, %v2709
        %v2719 = vld [vmem:[%s4] sm:$0xf]
        %v2720 = vld [vmem:[%s4 + $0x4] sm:$0xf]
        %v2721 = vld [vmem:[%s4 + $0x8] sm:$0xf]
        %v2722 = vld [vmem:[%s4 + $0xc] sm:$0xf]
        %v2727 = vunpack.c.l.b16 %v2719
        %v2728 = vunpack.c.l.b16 %v2720
        %v2729 = vunpack.c.l.b16 %v2721
        %v2730 = vunpack.c.l.b16 %v2722
        %v2731 = vpack.c.b16 %v2728, %v2727
        %v2732 = vpack.c.b16 %v2730, %v2729
        %v2736 = vsel %vm402, %v2711, 0
        %v2739 = vsel %vm402, %v2712, 0
        %v2742 = vsel %vm402, %v2713, 0
        %v2745 = vsel %vm402, %v2714, 0
        %v2748 = vsel %vm402, %v2715, 0
        %v2751 = vsel %vm402, %v2716, 0
        %v2754 = vsel %vm402, %v2717, 0
        %v2757 = vsel %vm402, %v2718, 0
        %2759 = vmatprep.subr.bf16.mxu0 0
        %2760 = vmatpush1.bf16.msra.mxu0 %v2731
        %2761 = vmatprep.subr.bf16.mxu0 0
        %2762 = vmatpush1.bf16.msra.mxu0 %v2732
        %2763 = vmatprep.subr.bf16.mxu0 0
        %2764 = vmatpush1.bf16.msra.mxu0 0
        %2765 = vmatprep.subr.bf16.mxu0 0
        %2766 = vmatpush1.bf16.msra.mxu0 0
        %2767 = vmatprep.subr.bf16.mxu0 0
        %2768 = vmatpush1.bf16.msra.mxu0 0
        %2769 = vmatprep.subr.bf16.mxu0 0
        %2770 = vmatpush1.bf16.msra.mxu0 0
        %2771 = vmatprep.subr.bf16.mxu0 0
        %2772 = vmatpush1.bf16.msra.mxu0 0
        %2773 = vmatprep.subr.bf16.mxu0 0
        %2774 = vmatpush1.bf16.msra.mxu0 0
        %2775 = vmatprep.subr.bf16.mxu0 0
        %2776 = vmatpush1.bf16.msra.mxu0 0
        %2777 = vmatprep.subr.bf16.mxu0 0
        %2778 = vmatpush1.bf16.msra.mxu0 0
        %2779 = vmatprep.subr.bf16.mxu0 0
        %2780 = vmatpush1.bf16.msra.mxu0 0
        %2781 = vmatprep.subr.bf16.mxu0 0
        %2782 = vmatpush1.bf16.msra.mxu0 0
        %2783 = vmatprep.subr.bf16.mxu0 0
        %2784 = vmatpush1.bf16.msra.mxu0 0
        %2785 = vmatprep.subr.bf16.mxu0 0
        %2786 = vmatpush1.bf16.msra.mxu0 0
        %2787 = vmatprep.subr.bf16.mxu0 0
        %2788 = vmatpush1.bf16.msra.mxu0 0
        %2789 = vmatprep.subr.bf16.mxu0 0
        %2790 = vmatpush1.bf16.msra.mxu0 0
        %2791 = vmatprep.mubr.bf16.mxu0 0
        %2792 = vmatmul.mubr.bf16.gmra.mrb[0].mxu0 %v2736
        %v2793 = vpop.f32.mrb[0].mxu0
        %v2794 = vadd.f32 0.0, %v2793
        %v2795 = vpop.f32.mrb[0].mxu0
        %v2796 = vpop.f32.mrb[0].mxu0
        %v2797 = vadd.f32 0.0, %v2796
        %v2798 = vpop.f32.mrb[0].mxu0
        %2799 = vmatprep.mubr.bf16.mxu0 0
        %2800 = vmatmul.mubr.bf16.gmra.mrb[0].mxu0 %v2739
        %v2801 = vpop.f32.mrb[0].mxu0
        %v2802 = vadd.f32 0.0, %v2801
        %v2803 = vpop.f32.mrb[0].mxu0
        %v2804 = vpop.f32.mrb[0].mxu0
        %v2805 = vadd.f32 0.0, %v2804
        %v2806 = vpop.f32.mrb[0].mxu0
        %2807 = vmatprep.mubr.bf16.mxu0 0
        %2808 = vmatmul.mubr.bf16.gmra.mrb[0].mxu0 %v2742
        %v2809 = vpop.f32.mrb[0].mxu0
        %v2810 = vadd.f32 0.0, %v2809
        %v2811 = vpop.f32.mrb[0].mxu0
        %v2812 = vpop.f32.mrb[0].mxu0
        %v2813 = vadd.f32 0.0, %v2812
        %v2814 = vpop.f32.mrb[0].mxu0
        %2815 = vmatprep.mubr.bf16.mxu0 0
        %2816 = vmatmul.mubr.bf16.gmra.mrb[0].mxu0 %v2745
        %v2817 = vpop.f32.mrb[0].mxu0
        %v2818 = vadd.f32 0.0, %v2817
        %v2819 = vpop.f32.mrb[0].mxu0
        %v2820 = vpop.f32.mrb[0].mxu0
        %v2821 = vadd.f32 0.0, %v2820
        %v2822 = vpop.f32.mrb[0].mxu0
        %2823 = vmatprep.mubr.bf16.mxu0 0
        %2824 = vmatmul.mubr.bf16.gmra.mrb[0].mxu0 %v2748
        %v2825 = vpop.f32.mrb[0].mxu0
        %v2826 = vadd.f32 0.0, %v2825
        %v2827 = vpop.f32.mrb[0].mxu0
        %v2828 = vpop.f32.mrb[0].mxu0
        %v2829 = vadd.f32 0.0, %v2828
        %v2830 = vpop.f32.mrb[0].mxu0
        %2831 = vmatprep.mubr.bf16.mxu0 0
        %2832 = vmatmul.mubr.bf16.gmra.mrb[0].mxu0 %v2751
        %v2833 = vpop.f32.mrb[0].mxu0
        %v2834 = vadd.f32 0.0, %v2833
        %v2835 = vpop.f32.mrb[0].mxu0
        %v2836 = vpop.f32.mrb[0].mxu0
        %v2837 = vadd.f32 0.0, %v2836
        %v2838 = vpop.f32.mrb[0].mxu0
        %2839 = vmatprep.mubr.bf16.mxu0 0
        %2840 = vmatmul.mubr.bf16.gmra.mrb[0].mxu0 %v2754
        %v2841 = vpop.f32.mrb[0].mxu0
        %v2842 = vadd.f32 0.0, %v2841
        %v2843 = vpop.f32.mrb[0].mxu0
        %v2844 = vpop.f32.mrb[0].mxu0
        %v2845 = vadd.f32 0.0, %v2844
        %v2846 = vpop.f32.mrb[0].mxu0
        %2847 = vmatprep.mubr.bf16.mxu0 0
        %2848 = vmatmul.mubr.bf16.gmra.mrb[0].mxu0 %v2757
        %v2849 = vpop.f32.mrb[0].mxu0
        %v2850 = vadd.f32 0.0, %v2849
        %v2851 = vpop.f32.mrb[0].mxu0
        %v2852 = vpop.f32.mrb[0].mxu0
        %v2853 = vadd.f32 0.0, %v2852
        %v2854 = vpop.f32.mrb[0].mxu0
        %2855 = vdwg.mxu0
        %v2856 = vld [vmem:[%s326] sm:$0xff]
        %v2857 = vld [vmem:[%s326 + $0x8] sm:$0xff]
        %v2858 = vld [vmem:[%s326 + $0x10] sm:$0xff]
        %v2859 = vld [vmem:[%s326 + $0x18] sm:$0xff]
        %v2860 = vld [vmem:[%s326 + $0x20] sm:$0xff]
        %v2861 = vld [vmem:[%s326 + $0x28] sm:$0xff]
        %v2862 = vld [vmem:[%s326 + $0x30] sm:$0xff]
        %v2863 = vld [vmem:[%s326 + $0x38] sm:$0xff]
        %v2864 = vld [vmem:[%s326 + $0x40] sm:$0xff]
        %v2865 = vld [vmem:[%s326 + $0x48] sm:$0xff]
        %v2866 = vld [vmem:[%s326 + $0x50] sm:$0xff]
        %v2867 = vld [vmem:[%s326 + $0x58] sm:$0xff]
        %v2868 = vld [vmem:[%s326 + $0x60] sm:$0xff]
        %v2869 = vld [vmem:[%s326 + $0x68] sm:$0xff]
        %v2870 = vld [vmem:[%s326 + $0x70] sm:$0xff]
        %v2871 = vld [vmem:[%s326 + $0x78] sm:$0xff]
        %v2872 = vld [vmem:[%s5] sm:$0x1]
        %v2874 = vlaneseq
        %v2875 = vshrl.u32 %v2874, 7
        %v2876 = vsub.s32 0, %v2875
        %v2877 = vrot.slane %v2872, %v2876
        %2879 = vmatprep.subr.mxu0 0.0
        %2880 = vmatpush1.msra.mxu0 %v2794
        %2881 = vmatprep.subr.mxu0 0.0
        %2882 = vmatpush1.msra.mxu0 %v2797
        %2883 = vmatprep.subr.mxu0 0.0
        %2884 = vmatpush1.msra.mxu0 %v2802
        %2885 = vmatprep.subr.mxu0 0.0
        %2886 = vmatpush1.msra.mxu0 %v2805
        %2887 = vmatprep.subr.mxu0 0.0
        %2888 = vmatpush1.msra.mxu0 %v2810
        %2889 = vmatprep.subr.mxu0 0.0
        %2890 = vmatpush1.msra.mxu0 %v2813
        %2891 = vmatprep.subr.mxu0 0.0
        %2892 = vmatpush1.msra.mxu0 %v2818
        %2893 = vmatprep.subr.mxu0 0.0
        %2894 = vmatpush1.msra.mxu0 %v2821
        %2895 = vmatprep.subr.mxu0 0.0
        %2896 = vmatpush1.msra.mxu0 %v2826
        %2897 = vmatprep.subr.mxu0 0.0
        %2898 = vmatpush1.msra.mxu0 %v2829
        %2899 = vmatprep.subr.mxu0 0.0
        %2900 = vmatpush1.msra.mxu0 %v2834
        %2901 = vmatprep.subr.mxu0 0.0
        %2902 = vmatpush1.msra.mxu0 %v2837
        %2903 = vmatprep.subr.mxu0 0.0
        %2904 = vmatpush1.msra.mxu0 %v2842
        %2905 = vmatprep.subr.mxu0 0.0
        %2906 = vmatpush1.msra.mxu0 %v2845
        %2907 = vmatprep.subr.mxu0 0.0
        %2908 = vmatpush1.msra.mxu0 %v2850
        %2909 = vmatprep.subr.mxu0 0.0
        %2910 = vmatpush1.msra.mxu0 %v2853
        %2911 = vmatprep.subr.mxu0 0.0
        %2912 = vmatpush1.msra.mxu0 0.0
        %2913 = vmatprep.subr.mxu0 0.0
        %2914 = vmatpush1.msra.mxu0 0.0
        %2915 = vmatprep.subr.mxu0 0.0
        %2916 = vmatpush1.msra.mxu0 0.0
        %2917 = vmatprep.subr.mxu0 0.0
        %2918 = vmatpush1.msra.mxu0 0.0
        %2919 = vmatprep.subr.mxu0 0.0
        %2920 = vmatpush1.msra.mxu0 0.0
        %2921 = vmatprep.subr.mxu0 0.0
        %2922 = vmatpush1.msra.mxu0 0.0
        %2923 = vmatprep.subr.mxu0 0.0
        %2924 = vmatpush1.msra.mxu0 0.0
        %2925 = vmatprep.subr.mxu0 0.0
        %2926 = vmatpush1.msra.mxu0 0.0
        %2927 = vmatprep.subr.mxu0 0.0
        %2928 = vmatpush1.msra.mxu0 0.0
        %2929 = vmatprep.subr.mxu0 0.0
        %2930 = vmatpush1.msra.mxu0 0.0
        %2931 = vmatprep.subr.mxu0 0.0
        %2932 = vmatpush1.msra.mxu0 0.0
        %2933 = vmatprep.subr.mxu0 0.0
        %2934 = vmatpush1.msra.mxu0 0.0
        %2935 = vmatprep.subr.mxu0 0.0
        %2936 = vmatpush1.msra.mxu0 0.0
        %2937 = vmatprep.subr.mxu0 0.0
        %2938 = vmatpush1.msra.mxu0 0.0
        %2939 = vmatprep.subr.mxu0 0.0
        %2940 = vmatpush1.msra.mxu0 0.0
        %2941 = vmatprep.subr.mxu0 0.0
        %2942 = vmatpush1.msra.mxu0 0.0
        %2943 = vmatprep.mubr.f32.mxu0 0.0
        %2944 = vmatmul.mubr.f32.gmra.mrb[0].mxu0 %v2856
        %v2945 = vpop.f32.mrb[0].mxu0
        %v2946 = vadd.f32 %v2877, %v2945
        %v2947 = vpop.f32.mrb[0].mxu0
        %2948 = vmatprep.mubr.f32.mxu0 0.0
        %2949 = vmatmul.mubr.f32.gmra.mrb[0].mxu0 %v2857
        %v2950 = vpop.f32.mrb[0].mxu0
        %v2951 = vadd.f32 %v2877, %v2950
        %v2952 = vpop.f32.mrb[0].mxu0
        %2953 = vmatprep.mubr.f32.mxu0 0.0
        %2954 = vmatmul.mubr.f32.gmra.mrb[0].mxu0 %v2858
        %v2955 = vpop.f32.mrb[0].mxu0
        %v2956 = vadd.f32 %v2877, %v2955
        %v2957 = vpop.f32.mrb[0].mxu0
        %2958 = vmatprep.mubr.f32.mxu0 0.0
        %2959 = vmatmul.mubr.f32.gmra.mrb[0].mxu0 %v2859
        %v2960 = vpop.f32.mrb[0].mxu0
        %v2961 = vadd.f32 %v2877, %v2960
        %v2962 = vpop.f32.mrb[0].mxu0
        %2963 = vmatprep.mubr.f32.mxu0 0.0
        %2964 = vmatmul.mubr.f32.gmra.mrb[0].mxu0 %v2860
        %v2965 = vpop.f32.mrb[0].mxu0
        %v2966 = vadd.f32 %v2877, %v2965
        %v2967 = vpop.f32.mrb[0].mxu0
        %2968 = vmatprep.mubr.f32.mxu0 0.0
        %2969 = vmatmul.mubr.f32.gmra.mrb[0].mxu0 %v2861
        %v2970 = vpop.f32.mrb[0].mxu0
        %v2971 = vadd.f32 %v2877, %v2970
        %v2972 = vpop.f32.mrb[0].mxu0
        %2973 = vmatprep.mubr.f32.mxu0 0.0
        %2974 = vmatmul.mubr.f32.gmra.mrb[0].mxu0 %v2862
        %v2975 = vpop.f32.mrb[0].mxu0
        %v2976 = vadd.f32 %v2877, %v2975
        %v2977 = vpop.f32.mrb[0].mxu0
        %2978 = vmatprep.mubr.f32.mxu0 0.0
        %2979 = vmatmul.mubr.f32.gmra.mrb[0].mxu0 %v2863
        %v2980 = vpop.f32.mrb[0].mxu0
        %v2981 = vadd.f32 %v2877, %v2980
        %v2982 = vpop.f32.mrb[0].mxu0
        %2983 = vmatprep.mubr.f32.mxu0 0.0
        %2984 = vmatmul.mubr.f32.gmra.mrb[0].mxu0 %v2864
        %v2985 = vpop.f32.mrb[0].mxu0
        %v2986 = vadd.f32 %v2877, %v2985
        %v2987 = vpop.f32.mrb[0].mxu0
        %2988 = vmatprep.mubr.f32.mxu0 0.0
        %2989 = vmatmul.mubr.f32.gmra.mrb[0].mxu0 %v2865
        %v2990 = vpop.f32.mrb[0].mxu0
        %v2991 = vadd.f32 %v2877, %v2990
        %v2992 = vpop.f32.mrb[0].mxu0
        %2993 = vmatprep.mubr.f32.mxu0 0.0
        %2994 = vmatmul.mubr.f32.gmra.mrb[0].mxu0 %v2866
        %v2995 = vpop.f32.mrb[0].mxu0
        %v2996 = vadd.f32 %v2877, %v2995
        %v2997 = vpop.f32.mrb[0].mxu0
        %2998 = vmatprep.mubr.f32.mxu0 0.0
        %2999 = vmatmul.mubr.f32.gmra.mrb[0].mxu0 %v2867
        %v3000 = vpop.f32.mrb[0].mxu0
        %v3001 = vadd.f32 %v2877, %v3000
        %v3002 = vpop.f32.mrb[0].mxu0
        %3003 = vmatprep.mubr.f32.mxu0 0.0
        %3004 = vmatmul.mubr.f32.gmra.mrb[0].mxu0 %v2868
        %v3005 = vpop.f32.mrb[0].mxu0
        %v3006 = vadd.f32 %v2877, %v3005
        %v3007 = vpop.f32.mrb[0].mxu0
        %3008 = vmatprep.mubr.f32.mxu0 0.0
        %3009 = vmatmul.mubr.f32.gmra.mrb[0].mxu0 %v2869
        %v3010 = vpop.f32.mrb[0].mxu0
        %v3011 = vadd.f32 %v2877, %v3010
        %v3012 = vpop.f32.mrb[0].mxu0
        %3013 = vmatprep.mubr.f32.mxu0 0.0
        %3014 = vmatmul.mubr.f32.gmra.mrb[0].mxu0 %v2870
        %v3015 = vpop.f32.mrb[0].mxu0
        %v3016 = vadd.f32 %v2877, %v3015
        %v3017 = vpop.f32.mrb[0].mxu0
        %3018 = vmatprep.mubr.f32.mxu0 0.0
        %3019 = vmatmul.mubr.f32.gmra.mrb[0].mxu0 %v2871
        %v3020 = vpop.f32.mrb[0].mxu0
        %v3021 = vadd.f32 %v2877, %v3020
        %v3022 = vpop.f32.mrb[0].mxu0
        %3023 = vdwg.mxu0
        %v3024 = vmax.f32 %v2946, 0.0
        %v3025 = vmax.f32 %v2951, 0.0
        %v3026 = vmax.f32 %v2956, 0.0
        %v3027 = vmax.f32 %v2961, 0.0
        %v3028 = vmax.f32 %v2966, 0.0
        %v3029 = vmax.f32 %v2971, 0.0
        %v3030 = vmax.f32 %v2976, 0.0
        %v3031 = vmax.f32 %v2981, 0.0
        %v3032 = vmax.f32 %v2986, 0.0
        %v3033 = vmax.f32 %v2991, 0.0
        %v3034 = vmax.f32 %v2996, 0.0
        %v3035 = vmax.f32 %v3001, 0.0
        %v3036 = vmax.f32 %v3006, 0.0
        %v3037 = vmax.f32 %v3011, 0.0
        %v3038 = vmax.f32 %v3016, 0.0
        %v3039 = vmax.f32 %v3021, 0.0
        %v3040 = vpack.c.bf16 %v3025, %v3024
        %v3041 = vpack.c.bf16 %v3027, %v3026
        %v3042 = vpack.c.bf16 %v3029, %v3028
        %v3043 = vpack.c.bf16 %v3031, %v3030
        %v3044 = vpack.c.bf16 %v3033, %v3032
        %v3045 = vpack.c.bf16 %v3035, %v3034
        %v3046 = vpack.c.bf16 %v3037, %v3036
        %v3047 = vpack.c.bf16 %v3039, %v3038
        %v3048 = vld [vmem:[%s6] sm:$0xf]
        %v3049 = vld [vmem:[%s6 + $0x4] sm:$0xf]
        %v3052 = vunpack.c.l.b16 %v3048
        %v3053 = vunpack.c.l.b16 %v3049
        %v3054 = vpack.c.b16 %v3053, %v3052
        %v3057 = vsel %vm2677, %v3040, 0
        %v3060 = vsel %vm2677, %v3041, 0
        %v3063 = vsel %vm2677, %v3042, 0
        %v3066 = vsel %vm2677, %v3043, 0
        %v3069 = vsel %vm2677, %v3044, 0
        %v3072 = vsel %vm2677, %v3045, 0
        %v3075 = vsel %vm2677, %v3046, 0
        %v3078 = vsel %vm2677, %v3047, 0
        %3080 = vmatprep.subr.bf16.mxu0 0
        %3081 = vmatpush1.bf16.msra.mxu0 %v3054
        %3082 = vmatprep.subr.bf16.mxu0 0
        %3083 = vmatpush1.bf16.msra.mxu0 0
        %3084 = vmatprep.subr.bf16.mxu0 0
        %3085 = vmatpush1.bf16.msra.mxu0 0
        %3086 = vmatprep.subr.bf16.mxu0 0
        %3087 = vmatpush1.bf16.msra.mxu0 0
        %3088 = vmatprep.subr.bf16.mxu0 0
        %3089 = vmatpush1.bf16.msra.mxu0 0
        %3090 = vmatprep.subr.bf16.mxu0 0
        %3091 = vmatpush1.bf16.msra.mxu0 0
        %3092 = vmatprep.subr.bf16.mxu0 0
        %3093 = vmatpush1.bf16.msra.mxu0 0
        %3094 = vmatprep.subr.bf16.mxu0 0
        %3095 = vmatpush1.bf16.msra.mxu0 0
        %3096 = vmatprep.subr.bf16.mxu0 0
        %3097 = vmatpush1.bf16.msra.mxu0 0
        %3098 = vmatprep.subr.bf16.mxu0 0
        %3099 = vmatpush1.bf16.msra.mxu0 0
        %3100 = vmatprep.subr.bf16.mxu0 0
        %3101 = vmatpush1.bf16.msra.mxu0 0
        %3102 = vmatprep.subr.bf16.mxu0 0
        %3103 = vmatpush1.bf16.msra.mxu0 0
        %3104 = vmatprep.subr.bf16.mxu0 0
        %3105 = vmatpush1.bf16.msra.mxu0 0
        %3106 = vmatprep.subr.bf16.mxu0 0
        %3107 = vmatpush1.bf16.msra.mxu0 0
        %3108 = vmatprep.subr.bf16.mxu0 0
        %3109 = vmatpush1.bf16.msra.mxu0 0
        %3110 = vmatprep.subr.bf16.mxu0 0
        %3111 = vmatpush1.bf16.msra.mxu0 0
        %3112 = vmatprep.mubr.bf16.mxu0 0
        %3113 = vmatmul.mubr.bf16.gmra.mrb[0].mxu0 %v3057
        %v3114 = vpop.f32.mrb[0].mxu0
        %v3115 = vadd.f32 0.0, %v3114
        %v3116 = vpop.f32.mrb[0].mxu0
        %v3117 = vpop.f32.mrb[0].mxu0
        %v3118 = vadd.f32 0.0, %v3117
        %v3119 = vpop.f32.mrb[0].mxu0
        %3120 = vmatprep.mubr.bf16.mxu0 0
        %3121 = vmatmul.mubr.bf16.gmra.mrb[0].mxu0 %v3060
        %v3122 = vpop.f32.mrb[0].mxu0
        %v3123 = vadd.f32 0.0, %v3122
        %v3124 = vpop.f32.mrb[0].mxu0
        %v3125 = vpop.f32.mrb[0].mxu0
        %v3126 = vadd.f32 0.0, %v3125
        %v3127 = vpop.f32.mrb[0].mxu0
        %3128 = vmatprep.mubr.bf16.mxu0 0
        %3129 = vmatmul.mubr.bf16.gmra.mrb[0].mxu0 %v3063
        %v3130 = vpop.f32.mrb[0].mxu0
        %v3131 = vadd.f32 0.0, %v3130
        %v3132 = vpop.f32.mrb[0].mxu0
        %v3133 = vpop.f32.mrb[0].mxu0
        %v3134 = vadd.f32 0.0, %v3133
        %v3135 = vpop.f32.mrb[0].mxu0
        %3136 = vmatprep.mubr.bf16.mxu0 0
        %3137 = vmatmul.mubr.bf16.gmra.mrb[0].mxu0 %v3066
        %v3138 = vpop.f32.mrb[0].mxu0
        %v3139 = vadd.f32 0.0, %v3138
        %v3140 = vpop.f32.mrb[0].mxu0
        %v3141 = vpop.f32.mrb[0].mxu0
        %v3142 = vadd.f32 0.0, %v3141
        %v3143 = vpop.f32.mrb[0].mxu0
        %3144 = vmatprep.mubr.bf16.mxu0 0
        %3145 = vmatmul.mubr.bf16.gmra.mrb[0].mxu0 %v3069
        %v3146 = vpop.f32.mrb[0].mxu0
        %v3147 = vadd.f32 0.0, %v3146
        %v3148 = vpop.f32.mrb[0].mxu0
        %v3149 = vpop.f32.mrb[0].mxu0
        %v3150 = vadd.f32 0.0, %v3149
        %v3151 = vpop.f32.mrb[0].mxu0
        %3152 = vmatprep.mubr.bf16.mxu0 0
        %3153 = vmatmul.mubr.bf16.gmra.mrb[0].mxu0 %v3072
        %v3154 = vpop.f32.mrb[0].mxu0
        %v3155 = vadd.f32 0.0, %v3154
        %v3156 = vpop.f32.mrb[0].mxu0
        %v3157 = vpop.f32.mrb[0].mxu0
        %v3158 = vadd.f32 0.0, %v3157
        %v3159 = vpop.f32.mrb[0].mxu0
        %3160 = vmatprep.mubr.bf16.mxu0 0
        %3161 = vmatmul.mubr.bf16.gmra.mrb[0].mxu0 %v3075
        %v3162 = vpop.f32.mrb[0].mxu0
        %v3163 = vadd.f32 0.0, %v3162
        %v3164 = vpop.f32.mrb[0].mxu0
        %v3165 = vpop.f32.mrb[0].mxu0
        %v3166 = vadd.f32 0.0, %v3165
        %v3167 = vpop.f32.mrb[0].mxu0
        %3168 = vmatprep.mubr.bf16.mxu0 0
        %3169 = vmatmul.mubr.bf16.gmra.mrb[0].mxu0 %v3078
        %v3170 = vpop.f32.mrb[0].mxu0
        %v3171 = vadd.f32 0.0, %v3170
        %v3172 = vpop.f32.mrb[0].mxu0
        %v3173 = vpop.f32.mrb[0].mxu0
        %v3174 = vadd.f32 0.0, %v3173
        %v3175 = vpop.f32.mrb[0].mxu0
        %3176 = vdwg.mxu0
        %v3177 = vld [vmem:[%s7] sm:$0x1]
        %v3179 = vlaneseq
        %v3180 = vshrl.u32 %v3179, 7
        %v3181 = vsub.s32 0, %v3180
        %v3182 = vrot.slane %v3177, %v3181
        %3184 = vmatprep.subr.mxu0 0.0
        %3185 = vmatpush1.msra.mxu0 %v3115
        %3186 = vmatprep.subr.mxu0 0.0
        %3187 = vmatpush1.msra.mxu0 %v3118
        %3188 = vmatprep.subr.mxu0 0.0
        %3189 = vmatpush1.msra.mxu0 %v3123
        %3190 = vmatprep.subr.mxu0 0.0
        %3191 = vmatpush1.msra.mxu0 %v3126
        %3192 = vmatprep.subr.mxu0 0.0
        %3193 = vmatpush1.msra.mxu0 %v3131
        %3194 = vmatprep.subr.mxu0 0.0
        %3195 = vmatpush1.msra.mxu0 %v3134
        %3196 = vmatprep.subr.mxu0 0.0
        %3197 = vmatpush1.msra.mxu0 %v3139
        %3198 = vmatprep.subr.mxu0 0.0
        %3199 = vmatpush1.msra.mxu0 %v3142
        %3200 = vmatprep.subr.mxu0 0.0
        %3201 = vmatpush1.msra.mxu0 %v3147
        %3202 = vmatprep.subr.mxu0 0.0
        %3203 = vmatpush1.msra.mxu0 %v3150
        %3204 = vmatprep.subr.mxu0 0.0
        %3205 = vmatpush1.msra.mxu0 %v3155
        %3206 = vmatprep.subr.mxu0 0.0
        %3207 = vmatpush1.msra.mxu0 %v3158
        %3208 = vmatprep.subr.mxu0 0.0
        %3209 = vmatpush1.msra.mxu0 %v3163
        %3210 = vmatprep.subr.mxu0 0.0
        %3211 = vmatpush1.msra.mxu0 %v3166
        %3212 = vmatprep.subr.mxu0 0.0
        %3213 = vmatpush1.msra.mxu0 %v3171
        %3214 = vmatprep.subr.mxu0 0.0
        %3215 = vmatpush1.msra.mxu0 %v3174
        %3216 = vmatprep.subr.mxu0 0.0
        %3217 = vmatpush1.msra.mxu0 0.0
        %3218 = vmatprep.subr.mxu0 0.0
        %3219 = vmatpush1.msra.mxu0 0.0
        %3220 = vmatprep.subr.mxu0 0.0
        %3221 = vmatpush1.msra.mxu0 0.0
        %3222 = vmatprep.subr.mxu0 0.0
        %3223 = vmatpush1.msra.mxu0 0.0
        %3224 = vmatprep.subr.mxu0 0.0
        %3225 = vmatpush1.msra.mxu0 0.0
        %3226 = vmatprep.subr.mxu0 0.0
        %3227 = vmatpush1.msra.mxu0 0.0
        %3228 = vmatprep.subr.mxu0 0.0
        %3229 = vmatpush1.msra.mxu0 0.0
        %3230 = vmatprep.subr.mxu0 0.0
        %3231 = vmatpush1.msra.mxu0 0.0
        %3232 = vmatprep.subr.mxu0 0.0
        %3233 = vmatpush1.msra.mxu0 0.0
        %3234 = vmatprep.subr.mxu0 0.0
        %3235 = vmatpush1.msra.mxu0 0.0
        %3236 = vmatprep.subr.mxu0 0.0
        %3237 = vmatpush1.msra.mxu0 0.0
        %3238 = vmatprep.subr.mxu0 0.0
        %3239 = vmatpush1.msra.mxu0 0.0
        %3240 = vmatprep.subr.mxu0 0.0
        %3241 = vmatpush1.msra.mxu0 0.0
        %3242 = vmatprep.subr.mxu0 0.0
        %3243 = vmatpush1.msra.mxu0 0.0
        %3244 = vmatprep.subr.mxu0 0.0
        %3245 = vmatpush1.msra.mxu0 0.0
        %3246 = vmatprep.subr.mxu0 0.0
        %3247 = vmatpush1.msra.mxu0 0.0
        %3248 = vmatprep.mubr.f32.mxu0 0.0
        %3249 = vmatmul.mubr.f32.gmra.mrb[0].mxu0 %v2856
        %v3250 = vpop.f32.mrb[0].mxu0
        %v3251 = vadd.f32 %v3182, %v3250
        %v3252 = vpop.f32.mrb[0].mxu0
        %3253 = vmatprep.mubr.f32.mxu0 0.0
        %3254 = vmatmul.mubr.f32.gmra.mrb[0].mxu0 %v2857
        %v3255 = vpop.f32.mrb[0].mxu0
        %v3256 = vadd.f32 %v3182, %v3255
        %v3257 = vpop.f32.mrb[0].mxu0
        %3258 = vmatprep.mubr.f32.mxu0 0.0
        %3259 = vmatmul.mubr.f32.gmra.mrb[0].mxu0 %v2858
        %v3260 = vpop.f32.mrb[0].mxu0
        %v3261 = vadd.f32 %v3182, %v3260
        %v3262 = vpop.f32.mrb[0].mxu0
        %3263 = vmatprep.mubr.f32.mxu0 0.0
        %3264 = vmatmul.mubr.f32.gmra.mrb[0].mxu0 %v2859
        %v3265 = vpop.f32.mrb[0].mxu0
        %v3266 = vadd.f32 %v3182, %v3265
        %v3267 = vpop.f32.mrb[0].mxu0
        %3268 = vmatprep.mubr.f32.mxu0 0.0
        %3269 = vmatmul.mubr.f32.gmra.mrb[0].mxu0 %v2860
        %v3270 = vpop.f32.mrb[0].mxu0
        %v3271 = vadd.f32 %v3182, %v3270
        %v3272 = vpop.f32.mrb[0].mxu0
        %3273 = vmatprep.mubr.f32.mxu0 0.0
        %3274 = vmatmul.mubr.f32.gmra.mrb[0].mxu0 %v2861
        %v3275 = vpop.f32.mrb[0].mxu0
        %v3276 = vadd.f32 %v3182, %v3275
        %v3277 = vpop.f32.mrb[0].mxu0
        %3278 = vmatprep.mubr.f32.mxu0 0.0
        %3279 = vmatmul.mubr.f32.gmra.mrb[0].mxu0 %v2862
        %v3280 = vpop.f32.mrb[0].mxu0
        %v3281 = vadd.f32 %v3182, %v3280
        %v3282 = vpop.f32.mrb[0].mxu0
        %3283 = vmatprep.mubr.f32.mxu0 0.0
        %3284 = vmatmul.mubr.f32.gmra.mrb[0].mxu0 %v2863
        %v3285 = vpop.f32.mrb[0].mxu0
        %v3286 = vadd.f32 %v3182, %v3285
        %v3287 = vpop.f32.mrb[0].mxu0
        %3288 = vmatprep.mubr.f32.mxu0 0.0
        %3289 = vmatmul.mubr.f32.gmra.mrb[0].mxu0 %v2864
        %v3290 = vpop.f32.mrb[0].mxu0
        %v3291 = vadd.f32 %v3182, %v3290
        %v3292 = vpop.f32.mrb[0].mxu0
        %3293 = vmatprep.mubr.f32.mxu0 0.0
        %3294 = vmatmul.mubr.f32.gmra.mrb[0].mxu0 %v2865
        %v3295 = vpop.f32.mrb[0].mxu0
        %v3296 = vadd.f32 %v3182, %v3295
        %v3297 = vpop.f32.mrb[0].mxu0
        %3298 = vmatprep.mubr.f32.mxu0 0.0
        %3299 = vmatmul.mubr.f32.gmra.mrb[0].mxu0 %v2866
        %v3300 = vpop.f32.mrb[0].mxu0
        %v3301 = vadd.f32 %v3182, %v3300
        %v3302 = vpop.f32.mrb[0].mxu0
        %3303 = vmatprep.mubr.f32.mxu0 0.0
        %3304 = vmatmul.mubr.f32.gmra.mrb[0].mxu0 %v2867
        %v3305 = vpop.f32.mrb[0].mxu0
        %v3306 = vadd.f32 %v3182, %v3305
        %v3307 = vpop.f32.mrb[0].mxu0
        %3308 = vmatprep.mubr.f32.mxu0 0.0
        %3309 = vmatmul.mubr.f32.gmra.mrb[0].mxu0 %v2868
        %v3310 = vpop.f32.mrb[0].mxu0
        %v3311 = vadd.f32 %v3182, %v3310
        %v3312 = vpop.f32.mrb[0].mxu0
        %3313 = vmatprep.mubr.f32.mxu0 0.0
        %3314 = vmatmul.mubr.f32.gmra.mrb[0].mxu0 %v2869
        %v3315 = vpop.f32.mrb[0].mxu0
        %v3316 = vadd.f32 %v3182, %v3315
        %v3317 = vpop.f32.mrb[0].mxu0
        %3318 = vmatprep.mubr.f32.mxu0 0.0
        %3319 = vmatmul.mubr.f32.gmra.mrb[0].mxu0 %v2870
        %v3320 = vpop.f32.mrb[0].mxu0
        %v3321 = vadd.f32 %v3182, %v3320
        %v3322 = vpop.f32.mrb[0].mxu0
        %3323 = vmatprep.mubr.f32.mxu0 0.0
        %3324 = vmatmul.mubr.f32.gmra.mrb[0].mxu0 %v2871
        %v3325 = vpop.f32.mrb[0].mxu0
        %v3326 = vadd.f32 %v3182, %v3325
        %v3327 = vpop.f32.mrb[0].mxu0
        %3328 = vdwg.mxu0
        %3329 = vst.msk [vmem:[%s315] sm:$0xff] %vm402, %v3251
        %3330 = vst.msk [vmem:[%s315 + $0x8] sm:$0xff] %vm402, %v3256
        %3331 = vst.msk [vmem:[%s315 + $0x10] sm:$0xff] %vm402, %v3261
        %3332 = vst.msk [vmem:[%s315 + $0x18] sm:$0xff] %vm402, %v3266
        %3333 = vst.msk [vmem:[%s315 + $0x20] sm:$0xff] %vm402, %v3271
        %3334 = vst.msk [vmem:[%s315 + $0x28] sm:$0xff] %vm402, %v3276
        %3335 = vst.msk [vmem:[%s315 + $0x30] sm:$0xff] %vm402, %v3281
        %3336 = vst.msk [vmem:[%s315 + $0x38] sm:$0xff] %vm402, %v3286
        %3337 = vst.msk [vmem:[%s315 + $0x40] sm:$0xff] %vm402, %v3291
        %3338 = vst.msk [vmem:[%s315 + $0x48] sm:$0xff] %vm402, %v3296
        %3339 = vst.msk [vmem:[%s315 + $0x50] sm:$0xff] %vm402, %v3301
        %3340 = vst.msk [vmem:[%s315 + $0x58] sm:$0xff] %vm402, %v3306
        %3341 = vst.msk [vmem:[%s315 + $0x60] sm:$0xff] %vm402, %v3311
        %3342 = vst.msk [vmem:[%s315 + $0x68] sm:$0xff] %vm402, %v3316
        %3343 = vst.msk [vmem:[%s315 + $0x70] sm:$0xff] %vm402, %v3321
        %3344 = vst.msk [vmem:[%s315 + $0x78] sm:$0xff] %vm402, %v3326
        %s3345 = sand.u32 %s208, 1
        %s3346 = scalar_lea.sflag [#allocation3], %s3345
        %s3347 = sand.u32 %s208, 1
        %s3348 = smul.addr %s3347, 128
        %s3349 = scalar_lea.vmem [#allocation2], %s3348
        // Predicated region
        $region53: #{gcn_net_sa4_forward.1} parent=51 // pred_check
          %p3350 = pneg %p218
        $region54: #{gcn_net_sa4_forward.1} parent=51 // pred_check_branch
          %3352 = sbr.rel (%p3350) target = $region56
        $region55: #{gcn_net_sa4_forward.1} parent=51 // pred_region
          %s3353 = smul.u32 16, %s22
          %s3355 = ssub.s32 2048, 2048
          %3356 = vsyncadd %s3346, %s3355
          %s3357 = smul.addr %s3353, 128
          %s3358 = scalar_lea.hbm %s8, %s3357
          %s3359 = sshll.u32 %s3349, 4
          %s3360 = int_to_ptr.vmem [resolvable:$true] %s3359
          %3365 = dma.vmem_to_hbm [thread:$0]  %s3360, 2048, %s3358, %s3346, 128, 128, 8
        $region56: #{gcn_net_sa4_forward.1} parent=51 // pred_fallthru
          _
      $region52: #{gcn_net_sa4_forward.1} parent=5 // pred_fallthru
        _
      %p3366 = scmp.le.s32.totalorder 2, %s17
      // Predicated region
      $region57: #{gcn_net_sa4_forward.1} parent=5 // pred_check
        %p3367 = pneg %p3366
      $region58: #{gcn_net_sa4_forward.1} parent=5 // pred_check_branch
        %3369 = sbr.rel (%p3367) target = $region60
      $region59: #{gcn_net_sa4_forward.1} parent=5 // pred_region
        %s3370 = ssub.s32 %s17, 2
        // Predicated region
        $region61: #{gcn_net_sa4_forward.1} parent=59 // pred_check
          %p3371 = pneg %p224
        $region62: #{gcn_net_sa4_forward.1} parent=59 // pred_check_branch
          %3373 = sbr.rel (%p3371) target = $region64
        $region63: #{gcn_net_sa4_forward.1} parent=59 // pred_region
          %s3374 = sand.u32 %s209, 1
          %s3375 = scalar_lea.sflag [#allocation3], %s3374
          %s3376 = sand.u32 %s209, 1
          %s3377 = smul.addr %s3376, 128
          %s3378 = scalar_lea.vmem [#allocation2], %s3377
          %3379 = dma.done %s3375, 2048
        $region64: #{gcn_net_sa4_forward.1} parent=59 // pred_fallthru
          _
      $region60: #{gcn_net_sa4_forward.1} parent=5 // pred_fallthru
        _
    $region6: #{gcn_net_sa4_forward.1} parent=1 // loop_footer
      %s21 = sadd.s32 1, %s17
    $region7: #{gcn_net_sa4_forward.1} parent=1 // loop_footer_branch
      %16 = sbr.rel target = $region3
    $region8: #{gcn_net_sa4_forward.1} parent=1 // loop_exit
      _
    %3380 = vsyncpa [#allocation3], 1
    %s3381 = scalar_lea.sflag [#allocation3], 1
    %3382 = vsyncpa %s3381, 1

</llo_original>
